<compile_context>
chip_gen: v7x
topology: tpu7x:2x2x1
jax: 0.10.0
libtpu: 0.0.40
codegen_flags: <defaults>
</compile_context>

<pallas_src>
import functools

import jax
import jax.numpy as jnp
from jax.experimental import pallas as pl
from jax.experimental.pallas import tpu as pltpu


# --------------------------------------------------------------------------
# Tile selection: whole images per grid step
# --------------------------------------------------------------------------
def _pick_tile(num_images, img_lanes, max_block_lanes):
    """Images per grid step: largest whole-image tile whose lane count is a
    multiple of 128 and within the lane budget; prefers an even number of grid
    steps so the 'parallel' axis balances across v7x's two TensorCores."""
    cands = [t for t in range(1, num_images + 1)
             if num_images % t == 0 and (t * img_lanes) % 128 == 0]
    if not cands:
        # fallback: one full-array block (always lowers, last-dims = full dims)
        return num_images
    fitting = [t for t in cands if t * img_lanes <= max_block_lanes] or [cands[0]]
    even = [t for t in fitting if (num_images // t) % 2 == 0]
    pool = even if even else fitting
    return max(pool)


# --------------------------------------------------------------------------
# Fused kernel: conv3x3 -> ReLU -> conv3x3 -> residual -> RSS normalisation
# Layout: channels on sublanes, flattened (b z y x) spatial on the lane axis.
# --------------------------------------------------------------------------
def _csm_refine_kernel(x_ref, m_ref, w1_ref, b1_ref, w2_ref, b2_ref, out_ref,
                       *, shifts, normalize):
    C, L = x_ref.shape
    hidden = w1_ref.shape[1]
    cdt = w1_ref.dtype                              # matmul operand dtype

    x = x_ref[...]                                  # (C, L) f32

    # ---- layer 1: 3x3 conv + bias + ReLU (tap-accumulated, input-side shift) --
    h = jnp.zeros((hidden, L), jnp.float32)
    for t, s in enumerate(shifts):
        mt = m_ref[pl.ds(t, 1), :]                  # (1, L) zero-pad mask (const input)
        xt = x if s == 0 else pltpu.roll(x, shift=(-s) % L, axis=1)
        xt = (xt * mt).astype(cdt)                  # masked shifted tap, bf16/f32
        h = h + jnp.dot(w1_ref[t], xt, preferred_element_type=jnp.float32)
    h = jnp.maximum(h + b1_ref[...], 0.0)           # (hidden, L) f32, stays in VMEM
    h_c = h.astype(cdt)

    # ---- layer 2: 3x3 conv + bias, residual (shift/mask on the smaller product side) --
    y = jnp.zeros((C, L), jnp.float32)
    for t, s in enumerate(shifts):
        p = jnp.dot(w2_ref[t], h_c, preferred_element_type=jnp.float32)  # (C, L)
        if s != 0:
            p = pltpu.roll(p, shift=(-s) % L, axis=1)
        y = y + p * m_ref[pl.ds(t, 1), :]
    y = x + (y + b2_ref[...])                       # residual, f32

    if normalize:
        # sum over (r c) channels of y^2 == sum over coils of |csm|^2 == RSS^2
        ss = jnp.sum(y * y, axis=0, keepdims=True)
        inv = jnp.where(ss > 0.0, jax.lax.rsqrt(ss), 0.0)   # nan/posinf -> 0
        y = y * inv

    out_ref[...] = y


# --------------------------------------------------------------------------
# Full forward
# --------------------------------------------------------------------------
def csm_refine_forward(csm, params, *, normalize=True,
                       matmul_dtype=jnp.bfloat16,
                       max_block_lanes=32 * 1024,        # ~13 MB/block; use ~16K on v7x
                       vmem_limit_bytes=32 * 1024 * 1024):
    Nb, Nc, Nz, Ny, Nx = csm.shape
    w1, b1, w2, b2 = params
    hidden = w1.shape[-1]
    C = 2 * Nc
    N = Nb * Nz
    S = Ny * Nx

    # --- blocked '(r c)' channel order: rows [0:Nc]=real coils, [Nc:2Nc]=imag ---
    def to_rows(a):                                  # (b,c,z,y,x) -> (Nc, N*S)
        return jnp.transpose(a, (1, 0, 2, 3, 4)).reshape(Nc, N * S)
    x_flat = jnp.concatenate([to_rows(jnp.real(csm)), to_rows(jnp.imag(csm))],
                             axis=0).astype(jnp.float32)

    # interleaved '(c r)' conv channel (PyTorch convention) -> blocked '(r c)' row
    perm = jnp.array([(k % Nc) * 2 + (k // Nc) for k in range(C)], jnp.int32)
    w1b = jnp.take(w1, perm, axis=2)                 # (3,3,C,hidden)  in-chan perm
    w2b = jnp.take(w2, perm, axis=3)                 # (3,3,hidden,C)  out-chan perm
    b2b = jnp.take(b2.reshape(-1), perm)             # (C,)

    # per-tap weight matrices: (ky,kx,ci,co) -> (9, co, ci)
    w1_taps = jnp.transpose(w1b, (0, 1, 3, 2)).reshape(9, hidden, C).astype(matmul_dtype)
    w2_taps = jnp.transpose(w2b, (0, 1, 3, 2)).reshape(9, C, hidden).astype(matmul_dtype)
    b1c = b1.reshape(hidden, 1).astype(jnp.float32)
    b2c = b2b.reshape(C, 1).astype(jnp.float32)

    # --- lane-tile selection (whole images per block, 128-aligned, even grid) ---
    tn = _pick_tile(N, S, max_block_lanes)
    L = tn * S
    num_blocks = N // tn
    # zero-padding-by-mask correctness relies on every block holding whole images
    assert L % S == 0 and num_blocks * L == N * S
    assert L % 128 == 0 or num_blocks == 1, (
        "lane block must be 128-aligned or cover the whole array")

    # 3x3 zero-pad validity masks + flat lane shifts, identical for every block
    q = jnp.arange(L, dtype=jnp.int32)
    row = (q % S) // Nx
    col = q % Nx
    masks, shifts = [], []
    for dy in (-1, 0, 1):
        for dx in (-1, 0, 1):
            masks.append((row + dy >= 0) & (row + dy < Ny) &
                         (col + dx >= 0) & (col + dx < Nx))
            shifts.append(dy * Nx + dx)
    mask_arr = jnp.stack(masks).astype(jnp.float32)      # (9, L)

    kernel = functools.partial(_csm_refine_kernel, shifts=tuple(shifts),
                               normalize=normalize)

    out_flat = pl.pallas_call(
        kernel,
        out_shape=jax.ShapeDtypeStruct((C, N * S), jnp.float32),
        grid=(num_blocks,),
        in_specs=[
            pl.BlockSpec((C, L), lambda g: (0, g)),             # activations
            pl.BlockSpec((9, L), lambda g: (0, 0)),             # pad masks (constant)
            pl.BlockSpec((9, hidden, C), lambda g: (0, 0, 0)),  # w1 taps
            pl.BlockSpec((hidden, 1), lambda g: (0, 0)),        # b1
            pl.BlockSpec((9, C, hidden), lambda g: (0, 0, 0)),  # w2 taps
            pl.BlockSpec((C, 1), lambda g: (0, 0)),             # b2
        ],
        out_specs=pl.BlockSpec((C, L), lambda g: (0, g)),
        compiler_params=pltpu.CompilerParams(
            dimension_semantics=("parallel",),
            vmem_limit_bytes=vmem_limit_bytes),
    )(x_flat, mask_arr, w1_taps, b1c, w2_taps, b2c)

    # blocked '(r c)' rows, (b z y x) lanes -> complex (b, c, z, y, x)
    out3 = out_flat.reshape(2, Nc, Nb, Nz, Ny, Nx)
    real = jnp.transpose(out3[0], (1, 0, 2, 3, 4))
    imag = jnp.transpose(out3[1], (1, 0, 2, 3, 4))
    return jax.lax.complex(real, imag)


# --------------------------------------------------------------------------
# Pure-JAX reference (faithful to the PyTorch module) for self-check
# --------------------------------------------------------------------------
def csm_refine_ref(csm, params, *, normalize=True):
    Nb, Nc, Nz, Ny, Nx = csm.shape
    w1, b1, w2, b2 = params

    # view_as_real + 'b c z y x r -> (b z) (c r) y x'  (NCHW conv input)
    csm_r = jnp.stack([jnp.real(csm), jnp.imag(csm)], axis=-1)
    x = jnp.transpose(csm_r, (0, 2, 1, 5, 3, 4)).reshape(Nb * Nz, Nc * 2, Ny, Nx)

    def conv_nchw(a, w, b):             # w (3,3,ci,co), b (1,co)
        n, ci, hh, ww = a.shape
        co = w.shape[-1]
        ap = jnp.pad(a, ((0, 0), (0, 0), (1, 1), (1, 1)))
        out = jnp.zeros((n, co, hh, ww), jnp.float32)
        for ky in range(3):
            for kx in range(3):
                out = out + jnp.einsum("ncij,co->noij",
                                       ap[:, :, ky:ky + hh, kx:kx + ww], w[ky, kx])
        return out + b.reshape(1, co, 1, 1)

    h = jnp.maximum(conv_nchw(x, w1, b1), 0.0)
    y = x + conv_nchw(h, w2, b2)

    # '(b z) (c r) y x -> b c z y x r' -> complex
    y = y.reshape(Nb, Nz, Nc, 2, Ny, Nx)
    out = jax.lax.complex(y[:, :, :, 0], y[:, :, :, 1])     # (b,z,c,y,x)
    out = jnp.transpose(out, (0, 2, 1, 3, 4))               # (b,c,z,y,x)

    if normalize:
        rss = jnp.sqrt(jnp.sum(jnp.abs(out) ** 2, axis=1, keepdims=True))
        norm = jnp.where(rss > 0, 1.0 / rss, 0.0)
        out = norm * out
    return out


# --------------------------------------------------------------------------
if __name__ == "__main__":
    key = jax.random.PRNGKey(0)
    Nb, Nc, Nz, Ny, Nx = 2, 4, 2, 16, 16
    hidden = 16
    Cio = 2 * Nc                       # conv in/out channels = 2 * coils

    k1, k2, k3, k4, k5, k6 = jax.random.split(key, 6)
    csm = jax.lax.complex(
        jax.random.normal(k1, (Nb, Nc, Nz, Ny, Nx), jnp.float32),
        jax.random.normal(k2, (Nb, Nc, Nz, Ny, Nx), jnp.float32),
    )

    # Deterministic weight init (kaiming-uniform-like scale), stored as
    # (3, 3, Cin, Cout) = transpose of PyTorch's (Cout, Cin, 3, 3),
    # input/output channels in the PyTorch '(c r)' interleaved order.
    s1 = 1.0 / (9.0 * Cio) ** 0.5
    w1 = jax.random.uniform(k3, (3, 3, Cio, hidden), jnp.float32, -s1, s1)
    b1 = jax.random.uniform(k4, (1, hidden), jnp.float32, -s1, s1)
    s2 = 1.0 / (9.0 * hidden) ** 0.5
    w2 = jax.random.uniform(k5, (3, 3, hidden, Cio), jnp.float32, -s2, s2)
    b2 = jax.random.uniform(k6, (1, Cio), jnp.float32, -s2, s2)
    params = (w1, b1, w2, b2)

    ref = jax.block_until_ready(csm_refine_ref(csm, params, normalize=True))

    # full-precision matmul path: tight agreement with the reference
    out_f32 = jax.block_until_ready(
        csm_refine_forward(csm, params, normalize=True, matmul_dtype=jnp.float32))
    assert out_f32.shape == csm.shape and out_f32.dtype == jnp.complex64
    assert bool(jnp.allclose(out_f32, ref, atol=5e-3, rtol=5e-3))

    # default path: bf16 MXU operands, f32 accumulate / residual / RSS
    out = jax.block_until_ready(csm_refine_forward(csm, params, normalize=True))
    assert out.shape == csm.shape and out.dtype == jnp.complex64
    assert bool(jnp.allclose(out, ref, atol=1.5e-2, rtol=1.5e-2))

    print("KERNEL_OK")
</pallas_src>

<mosaic_0001>
module attributes {stable_mosaic.version = 11 : i64} {
  func.func @_csm_refine_kernel(%arg0: i32, %arg1: memref<8x512xf32, #tpu.memory_space<vmem>>, %arg2: memref<9x512xf32, #tpu.memory_space<vmem>>, %arg3: memref<9x16x8xf32, #tpu.memory_space<vmem>>, %arg4: memref<16x1xf32, #tpu.memory_space<vmem>>, %arg5: memref<9x8x16xf32, #tpu.memory_space<vmem>>, %arg6: memref<8x1xf32, #tpu.memory_space<vmem>>, %arg7: memref<8x512xf32, #tpu.memory_space<vmem>>) attributes {dimension_semantics = [#tpu.dimension_semantics<parallel>], iteration_bounds = array<i64: 2>, scalar_prefetch = 0 : i64, scratch_operands = 0 : i64, tpu.core_type = #tpu.core_type<tc>, window_params = [{transform_indices = @transform_0, window_bounds = array<i64: 8, 512>}, {pipeline_mode = #tpu.pipeline_mode<synchronous>, transform_indices = @transform_1, window_bounds = array<i64: 9, 512>}, {pipeline_mode = #tpu.pipeline_mode<synchronous>, transform_indices = @transform_2, window_bounds = array<i64: 9, 16, 8>}, {pipeline_mode = #tpu.pipeline_mode<synchronous>, transform_indices = @transform_3, window_bounds = array<i64: 16, 1>}, {pipeline_mode = #tpu.pipeline_mode<synchronous>, transform_indices = @transform_4, window_bounds = array<i64: 9, 8, 16>}, {pipeline_mode = #tpu.pipeline_mode<synchronous>, transform_indices = @transform_5, window_bounds = array<i64: 8, 1>}, {transform_indices = @transform_6, window_bounds = array<i64: 8, 512>}]} {
    %c0 = arith.constant 0 : index
    %c0_0 = arith.constant 0 : index
    %0 = vector.load %arg1[%c0, %c0_0] : memref<8x512xf32, #tpu.memory_space<vmem>>, vector<8x512xf32>
    %cst = arith.constant 0.000000e+00 : f32
    %1 = vector.broadcast %cst : f32 to vector<16x512xf32>
    %c0_1 = arith.constant 0 : index
    %c0_2 = arith.constant 0 : index
    %2 = vector.load %arg2[%c0_1, %c0_2] : memref<9x512xf32, #tpu.memory_space<vmem>>, vector<1x512xf32>
    %c17_i32 = arith.constant 17 : i32
    %3 = tpu.dynamic_rotate %0 by %c17_i32 dim 1 : vector<8x512xf32>, i32 -> vector<8x512xf32>
    %4 = vector.broadcast %2 : vector<1x512xf32> to vector<8x512xf32>
    %5 = arith.mulf %3, %4 : vector<8x512xf32>
    %c0_3 = arith.constant 0 : index
    %c0_4 = arith.constant 0 : index
    %c0_5 = arith.constant 0 : index
    %6 = vector.load %arg3[%c0_3, %c0_4, %c0_5] : memref<9x16x8xf32, #tpu.memory_space<vmem>>, vector<1x16x8xf32>
    %7 = vector.shape_cast %6 : vector<1x16x8xf32> to vector<16x8xf32>
    %cst_6 = arith.constant dense<0.000000e+00> : vector<16x512xf32>
    %8 = tpu.matmul %7, %5, %cst_6 {dimension_numbers = #tpu.dot_dimension_numbers<[1], [0], [0], [1], [0, 0, 1, 1], [], []>} : vector<16x8xf32>, vector<8x512xf32>, vector<16x512xf32> -> vector<16x512xf32>
    %9 = arith.addf %1, %8 : vector<16x512xf32>
    %c1 = arith.constant 1 : index
    %c0_7 = arith.constant 0 : index
    %10 = vector.load %arg2[%c1, %c0_7] : memref<9x512xf32, #tpu.memory_space<vmem>>, vector<1x512xf32>
    %c16_i32 = arith.constant 16 : i32
    %11 = tpu.dynamic_rotate %0 by %c16_i32 dim 1 : vector<8x512xf32>, i32 -> vector<8x512xf32>
    %12 = vector.broadcast %10 : vector<1x512xf32> to vector<8x512xf32>
    %13 = arith.mulf %11, %12 : vector<8x512xf32>
    %c1_8 = arith.constant 1 : index
    %c0_9 = arith.constant 0 : index
    %c0_10 = arith.constant 0 : index
    %14 = vector.load %arg3[%c1_8, %c0_9, %c0_10] : memref<9x16x8xf32, #tpu.memory_space<vmem>>, vector<1x16x8xf32>
    %15 = vector.shape_cast %14 : vector<1x16x8xf32> to vector<16x8xf32>
    %cst_11 = arith.constant dense<0.000000e+00> : vector<16x512xf32>
    %16 = tpu.matmul %15, %13, %cst_11 {dimension_numbers = #tpu.dot_dimension_numbers<[1], [0], [0], [1], [0, 0, 1, 1], [], []>} : vector<16x8xf32>, vector<8x512xf32>, vector<16x512xf32> -> vector<16x512xf32>
    %17 = arith.addf %9, %16 : vector<16x512xf32>
    %c2 = arith.constant 2 : index
    %c0_12 = arith.constant 0 : index
    %18 = vector.load %arg2[%c2, %c0_12] : memref<9x512xf32, #tpu.memory_space<vmem>>, vector<1x512xf32>
    %c15_i32 = arith.constant 15 : i32
    %19 = tpu.dynamic_rotate %0 by %c15_i32 dim 1 : vector<8x512xf32>, i32 -> vector<8x512xf32>
    %20 = vector.broadcast %18 : vector<1x512xf32> to vector<8x512xf32>
    %21 = arith.mulf %19, %20 : vector<8x512xf32>
    %c2_13 = arith.constant 2 : index
    %c0_14 = arith.constant 0 : index
    %c0_15 = arith.constant 0 : index
    %22 = vector.load %arg3[%c2_13, %c0_14, %c0_15] : memref<9x16x8xf32, #tpu.memory_space<vmem>>, vector<1x16x8xf32>
    %23 = vector.shape_cast %22 : vector<1x16x8xf32> to vector<16x8xf32>
    %cst_16 = arith.constant dense<0.000000e+00> : vector<16x512xf32>
    %24 = tpu.matmul %23, %21, %cst_16 {dimension_numbers = #tpu.dot_dimension_numbers<[1], [0], [0], [1], [0, 0, 1, 1], [], []>} : vector<16x8xf32>, vector<8x512xf32>, vector<16x512xf32> -> vector<16x512xf32>
    %25 = arith.addf %17, %24 : vector<16x512xf32>
    %c3 = arith.constant 3 : index
    %c0_17 = arith.constant 0 : index
    %26 = vector.load %arg2[%c3, %c0_17] : memref<9x512xf32, #tpu.memory_space<vmem>>, vector<1x512xf32>
    %c1_i32 = arith.constant 1 : i32
    %27 = tpu.dynamic_rotate %0 by %c1_i32 dim 1 : vector<8x512xf32>, i32 -> vector<8x512xf32>
    %28 = vector.broadcast %26 : vector<1x512xf32> to vector<8x512xf32>
    %29 = arith.mulf %27, %28 : vector<8x512xf32>
    %c3_18 = arith.constant 3 : index
    %c0_19 = arith.constant 0 : index
    %c0_20 = arith.constant 0 : index
    %30 = vector.load %arg3[%c3_18, %c0_19, %c0_20] : memref<9x16x8xf32, #tpu.memory_space<vmem>>, vector<1x16x8xf32>
    %31 = vector.shape_cast %30 : vector<1x16x8xf32> to vector<16x8xf32>
    %cst_21 = arith.constant dense<0.000000e+00> : vector<16x512xf32>
    %32 = tpu.matmul %31, %29, %cst_21 {dimension_numbers = #tpu.dot_dimension_numbers<[1], [0], [0], [1], [0, 0, 1, 1], [], []>} : vector<16x8xf32>, vector<8x512xf32>, vector<16x512xf32> -> vector<16x512xf32>
    %33 = arith.addf %25, %32 : vector<16x512xf32>
    %c4 = arith.constant 4 : index
    %c0_22 = arith.constant 0 : index
    %34 = vector.load %arg2[%c4, %c0_22] : memref<9x512xf32, #tpu.memory_space<vmem>>, vector<1x512xf32>
    %35 = vector.broadcast %34 : vector<1x512xf32> to vector<8x512xf32>
    %36 = arith.mulf %0, %35 : vector<8x512xf32>
    %c4_23 = arith.constant 4 : index
    %c0_24 = arith.constant 0 : index
    %c0_25 = arith.constant 0 : index
    %37 = vector.load %arg3[%c4_23, %c0_24, %c0_25] : memref<9x16x8xf32, #tpu.memory_space<vmem>>, vector<1x16x8xf32>
    %38 = vector.shape_cast %37 : vector<1x16x8xf32> to vector<16x8xf32>
    %cst_26 = arith.constant dense<0.000000e+00> : vector<16x512xf32>
    %39 = tpu.matmul %38, %36, %cst_26 {dimension_numbers = #tpu.dot_dimension_numbers<[1], [0], [0], [1], [0, 0, 1, 1], [], []>} : vector<16x8xf32>, vector<8x512xf32>, vector<16x512xf32> -> vector<16x512xf32>
    %40 = arith.addf %33, %39 : vector<16x512xf32>
    %c5 = arith.constant 5 : index
    %c0_27 = arith.constant 0 : index
    %41 = vector.load %arg2[%c5, %c0_27] : memref<9x512xf32, #tpu.memory_space<vmem>>, vector<1x512xf32>
    %c511_i32 = arith.constant 511 : i32
    %42 = tpu.dynamic_rotate %0 by %c511_i32 dim 1 : vector<8x512xf32>, i32 -> vector<8x512xf32>
    %43 = vector.broadcast %41 : vector<1x512xf32> to vector<8x512xf32>
    %44 = arith.mulf %42, %43 : vector<8x512xf32>
    %c5_28 = arith.constant 5 : index
    %c0_29 = arith.constant 0 : index
    %c0_30 = arith.constant 0 : index
    %45 = vector.load %arg3[%c5_28, %c0_29, %c0_30] : memref<9x16x8xf32, #tpu.memory_space<vmem>>, vector<1x16x8xf32>
    %46 = vector.shape_cast %45 : vector<1x16x8xf32> to vector<16x8xf32>
    %cst_31 = arith.constant dense<0.000000e+00> : vector<16x512xf32>
    %47 = tpu.matmul %46, %44, %cst_31 {dimension_numbers = #tpu.dot_dimension_numbers<[1], [0], [0], [1], [0, 0, 1, 1], [], []>} : vector<16x8xf32>, vector<8x512xf32>, vector<16x512xf32> -> vector<16x512xf32>
    %48 = arith.addf %40, %47 : vector<16x512xf32>
    %c6 = arith.constant 6 : index
    %c0_32 = arith.constant 0 : index
    %49 = vector.load %arg2[%c6, %c0_32] : memref<9x512xf32, #tpu.memory_space<vmem>>, vector<1x512xf32>
    %c497_i32 = arith.constant 497 : i32
    %50 = tpu.dynamic_rotate %0 by %c497_i32 dim 1 : vector<8x512xf32>, i32 -> vector<8x512xf32>
    %51 = vector.broadcast %49 : vector<1x512xf32> to vector<8x512xf32>
    %52 = arith.mulf %50, %51 : vector<8x512xf32>
    %c6_33 = arith.constant 6 : index
    %c0_34 = arith.constant 0 : index
    %c0_35 = arith.constant 0 : index
    %53 = vector.load %arg3[%c6_33, %c0_34, %c0_35] : memref<9x16x8xf32, #tpu.memory_space<vmem>>, vector<1x16x8xf32>
    %54 = vector.shape_cast %53 : vector<1x16x8xf32> to vector<16x8xf32>
    %cst_36 = arith.constant dense<0.000000e+00> : vector<16x512xf32>
    %55 = tpu.matmul %54, %52, %cst_36 {dimension_numbers = #tpu.dot_dimension_numbers<[1], [0], [0], [1], [0, 0, 1, 1], [], []>} : vector<16x8xf32>, vector<8x512xf32>, vector<16x512xf32> -> vector<16x512xf32>
    %56 = arith.addf %48, %55 : vector<16x512xf32>
    %c7 = arith.constant 7 : index
    %c0_37 = arith.constant 0 : index
    %57 = vector.load %arg2[%c7, %c0_37] : memref<9x512xf32, #tpu.memory_space<vmem>>, vector<1x512xf32>
    %c496_i32 = arith.constant 496 : i32
    %58 = tpu.dynamic_rotate %0 by %c496_i32 dim 1 : vector<8x512xf32>, i32 -> vector<8x512xf32>
    %59 = vector.broadcast %57 : vector<1x512xf32> to vector<8x512xf32>
    %60 = arith.mulf %58, %59 : vector<8x512xf32>
    %c7_38 = arith.constant 7 : index
    %c0_39 = arith.constant 0 : index
    %c0_40 = arith.constant 0 : index
    %61 = vector.load %arg3[%c7_38, %c0_39, %c0_40] : memref<9x16x8xf32, #tpu.memory_space<vmem>>, vector<1x16x8xf32>
    %62 = vector.shape_cast %61 : vector<1x16x8xf32> to vector<16x8xf32>
    %cst_41 = arith.constant dense<0.000000e+00> : vector<16x512xf32>
    %63 = tpu.matmul %62, %60, %cst_41 {dimension_numbers = #tpu.dot_dimension_numbers<[1], [0], [0], [1], [0, 0, 1, 1], [], []>} : vector<16x8xf32>, vector<8x512xf32>, vector<16x512xf32> -> vector<16x512xf32>
    %64 = arith.addf %56, %63 : vector<16x512xf32>
    %c8 = arith.constant 8 : index
    %c0_42 = arith.constant 0 : index
    %65 = vector.load %arg2[%c8, %c0_42] : memref<9x512xf32, #tpu.memory_space<vmem>>, vector<1x512xf32>
    %c495_i32 = arith.constant 495 : i32
    %66 = tpu.dynamic_rotate %0 by %c495_i32 dim 1 : vector<8x512xf32>, i32 -> vector<8x512xf32>
    %67 = vector.broadcast %65 : vector<1x512xf32> to vector<8x512xf32>
    %68 = arith.mulf %66, %67 : vector<8x512xf32>
    %c8_43 = arith.constant 8 : index
    %c0_44 = arith.constant 0 : index
    %c0_45 = arith.constant 0 : index
    %69 = vector.load %arg3[%c8_43, %c0_44, %c0_45] : memref<9x16x8xf32, #tpu.memory_space<vmem>>, vector<1x16x8xf32>
    %70 = vector.shape_cast %69 : vector<1x16x8xf32> to vector<16x8xf32>
    %cst_46 = arith.constant dense<0.000000e+00> : vector<16x512xf32>
    %71 = tpu.matmul %70, %68, %cst_46 {dimension_numbers = #tpu.dot_dimension_numbers<[1], [0], [0], [1], [0, 0, 1, 1], [], []>} : vector<16x8xf32>, vector<8x512xf32>, vector<16x512xf32> -> vector<16x512xf32>
    %72 = arith.addf %64, %71 : vector<16x512xf32>
    %c0_47 = arith.constant 0 : index
    %c0_48 = arith.constant 0 : index
    %73 = vector.load %arg4[%c0_47, %c0_48] : memref<16x1xf32, #tpu.memory_space<vmem>>, vector<16x1xf32>
    %74 = vector.broadcast %73 : vector<16x1xf32> to vector<16x512xf32>
    %75 = arith.addf %72, %74 : vector<16x512xf32>
    %cst_49 = arith.constant 0.000000e+00 : f32
    %76 = vector.broadcast %cst_49 : f32 to vector<16x512xf32>
    %77 = arith.maximumf %75, %76 : vector<16x512xf32>
    %cst_50 = arith.constant 0.000000e+00 : f32
    %78 = vector.broadcast %cst_50 : f32 to vector<8x512xf32>
    %c0_51 = arith.constant 0 : index
    %c0_52 = arith.constant 0 : index
    %c0_53 = arith.constant 0 : index
    %79 = vector.load %arg5[%c0_51, %c0_52, %c0_53] : memref<9x8x16xf32, #tpu.memory_space<vmem>>, vector<1x8x16xf32>
    %80 = vector.shape_cast %79 : vector<1x8x16xf32> to vector<8x16xf32>
    %cst_54 = arith.constant dense<0.000000e+00> : vector<8x512xf32>
    %81 = tpu.matmul %80, %77, %cst_54 {dimension_numbers = #tpu.dot_dimension_numbers<[1], [0], [0], [1], [0, 0, 1, 1], [], []>} : vector<8x16xf32>, vector<16x512xf32>, vector<8x512xf32> -> vector<8x512xf32>
    %c17_i32_55 = arith.constant 17 : i32
    %82 = tpu.dynamic_rotate %81 by %c17_i32_55 dim 1 : vector<8x512xf32>, i32 -> vector<8x512xf32>
    %c0_56 = arith.constant 0 : index
    %c0_57 = arith.constant 0 : index
    %83 = vector.load %arg2[%c0_56, %c0_57] : memref<9x512xf32, #tpu.memory_space<vmem>>, vector<1x512xf32>
    %84 = vector.broadcast %83 : vector<1x512xf32> to vector<8x512xf32>
    %85 = arith.mulf %82, %84 : vector<8x512xf32>
    %86 = arith.addf %78, %85 : vector<8x512xf32>
    %c1_58 = arith.constant 1 : index
    %c0_59 = arith.constant 0 : index
    %c0_60 = arith.constant 0 : index
    %87 = vector.load %arg5[%c1_58, %c0_59, %c0_60] : memref<9x8x16xf32, #tpu.memory_space<vmem>>, vector<1x8x16xf32>
    %88 = vector.shape_cast %87 : vector<1x8x16xf32> to vector<8x16xf32>
    %cst_61 = arith.constant dense<0.000000e+00> : vector<8x512xf32>
    %89 = tpu.matmul %88, %77, %cst_61 {dimension_numbers = #tpu.dot_dimension_numbers<[1], [0], [0], [1], [0, 0, 1, 1], [], []>} : vector<8x16xf32>, vector<16x512xf32>, vector<8x512xf32> -> vector<8x512xf32>
    %c16_i32_62 = arith.constant 16 : i32
    %90 = tpu.dynamic_rotate %89 by %c16_i32_62 dim 1 : vector<8x512xf32>, i32 -> vector<8x512xf32>
    %c1_63 = arith.constant 1 : index
    %c0_64 = arith.constant 0 : index
    %91 = vector.load %arg2[%c1_63, %c0_64] : memref<9x512xf32, #tpu.memory_space<vmem>>, vector<1x512xf32>
    %92 = vector.broadcast %91 : vector<1x512xf32> to vector<8x512xf32>
    %93 = arith.mulf %90, %92 : vector<8x512xf32>
    %94 = arith.addf %86, %93 : vector<8x512xf32>
    %c2_65 = arith.constant 2 : index
    %c0_66 = arith.constant 0 : index
    %c0_67 = arith.constant 0 : index
    %95 = vector.load %arg5[%c2_65, %c0_66, %c0_67] : memref<9x8x16xf32, #tpu.memory_space<vmem>>, vector<1x8x16xf32>
    %96 = vector.shape_cast %95 : vector<1x8x16xf32> to vector<8x16xf32>
    %cst_68 = arith.constant dense<0.000000e+00> : vector<8x512xf32>
    %97 = tpu.matmul %96, %77, %cst_68 {dimension_numbers = #tpu.dot_dimension_numbers<[1], [0], [0], [1], [0, 0, 1, 1], [], []>} : vector<8x16xf32>, vector<16x512xf32>, vector<8x512xf32> -> vector<8x512xf32>
    %c15_i32_69 = arith.constant 15 : i32
    %98 = tpu.dynamic_rotate %97 by %c15_i32_69 dim 1 : vector<8x512xf32>, i32 -> vector<8x512xf32>
    %c2_70 = arith.constant 2 : index
    %c0_71 = arith.constant 0 : index
    %99 = vector.load %arg2[%c2_70, %c0_71] : memref<9x512xf32, #tpu.memory_space<vmem>>, vector<1x512xf32>
    %100 = vector.broadcast %99 : vector<1x512xf32> to vector<8x512xf32>
    %101 = arith.mulf %98, %100 : vector<8x512xf32>
    %102 = arith.addf %94, %101 : vector<8x512xf32>
    %c3_72 = arith.constant 3 : index
    %c0_73 = arith.constant 0 : index
    %c0_74 = arith.constant 0 : index
    %103 = vector.load %arg5[%c3_72, %c0_73, %c0_74] : memref<9x8x16xf32, #tpu.memory_space<vmem>>, vector<1x8x16xf32>
    %104 = vector.shape_cast %103 : vector<1x8x16xf32> to vector<8x16xf32>
    %cst_75 = arith.constant dense<0.000000e+00> : vector<8x512xf32>
    %105 = tpu.matmul %104, %77, %cst_75 {dimension_numbers = #tpu.dot_dimension_numbers<[1], [0], [0], [1], [0, 0, 1, 1], [], []>} : vector<8x16xf32>, vector<16x512xf32>, vector<8x512xf32> -> vector<8x512xf32>
    %c1_i32_76 = arith.constant 1 : i32
    %106 = tpu.dynamic_rotate %105 by %c1_i32_76 dim 1 : vector<8x512xf32>, i32 -> vector<8x512xf32>
    %c3_77 = arith.constant 3 : index
    %c0_78 = arith.constant 0 : index
    %107 = vector.load %arg2[%c3_77, %c0_78] : memref<9x512xf32, #tpu.memory_space<vmem>>, vector<1x512xf32>
    %108 = vector.broadcast %107 : vector<1x512xf32> to vector<8x512xf32>
    %109 = arith.mulf %106, %108 : vector<8x512xf32>
    %110 = arith.addf %102, %109 : vector<8x512xf32>
    %c4_79 = arith.constant 4 : index
    %c0_80 = arith.constant 0 : index
    %c0_81 = arith.constant 0 : index
    %111 = vector.load %arg5[%c4_79, %c0_80, %c0_81] : memref<9x8x16xf32, #tpu.memory_space<vmem>>, vector<1x8x16xf32>
    %112 = vector.shape_cast %111 : vector<1x8x16xf32> to vector<8x16xf32>
    %cst_82 = arith.constant dense<0.000000e+00> : vector<8x512xf32>
    %113 = tpu.matmul %112, %77, %cst_82 {dimension_numbers = #tpu.dot_dimension_numbers<[1], [0], [0], [1], [0, 0, 1, 1], [], []>} : vector<8x16xf32>, vector<16x512xf32>, vector<8x512xf32> -> vector<8x512xf32>
    %c4_83 = arith.constant 4 : index
    %c0_84 = arith.constant 0 : index
    %114 = vector.load %arg2[%c4_83, %c0_84] : memref<9x512xf32, #tpu.memory_space<vmem>>, vector<1x512xf32>
    %115 = vector.broadcast %114 : vector<1x512xf32> to vector<8x512xf32>
    %116 = arith.mulf %113, %115 : vector<8x512xf32>
    %117 = arith.addf %110, %116 : vector<8x512xf32>
    %c5_85 = arith.constant 5 : index
    %c0_86 = arith.constant 0 : index
    %c0_87 = arith.constant 0 : index
    %118 = vector.load %arg5[%c5_85, %c0_86, %c0_87] : memref<9x8x16xf32, #tpu.memory_space<vmem>>, vector<1x8x16xf32>
    %119 = vector.shape_cast %118 : vector<1x8x16xf32> to vector<8x16xf32>
    %cst_88 = arith.constant dense<0.000000e+00> : vector<8x512xf32>
    %120 = tpu.matmul %119, %77, %cst_88 {dimension_numbers = #tpu.dot_dimension_numbers<[1], [0], [0], [1], [0, 0, 1, 1], [], []>} : vector<8x16xf32>, vector<16x512xf32>, vector<8x512xf32> -> vector<8x512xf32>
    %c511_i32_89 = arith.constant 511 : i32
    %121 = tpu.dynamic_rotate %120 by %c511_i32_89 dim 1 : vector<8x512xf32>, i32 -> vector<8x512xf32>
    %c5_90 = arith.constant 5 : index
    %c0_91 = arith.constant 0 : index
    %122 = vector.load %arg2[%c5_90, %c0_91] : memref<9x512xf32, #tpu.memory_space<vmem>>, vector<1x512xf32>
    %123 = vector.broadcast %122 : vector<1x512xf32> to vector<8x512xf32>
    %124 = arith.mulf %121, %123 : vector<8x512xf32>
    %125 = arith.addf %117, %124 : vector<8x512xf32>
    %c6_92 = arith.constant 6 : index
    %c0_93 = arith.constant 0 : index
    %c0_94 = arith.constant 0 : index
    %126 = vector.load %arg5[%c6_92, %c0_93, %c0_94] : memref<9x8x16xf32, #tpu.memory_space<vmem>>, vector<1x8x16xf32>
    %127 = vector.shape_cast %126 : vector<1x8x16xf32> to vector<8x16xf32>
    %cst_95 = arith.constant dense<0.000000e+00> : vector<8x512xf32>
    %128 = tpu.matmul %127, %77, %cst_95 {dimension_numbers = #tpu.dot_dimension_numbers<[1], [0], [0], [1], [0, 0, 1, 1], [], []>} : vector<8x16xf32>, vector<16x512xf32>, vector<8x512xf32> -> vector<8x512xf32>
    %c497_i32_96 = arith.constant 497 : i32
    %129 = tpu.dynamic_rotate %128 by %c497_i32_96 dim 1 : vector<8x512xf32>, i32 -> vector<8x512xf32>
    %c6_97 = arith.constant 6 : index
    %c0_98 = arith.constant 0 : index
    %130 = vector.load %arg2[%c6_97, %c0_98] : memref<9x512xf32, #tpu.memory_space<vmem>>, vector<1x512xf32>
    %131 = vector.broadcast %130 : vector<1x512xf32> to vector<8x512xf32>
    %132 = arith.mulf %129, %131 : vector<8x512xf32>
    %133 = arith.addf %125, %132 : vector<8x512xf32>
    %c7_99 = arith.constant 7 : index
    %c0_100 = arith.constant 0 : index
    %c0_101 = arith.constant 0 : index
    %134 = vector.load %arg5[%c7_99, %c0_100, %c0_101] : memref<9x8x16xf32, #tpu.memory_space<vmem>>, vector<1x8x16xf32>
    %135 = vector.shape_cast %134 : vector<1x8x16xf32> to vector<8x16xf32>
    %cst_102 = arith.constant dense<0.000000e+00> : vector<8x512xf32>
    %136 = tpu.matmul %135, %77, %cst_102 {dimension_numbers = #tpu.dot_dimension_numbers<[1], [0], [0], [1], [0, 0, 1, 1], [], []>} : vector<8x16xf32>, vector<16x512xf32>, vector<8x512xf32> -> vector<8x512xf32>
    %c496_i32_103 = arith.constant 496 : i32
    %137 = tpu.dynamic_rotate %136 by %c496_i32_103 dim 1 : vector<8x512xf32>, i32 -> vector<8x512xf32>
    %c7_104 = arith.constant 7 : index
    %c0_105 = arith.constant 0 : index
    %138 = vector.load %arg2[%c7_104, %c0_105] : memref<9x512xf32, #tpu.memory_space<vmem>>, vector<1x512xf32>
    %139 = vector.broadcast %138 : vector<1x512xf32> to vector<8x512xf32>
    %140 = arith.mulf %137, %139 : vector<8x512xf32>
    %141 = arith.addf %133, %140 : vector<8x512xf32>
    %c8_106 = arith.constant 8 : index
    %c0_107 = arith.constant 0 : index
    %c0_108 = arith.constant 0 : index
    %142 = vector.load %arg5[%c8_106, %c0_107, %c0_108] : memref<9x8x16xf32, #tpu.memory_space<vmem>>, vector<1x8x16xf32>
    %143 = vector.shape_cast %142 : vector<1x8x16xf32> to vector<8x16xf32>
    %cst_109 = arith.constant dense<0.000000e+00> : vector<8x512xf32>
    %144 = tpu.matmul %143, %77, %cst_109 {dimension_numbers = #tpu.dot_dimension_numbers<[1], [0], [0], [1], [0, 0, 1, 1], [], []>} : vector<8x16xf32>, vector<16x512xf32>, vector<8x512xf32> -> vector<8x512xf32>
    %c495_i32_110 = arith.constant 495 : i32
    %145 = tpu.dynamic_rotate %144 by %c495_i32_110 dim 1 : vector<8x512xf32>, i32 -> vector<8x512xf32>
    %c8_111 = arith.constant 8 : index
    %c0_112 = arith.constant 0 : index
    %146 = vector.load %arg2[%c8_111, %c0_112] : memref<9x512xf32, #tpu.memory_space<vmem>>, vector<1x512xf32>
    %147 = vector.broadcast %146 : vector<1x512xf32> to vector<8x512xf32>
    %148 = arith.mulf %145, %147 : vector<8x512xf32>
    %149 = arith.addf %141, %148 : vector<8x512xf32>
    %c0_113 = arith.constant 0 : index
    %c0_114 = arith.constant 0 : index
    %150 = vector.load %arg6[%c0_113, %c0_114] : memref<8x1xf32, #tpu.memory_space<vmem>>, vector<8x1xf32>
    %151 = vector.broadcast %150 : vector<8x1xf32> to vector<8x512xf32>
    %152 = arith.addf %149, %151 : vector<8x512xf32>
    %153 = arith.addf %0, %152 : vector<8x512xf32>
    %154 = arith.mulf %153, %153 : vector<8x512xf32>
    %cst_115 = arith.constant dense<0.000000e+00> : vector<512xf32>
    %155 = vector.multi_reduction <add>, %154, %cst_115 [0] : vector<8x512xf32> to vector<512xf32>
    %156 = vector.shape_cast %155 : vector<512xf32> to vector<1x512xf32>
    %cst_116 = arith.constant 0.000000e+00 : f32
    %157 = vector.broadcast %cst_116 : f32 to vector<1x512xf32>
    %158 = arith.cmpf ogt, %156, %157 : vector<1x512xf32>
    %159 = math.rsqrt %156 : vector<1x512xf32>
    %cst_117 = arith.constant 0.000000e+00 : f32
    %160 = vector.broadcast %cst_117 : f32 to vector<1x512xf32>
    %161 = arith.select %158, %159, %160 : vector<1x512xi1>, vector<1x512xf32>
    %162 = vector.broadcast %161 : vector<1x512xf32> to vector<8x512xf32>
    %163 = arith.mulf %153, %162 : vector<8x512xf32>
    %c0_118 = arith.constant 0 : index
    %c0_119 = arith.constant 0 : index
    %164 = vector.load %arg7[%c0_118, %c0_119] : memref<8x512xf32, #tpu.memory_space<vmem>>, vector<8x512xf32>
    tpu.vector_store %arg7[%c0_118, %c0_119], %163 {strides = array<i32>} : memref<8x512xf32, #tpu.memory_space<vmem>>, vector<8x512xf32>,
    return
  }
  func.func @transform_0(%arg0: i32) -> (i32, i32) {
    %c0_i32 = arith.constant 0 : i32
    %c0_i32_0 = arith.constant 0 : i32
    return %c0_i32, %arg0 : i32, i32
  }
  func.func @transform_1(%arg0: i32) -> (i32, i32) {
    %c0_i32 = arith.constant 0 : i32
    %c0_i32_0 = arith.constant 0 : i32
    %c0_i32_1 = arith.constant 0 : i32
    return %c0_i32, %c0_i32_0 : i32, i32
  }
  func.func @transform_2(%arg0: i32) -> (i32, i32, i32) {
    %c0_i32 = arith.constant 0 : i32
    %c0_i32_0 = arith.constant 0 : i32
    %c0_i32_1 = arith.constant 0 : i32
    %c0_i32_2 = arith.constant 0 : i32
    return %c0_i32, %c0_i32_0, %c0_i32_1 : i32, i32, i32
  }
  func.func @transform_3(%arg0: i32) -> (i32, i32) {
    %c0_i32 = arith.constant 0 : i32
    %c0_i32_0 = arith.constant 0 : i32
    %c0_i32_1 = arith.constant 0 : i32
    return %c0_i32, %c0_i32_0 : i32, i32
  }
  func.func @transform_4(%arg0: i32) -> (i32, i32, i32) {
    %c0_i32 = arith.constant 0 : i32
    %c0_i32_0 = arith.constant 0 : i32
    %c0_i32_1 = arith.constant 0 : i32
    %c0_i32_2 = arith.constant 0 : i32
    return %c0_i32, %c0_i32_0, %c0_i32_1 : i32, i32, i32
  }
  func.func @transform_5(%arg0: i32) -> (i32, i32) {
    %c0_i32 = arith.constant 0 : i32
    %c0_i32_0 = arith.constant 0 : i32
    %c0_i32_1 = arith.constant 0 : i32
    return %c0_i32, %c0_i32_0 : i32, i32
  }
  func.func @transform_6(%arg0: i32) -> (i32, i32) {
    %c0_i32 = arith.constant 0 : i32
    %c0_i32_0 = arith.constant 0 : i32
    return %c0_i32, %arg0 : i32, i32
  }
}

</mosaic_0001>

<llo_original>
// kernel: tpu_custom_call.1
$region0: #{tpu_custom_call.1}
  #allocation0 [shape = 'u32[]', space=smem, size = 0x4, offset = 0x4, fixed_abs, tag = 'smem constant byte address 0x4 - core index']
  #allocation1 [shape = 'u32[144,128]{1,0:T(1,128)}', space=vmem, size = 0x12000, scoped, tag = 'internal scratch']
  %s0 = inlined_call_operand.vmem [shape: f32[8,1024], index: 0, kind: input, shape index: {}]
  %s1 = inlined_call_operand.vmem [shape: f32[9,512], index: 1, kind: input, shape index: {}]
  %s2 = inlined_call_operand.vmem [shape: f32[9,16,8], index: 2, kind: input, shape index: {}]
  %s3 = inlined_call_operand.vmem [shape: f32[16,1], index: 3, kind: input, shape index: {}]
  %s4 = inlined_call_operand.vmem [shape: f32[9,8,16], index: 4, kind: input, shape index: {}]
  %s5 = inlined_call_operand.vmem [shape: f32[8,1], index: 5, kind: input, shape index: {}]
  %s6 = inlined_call_operand.hbm [shape: f32[8,1024], index: 6, kind: output, shape index: {}]
  %s7 = sld [smem:[#allocation0]]
  $region57: #{tpu_custom_call.1} parent=0
    _
  %s9 = ssub.s32 1, %s7
  %s10 = scalar_select 0, %s9, %s7
  $region1: #{tpu_custom_call.1} parent=0
    #allocation2 [shape = 'u8[32768]{0}', space=vmem, size = 0x8000, scoped, tag = 'output window, operand 0']
    #allocation3 [shape = 's32[2]{0}', space=sflag, size = 0x8, scoped, tag = 'scoped memory for tpu_custom_call.1']
    %11 = vsyncpa [#allocation3], 0
    %s12 = scalar_lea.sflag [#allocation3], 1
    %13 = vsyncpa %s12, 0
    loop: start=0, step=1, limit=4
    $region2: #{tpu_custom_call.1} parent=1 // loop_pre_header
      _
    $region3: #{tpu_custom_call.1} parent=1 // loop_header
      %s15 = sphi 0, %s19
      %p16 = scmp.ge.s32.totalorder %s15, 4
      %s25 = sphi 0, %s27
      %s28 = sphi 0, %s25
      %s29 = sphi 0, %s28
      %s45 = sphi 0, %s29
      %s49 = sphi 0, %s49
      %s51 = sphi 0, %s49
      %s52 = sphi 0, %s51
      %s66 = sphi 0, %s52
      %s70 = sphi 0, %s70
      %s72 = sphi 0, %s70
      %s73 = sphi 0, %s72
      %s87 = sphi 0, %s73
      %s91 = sphi 0, %s91
      %s93 = sphi 0, %s91
      %s94 = sphi 0, %s93
      %s108 = sphi 0, %s94
      %s112 = sphi 0, %s112
      %s114 = sphi 0, %s112
      %s115 = sphi 0, %s114
      %s129 = sphi 0, %s115
      %s133 = sphi 0, %s133
      %s135 = sphi 0, %s133
      %s136 = sphi 0, %s135
      %s150 = sphi 0, %s136
      %s156 = sphi 0, %s158
      %s159 = sphi 0, %s156
      %s160 = sphi 0, %s159
      %s176 = sphi 0, %s160
    $region4: #{tpu_custom_call.1} parent=1 // loop_header_branch
      %18 = sbr.rel (%p16) target = $region8
    $region5: #{tpu_custom_call.1} parent=1 // loop_body
      %s20 = ssub.s32 %s15, 1
      %s21 = ssub.s32 %s15, 2
      %s22 = sadd.s32 %s15, 1
      %s23 = ssub.s32 %s15, %s22
      %p24 = scmp.eq.s32.totalorder %s23, 0
      %s26 = sadd.s32 %s25, 1
      %s27 = scalar_select %p24, %s25, %s26
      %p30 = pneg %p24
      %p31 = scmp.eq.s32.totalorder %s15, 1
      %p32 = por %p30, %p31
      %p33 = scmp.ne.s32.totalorder %s25, %s28
      %p34 = scmp.eq.s32.totalorder %s15, 0
      %p35 = por %p33, %p34
      %p36 = scmp.ne.s32.totalorder %s25, %s28
      %p37 = scmp.eq.s32.totalorder %s20, 1
      %p38 = por %p36, %p37
      %p39 = scmp.ne.s32.totalorder %s28, %s29
      %p40 = scmp.eq.s32.totalorder %s20, 0
      %p41 = por %p39, %p40
      %p42 = scmp.ne.s32.totalorder %s28, %s29
      %p43 = scmp.eq.s32.totalorder %s21, 1
      %p44 = por %p42, %p43
      %p46 = scmp.ne.s32.totalorder %s29, %s45
      %p47 = scmp.eq.s32.totalorder %s21, 0
      %p48 = por %p46, %p47
      %s50 = sadd.s32 %s49, 1
      %p53 = scmp.eq.s32.totalorder %s15, 1
      %p54 = scmp.ne.s32.totalorder %s49, %s51
      %p55 = scmp.eq.s32.totalorder %s15, 0
      %p56 = por %p54, %p55
      %p57 = scmp.ne.s32.totalorder %s49, %s51
      %p58 = scmp.eq.s32.totalorder %s20, 1
      %p59 = por %p57, %p58
      %p60 = scmp.ne.s32.totalorder %s51, %s52
      %p61 = scmp.eq.s32.totalorder %s20, 0
      %p62 = por %p60, %p61
      %p63 = scmp.ne.s32.totalorder %s51, %s52
      %p64 = scmp.eq.s32.totalorder %s21, 1
      %p65 = por %p63, %p64
      %p67 = scmp.ne.s32.totalorder %s52, %s66
      %p68 = scmp.eq.s32.totalorder %s21, 0
      %p69 = por %p67, %p68
      %s71 = sadd.s32 %s70, 1
      %p74 = scmp.eq.s32.totalorder %s15, 1
      %p75 = scmp.ne.s32.totalorder %s70, %s72
      %p76 = scmp.eq.s32.totalorder %s15, 0
      %p77 = por %p75, %p76
      %p78 = scmp.ne.s32.totalorder %s70, %s72
      %p79 = scmp.eq.s32.totalorder %s20, 1
      %p80 = por %p78, %p79
      %p81 = scmp.ne.s32.totalorder %s72, %s73
      %p82 = scmp.eq.s32.totalorder %s20, 0
      %p83 = por %p81, %p82
      %p84 = scmp.ne.s32.totalorder %s72, %s73
      %p85 = scmp.eq.s32.totalorder %s21, 1
      %p86 = por %p84, %p85
      %p88 = scmp.ne.s32.totalorder %s73, %s87
      %p89 = scmp.eq.s32.totalorder %s21, 0
      %p90 = por %p88, %p89
      %s92 = sadd.s32 %s91, 1
      %p95 = scmp.eq.s32.totalorder %s15, 1
      %p96 = scmp.ne.s32.totalorder %s91, %s93
      %p97 = scmp.eq.s32.totalorder %s15, 0
      %p98 = por %p96, %p97
      %p99 = scmp.ne.s32.totalorder %s91, %s93
      %p100 = scmp.eq.s32.totalorder %s20, 1
      %p101 = por %p99, %p100
      %p102 = scmp.ne.s32.totalorder %s93, %s94
      %p103 = scmp.eq.s32.totalorder %s20, 0
      %p104 = por %p102, %p103
      %p105 = scmp.ne.s32.totalorder %s93, %s94
      %p106 = scmp.eq.s32.totalorder %s21, 1
      %p107 = por %p105, %p106
      %p109 = scmp.ne.s32.totalorder %s94, %s108
      %p110 = scmp.eq.s32.totalorder %s21, 0
      %p111 = por %p109, %p110
      %s113 = sadd.s32 %s112, 1
      %p116 = scmp.eq.s32.totalorder %s15, 1
      %p117 = scmp.ne.s32.totalorder %s112, %s114
      %p118 = scmp.eq.s32.totalorder %s15, 0
      %p119 = por %p117, %p118
      %p120 = scmp.ne.s32.totalorder %s112, %s114
      %p121 = scmp.eq.s32.totalorder %s20, 1
      %p122 = por %p120, %p121
      %p123 = scmp.ne.s32.totalorder %s114, %s115
      %p124 = scmp.eq.s32.totalorder %s20, 0
      %p125 = por %p123, %p124
      %p126 = scmp.ne.s32.totalorder %s114, %s115
      %p127 = scmp.eq.s32.totalorder %s21, 1
      %p128 = por %p126, %p127
      %p130 = scmp.ne.s32.totalorder %s115, %s129
      %p131 = scmp.eq.s32.totalorder %s21, 0
      %p132 = por %p130, %p131
      %s134 = sadd.s32 %s133, 1
      %p137 = scmp.eq.s32.totalorder %s15, 1
      %p138 = scmp.ne.s32.totalorder %s133, %s135
      %p139 = scmp.eq.s32.totalorder %s15, 0
      %p140 = por %p138, %p139
      %p141 = scmp.ne.s32.totalorder %s133, %s135
      %p142 = scmp.eq.s32.totalorder %s20, 1
      %p143 = por %p141, %p142
      %p144 = scmp.ne.s32.totalorder %s135, %s136
      %p145 = scmp.eq.s32.totalorder %s20, 0
      %p146 = por %p144, %p145
      %p147 = scmp.ne.s32.totalorder %s135, %s136
      %p148 = scmp.eq.s32.totalorder %s21, 1
      %p149 = por %p147, %p148
      %p151 = scmp.ne.s32.totalorder %s136, %s150
      %p152 = scmp.eq.s32.totalorder %s21, 0
      %p153 = por %p151, %p152
      %s154 = ssub.s32 %s15, %s22
      %p155 = scmp.eq.s32.totalorder %s154, 0
      %s157 = sadd.s32 %s156, 1
      %s158 = scalar_select %p155, %s156, %s157
      %p161 = pneg %p155
      %p162 = scmp.eq.s32.totalorder %s15, 1
      %p163 = por %p161, %p162
      %p164 = scmp.ne.s32.totalorder %s156, %s159
      %p165 = scmp.eq.s32.totalorder %s15, 0
      %p166 = por %p164, %p165
      %p167 = scmp.ne.s32.totalorder %s156, %s159
      %p168 = scmp.eq.s32.totalorder %s20, 1
      %p169 = por %p167, %p168
      %p170 = scmp.ne.s32.totalorder %s159, %s160
      %p171 = scmp.eq.s32.totalorder %s20, 0
      %p172 = por %p170, %p171
      %p173 = scmp.ne.s32.totalorder %s159, %s160
      %p174 = scmp.eq.s32.totalorder %s21, 1
      %p175 = por %p173, %p174
      %p177 = scmp.ne.s32.totalorder %s160, %s176
      %p178 = scmp.eq.s32.totalorder %s21, 0
      %p179 = por %p177, %p178
      %p180 = scmp.le.s32.totalorder 1, %s15
      %p181 = scmp.lt.s32.totalorder %s15, 3
      %p182 = pnand %p180, %p181
      %p183 = pneg %p182
      // Predicated region
      $region9: #{tpu_custom_call.1} parent=5 // pred_check
        _
      $region10: #{tpu_custom_call.1} parent=5 // pred_check_branch
        %185 = sbr.rel (%p182) target = $region12
      $region11: #{tpu_custom_call.1} parent=5 // pred_region
        %s186 = ssub.s32 %s15, 1
        // Predicated region
        $region13: #{tpu_custom_call.1} parent=11 // pred_check
          %p187 = pneg %p62
        $region14: #{tpu_custom_call.1} parent=11 // pred_check_branch
          %189 = sbr.rel (%p187) target = $region16
        $region15: #{tpu_custom_call.1} parent=11 // pred_region
          _
        $region16: #{tpu_custom_call.1} parent=11 // pred_fallthru
          _
        // Predicated region
        $region17: #{tpu_custom_call.1} parent=11 // pred_check
          %p190 = pneg %p83
        $region18: #{tpu_custom_call.1} parent=11 // pred_check_branch
          %192 = sbr.rel (%p190) target = $region20
        $region19: #{tpu_custom_call.1} parent=11 // pred_region
          _
        $region20: #{tpu_custom_call.1} parent=11 // pred_fallthru
          _
        // Predicated region
        $region21: #{tpu_custom_call.1} parent=11 // pred_check
          %p193 = pneg %p104
        $region22: #{tpu_custom_call.1} parent=11 // pred_check_branch
          %195 = sbr.rel (%p193) target = $region24
        $region23: #{tpu_custom_call.1} parent=11 // pred_region
          _
        $region24: #{tpu_custom_call.1} parent=11 // pred_fallthru
          _
        // Predicated region
        $region25: #{tpu_custom_call.1} parent=11 // pred_check
          %p196 = pneg %p125
        $region26: #{tpu_custom_call.1} parent=11 // pred_check_branch
          %198 = sbr.rel (%p196) target = $region28
        $region27: #{tpu_custom_call.1} parent=11 // pred_region
          _
        $region28: #{tpu_custom_call.1} parent=11 // pred_fallthru
          _
        // Predicated region
        $region29: #{tpu_custom_call.1} parent=11 // pred_check
          %p199 = pneg %p146
        $region30: #{tpu_custom_call.1} parent=11 // pred_check_branch
          %201 = sbr.rel (%p199) target = $region32
        $region31: #{tpu_custom_call.1} parent=11 // pred_region
          _
        $region32: #{tpu_custom_call.1} parent=11 // pred_fallthru
          _
      $region12: #{tpu_custom_call.1} parent=5 // pred_fallthru
        _
      %p202 = scmp.lt.s32.totalorder %s15, 2
      // Predicated region
      $region33: #{tpu_custom_call.1} parent=5 // pred_check
        %p203 = pneg %p202
      $region34: #{tpu_custom_call.1} parent=5 // pred_check_branch
        %205 = sbr.rel (%p203) target = $region36
      $region35: #{tpu_custom_call.1} parent=5 // pred_region
        // Predicated region
        $region37: #{tpu_custom_call.1} parent=35 // pred_check
          %p206 = pneg %p35
        $region38: #{tpu_custom_call.1} parent=35 // pred_check_branch
          %208 = sbr.rel (%p206) target = $region40
        $region39: #{tpu_custom_call.1} parent=35 // pred_region
          %s209 = smul.u32 4, %s15
          %p210 = scmp.lt.s32.totalorder %s209, 7
          %s211 = scalar_select %p210, %s209, 7
          %s212 = smul.addr %s211, 8
          %s213 = scalar_lea.vmem %s0, %s212
          %s214 = smul.u32 4, %s15
        $region40: #{tpu_custom_call.1} parent=35 // pred_fallthru
          _
      $region36: #{tpu_custom_call.1} parent=5 // pred_fallthru
        _
      %p215 = scmp.le.s32.totalorder 1, %s15
      %p216 = scmp.lt.s32.totalorder %s15, 3
      %p217 = pnand %p215, %p216
      %p218 = pneg %p217
      // Predicated region
      $region41: #{tpu_custom_call.1} parent=5 // pred_check
        _
      $region42: #{tpu_custom_call.1} parent=5 // pred_check_branch
        %220 = sbr.rel (%p217) target = $region44
      $region43: #{tpu_custom_call.1} parent=5 // pred_region
        %s221 = ssub.s32 %s15, 1
        %s222 = smul.u32 4, %s20
        %p223 = scmp.lt.s32.totalorder %s222, 7
        %s224 = scalar_select %p223, %s222, 7
        %s225 = smul.addr %s224, 8
        %s226 = scalar_lea.vmem %s0, %s225
        %p227 = pneg %p41
        %p228 = pneg %p38
        %p229 = pneg %p62
        %p230 = pneg %p59
        %p231 = pneg %p83
        %p232 = pneg %p80
        %p233 = pneg %p104
        %p234 = pneg %p101
        %p235 = pneg %p125
        %p236 = pneg %p122
        %p237 = pneg %p146
        %p238 = pneg %p143
        %p239 = pneg %p172
        %p240 = pneg %p169
        %s241 = sand.u32 %s159, 1
        %s242 = scalar_lea.sflag [#allocation3], %s241
        %s243 = sand.u32 %s159, 1
        %s244 = smul.addr %s243, 32
        %s245 = scalar_lea.vmem [#allocation2], %s244
        %s246 = smul.u32 4, %s20
        %p247 = scmp.lt.s32.totalorder %s246, 7
        %s248 = scalar_select %p247, %s246, 7
        %s249 = smul.addr %s248, 8
        %s250 = scalar_lea.vmem %s0, %s249
        %s251 = smul.u32 4, %s20
        %s252 = smul.u32 4, %s20
        %v253 = vld [vmem:[%s250] sm:$0xff]
        %v254 = vld [vmem:[%s250 + $0x8] sm:$0xff]
        %v255 = vld [vmem:[%s250 + $0x10] sm:$0xff]
        %v256 = vld [vmem:[%s250 + $0x18] sm:$0xff]
        %v257 = vld [vmem:[%s1] ss:$8 sm:$0xf]
        %258 = vrot.lane.b32.xlu0 %v253, 17
        %v259 = vpop.permute.xlu0 %258
        %260 = vrot.lane.b32.xlu0 %v254, 17
        %v261 = vpop.permute.xlu0 %260
        %262 = vrot.lane.b32.xlu0 %v255, 17
        %v263 = vpop.permute.xlu0 %262
        %264 = vrot.lane.b32.xlu0 %v256, 17
        %v265 = vpop.permute.xlu0 %264
        %v266 = vlaneseq
        %v267 = vand.u32 %v266, 127
        %vm268 = vcmp.lt.s32.totalorder %v267, 17
        %v269 = vsel %vm268, %v263, %v265
        %v270 = vsel %vm268, %v261, %v263
        %v271 = vsel %vm268, %v259, %v261
        %v272 = vsel %vm268, %v265, %v259
        %v274 = vlaneseq
        %v275 = vshrl.u32 %v274, 7
        %v276 = vsub.s32 0, %v275
        %v277 = vrot.slane %v257, %v276
        %v278 = vlaneseq
        %v279 = vshrl.u32 %v278, 7
        %v280 = vsub.s32 1, %v279
        %v281 = vrot.slane %v257, %v280
        %v282 = vlaneseq
        %v283 = vshrl.u32 %v282, 7
        %v284 = vsub.s32 2, %v283
        %v285 = vrot.slane %v257, %v284
        %v286 = vlaneseq
        %v287 = vshrl.u32 %v286, 7
        %v288 = vsub.s32 3, %v287
        %v289 = vrot.slane %v257, %v288
        %v294 = vmul.f32 %v272, %v277
        %v295 = vmul.f32 %v271, %v281
        %v296 = vmul.f32 %v270, %v285
        %v297 = vmul.f32 %v269, %v289
        %v298 = vld [vmem:[%s2] sm:$0xff]
        %v299 = vld [vmem:[%s2 + $0x8] sm:$0xff]
        %s300 = scalar_lea.vmem %s1, 1
        %v301 = vld [vmem:[%s300] ss:$8 sm:$0xf]
        %302 = vrot.lane.b32.xlu0 %v253, 16
        %v303 = vpop.permute.xlu0 %302
        %304 = vrot.lane.b32.xlu0 %v254, 16
        %v305 = vpop.permute.xlu0 %304
        %306 = vrot.lane.b32.xlu0 %v255, 16
        %v307 = vpop.permute.xlu0 %306
        %308 = vrot.lane.b32.xlu0 %v256, 16
        %v309 = vpop.permute.xlu0 %308
        %vm310 = vcmp.lt.s32.totalorder %v267, 16
        %v311 = vsel %vm310, %v307, %v309
        %v312 = vsel %vm310, %v305, %v307
        %v313 = vsel %vm310, %v303, %v305
        %v314 = vsel %vm310, %v309, %v303
        %v316 = vlaneseq
        %v317 = vshrl.u32 %v316, 7
        %v318 = vsub.s32 0, %v317
        %v319 = vrot.slane %v301, %v318
        %v320 = vlaneseq
        %v321 = vshrl.u32 %v320, 7
        %v322 = vsub.s32 1, %v321
        %v323 = vrot.slane %v301, %v322
        %v324 = vlaneseq
        %v325 = vshrl.u32 %v324, 7
        %v326 = vsub.s32 2, %v325
        %v327 = vrot.slane %v301, %v326
        %v328 = vlaneseq
        %v329 = vshrl.u32 %v328, 7
        %v330 = vsub.s32 3, %v329
        %v331 = vrot.slane %v301, %v330
        %v336 = vmul.f32 %v314, %v319
        %v337 = vmul.f32 %v313, %v323
        %v338 = vmul.f32 %v312, %v327
        %v339 = vmul.f32 %v311, %v331
        %s340 = scalar_lea.vmem %s2, 16
        %v341 = vld [vmem:[%s340] sm:$0xff]
        %v342 = vld [vmem:[%s340 + $0x8] sm:$0xff]
        %vm343 = vcmask 64512
        %v345 = vsel %vm343, %v341, 0
        %v348 = vsel %vm343, %v342, 0
        %350 = vmatprep.subr.mxu0 %v337
        %351 = vmatpush1.msra.mxu0 %v336
        %352 = vmatprep.subr.mxu0 0.0
        %353 = vmatpush1.msra.mxu0 0.0
        %354 = vmatprep.subr.mxu0 0.0
        %355 = vmatpush1.msra.mxu0 0.0
        %356 = vmatprep.subr.mxu0 0.0
        %357 = vmatpush1.msra.mxu0 0.0
        %358 = vmatprep.subr.mxu0 0.0
        %359 = vmatpush1.msra.mxu0 0.0
        %360 = vmatprep.subr.mxu0 0.0
        %361 = vmatpush1.msra.mxu0 0.0
        %362 = vmatprep.subr.mxu0 0.0
        %363 = vmatpush1.msra.mxu0 0.0
        %364 = vmatprep.subr.mxu0 0.0
        %365 = vmatpush1.msra.mxu0 0.0
        %366 = vmatprep.subr.mxu0 0.0
        %367 = vmatpush1.msra.mxu0 0.0
        %368 = vmatprep.subr.mxu0 0.0
        %369 = vmatpush1.msra.mxu0 0.0
        %370 = vmatprep.subr.mxu0 0.0
        %371 = vmatpush1.msra.mxu0 0.0
        %372 = vmatprep.subr.mxu0 0.0
        %373 = vmatpush1.msra.mxu0 0.0
        %374 = vmatprep.subr.mxu0 0.0
        %375 = vmatpush1.msra.mxu0 0.0
        %376 = vmatprep.subr.mxu0 0.0
        %377 = vmatpush1.msra.mxu0 0.0
        %378 = vmatprep.subr.mxu0 0.0
        %379 = vmatpush1.msra.mxu0 0.0
        %380 = vmatprep.subr.mxu0 0.0
        %381 = vmatpush1.msra.mxu0 0.0
        %382 = vmatprep.subr.mxu0 0.0
        %383 = vmatpush1.msra.mxu0 0.0
        %384 = vmatprep.subr.mxu0 0.0
        %385 = vmatpush1.msra.mxu0 0.0
        %386 = vmatprep.subr.mxu0 0.0
        %387 = vmatpush1.msra.mxu0 0.0
        %388 = vmatprep.subr.mxu0 0.0
        %389 = vmatpush1.msra.mxu0 0.0
        %390 = vmatprep.subr.mxu0 0.0
        %391 = vmatpush1.msra.mxu0 0.0
        %392 = vmatprep.subr.mxu0 0.0
        %393 = vmatpush1.msra.mxu0 0.0
        %394 = vmatprep.subr.mxu0 0.0
        %395 = vmatpush1.msra.mxu0 0.0
        %396 = vmatprep.subr.mxu0 0.0
        %397 = vmatpush1.msra.mxu0 0.0
        %398 = vmatprep.subr.mxu0 0.0
        %399 = vmatpush1.msra.mxu0 0.0
        %400 = vmatprep.subr.mxu0 0.0
        %401 = vmatpush1.msra.mxu0 0.0
        %402 = vmatprep.subr.mxu0 0.0
        %403 = vmatpush1.msra.mxu0 0.0
        %404 = vmatprep.subr.mxu0 0.0
        %405 = vmatpush1.msra.mxu0 0.0
        %406 = vmatprep.subr.mxu0 0.0
        %407 = vmatpush1.msra.mxu0 0.0
        %408 = vmatprep.subr.mxu0 0.0
        %409 = vmatpush1.msra.mxu0 0.0
        %410 = vmatprep.subr.mxu0 0.0
        %411 = vmatpush1.msra.mxu0 0.0
        %412 = vmatprep.subr.mxu0 0.0
        %413 = vmatpush1.msra.mxu0 0.0
        %414 = vmatprep.mubr.f32.mxu0 0.0
        %415 = vmatmul.mubr.f32.gmra.mrb[0].mxu0 %v345
        %v416 = vpop.f32.mrb[0].mxu0
        %v417 = vadd.f32 0.0, %v416
        %v418 = vpop.f32.mrb[0].mxu0
        %v419 = vadd.f32 0.0, %v418
        %420 = vmatprep.mubr.f32.mxu0 0.0
        %421 = vmatmul.mubr.f32.gmra.mrb[0].mxu0 %v348
        %v422 = vpop.f32.mrb[0].mxu0
        %v423 = vadd.f32 0.0, %v422
        %v424 = vpop.f32.mrb[0].mxu0
        %v425 = vadd.f32 0.0, %v424
        %426 = vdwg.mxu0
        %427 = vmatprep.subr.mxu0 %v339
        %428 = vmatpush1.msra.mxu0 %v338
        %429 = vmatprep.subr.mxu0 0.0
        %430 = vmatpush1.msra.mxu0 0.0
        %431 = vmatprep.subr.mxu0 0.0
        %432 = vmatpush1.msra.mxu0 0.0
        %433 = vmatprep.subr.mxu0 0.0
        %434 = vmatpush1.msra.mxu0 0.0
        %435 = vmatprep.subr.mxu0 0.0
        %436 = vmatpush1.msra.mxu0 0.0
        %437 = vmatprep.subr.mxu0 0.0
        %438 = vmatpush1.msra.mxu0 0.0
        %439 = vmatprep.subr.mxu0 0.0
        %440 = vmatpush1.msra.mxu0 0.0
        %441 = vmatprep.subr.mxu0 0.0
        %442 = vmatpush1.msra.mxu0 0.0
        %443 = vmatprep.subr.mxu0 0.0
        %444 = vmatpush1.msra.mxu0 0.0
        %445 = vmatprep.subr.mxu0 0.0
        %446 = vmatpush1.msra.mxu0 0.0
        %447 = vmatprep.subr.mxu0 0.0
        %448 = vmatpush1.msra.mxu0 0.0
        %449 = vmatprep.subr.mxu0 0.0
        %450 = vmatpush1.msra.mxu0 0.0
        %451 = vmatprep.subr.mxu0 0.0
        %452 = vmatpush1.msra.mxu0 0.0
        %453 = vmatprep.subr.mxu0 0.0
        %454 = vmatpush1.msra.mxu0 0.0
        %455 = vmatprep.subr.mxu0 0.0
        %456 = vmatpush1.msra.mxu0 0.0
        %457 = vmatprep.subr.mxu0 0.0
        %458 = vmatpush1.msra.mxu0 0.0
        %459 = vmatprep.subr.mxu0 0.0
        %460 = vmatpush1.msra.mxu0 0.0
        %461 = vmatprep.subr.mxu0 0.0
        %462 = vmatpush1.msra.mxu0 0.0
        %463 = vmatprep.subr.mxu0 0.0
        %464 = vmatpush1.msra.mxu0 0.0
        %465 = vmatprep.subr.mxu0 0.0
        %466 = vmatpush1.msra.mxu0 0.0
        %467 = vmatprep.subr.mxu0 0.0
        %468 = vmatpush1.msra.mxu0 0.0
        %469 = vmatprep.subr.mxu0 0.0
        %470 = vmatpush1.msra.mxu0 0.0
        %471 = vmatprep.subr.mxu0 0.0
        %472 = vmatpush1.msra.mxu0 0.0
        %473 = vmatprep.subr.mxu0 0.0
        %474 = vmatpush1.msra.mxu0 0.0
        %475 = vmatprep.subr.mxu0 0.0
        %476 = vmatpush1.msra.mxu0 0.0
        %477 = vmatprep.subr.mxu0 0.0
        %478 = vmatpush1.msra.mxu0 0.0
        %479 = vmatprep.subr.mxu0 0.0
        %480 = vmatpush1.msra.mxu0 0.0
        %481 = vmatprep.subr.mxu0 0.0
        %482 = vmatpush1.msra.mxu0 0.0
        %483 = vmatprep.subr.mxu0 0.0
        %484 = vmatpush1.msra.mxu0 0.0
        %485 = vmatprep.subr.mxu0 0.0
        %486 = vmatpush1.msra.mxu0 0.0
        %487 = vmatprep.subr.mxu0 0.0
        %488 = vmatpush1.msra.mxu0 0.0
        %489 = vmatprep.subr.mxu0 0.0
        %490 = vmatpush1.msra.mxu0 0.0
        %491 = vmatprep.mubr.f32.mxu0 0.0
        %492 = vmatmul.mubr.f32.gmra.mrb[0].mxu0 %v345
        %v493 = vpop.f32.mrb[0].mxu0
        %v494 = vadd.f32 0.0, %v493
        %v495 = vpop.f32.mrb[0].mxu0
        %v496 = vadd.f32 0.0, %v495
        %497 = vmatprep.mubr.f32.mxu0 0.0
        %498 = vmatmul.mubr.f32.gmra.mrb[0].mxu0 %v348
        %v499 = vpop.f32.mrb[0].mxu0
        %v500 = vadd.f32 0.0, %v499
        %v501 = vpop.f32.mrb[0].mxu0
        %v502 = vadd.f32 0.0, %v501
        %503 = vdwg.mxu0
        %v505 = vsel %vm343, %v298, 0
        %v508 = vsel %vm343, %v299, 0
        %510 = vmatprep.subr.mxu0 %v295
        %511 = vmatpush1.msra.mxu0 %v294
        %512 = vmatprep.subr.mxu0 0.0
        %513 = vmatpush1.msra.mxu0 0.0
        %514 = vmatprep.subr.mxu0 0.0
        %515 = vmatpush1.msra.mxu0 0.0
        %516 = vmatprep.subr.mxu0 0.0
        %517 = vmatpush1.msra.mxu0 0.0
        %518 = vmatprep.subr.mxu0 0.0
        %519 = vmatpush1.msra.mxu0 0.0
        %520 = vmatprep.subr.mxu0 0.0
        %521 = vmatpush1.msra.mxu0 0.0
        %522 = vmatprep.subr.mxu0 0.0
        %523 = vmatpush1.msra.mxu0 0.0
        %524 = vmatprep.subr.mxu0 0.0
        %525 = vmatpush1.msra.mxu0 0.0
        %526 = vmatprep.subr.mxu0 0.0
        %527 = vmatpush1.msra.mxu0 0.0
        %528 = vmatprep.subr.mxu0 0.0
        %529 = vmatpush1.msra.mxu0 0.0
        %530 = vmatprep.subr.mxu0 0.0
        %531 = vmatpush1.msra.mxu0 0.0
        %532 = vmatprep.subr.mxu0 0.0
        %533 = vmatpush1.msra.mxu0 0.0
        %534 = vmatprep.subr.mxu0 0.0
        %535 = vmatpush1.msra.mxu0 0.0
        %536 = vmatprep.subr.mxu0 0.0
        %537 = vmatpush1.msra.mxu0 0.0
        %538 = vmatprep.subr.mxu0 0.0
        %539 = vmatpush1.msra.mxu0 0.0
        %540 = vmatprep.subr.mxu0 0.0
        %541 = vmatpush1.msra.mxu0 0.0
        %542 = vmatprep.subr.mxu0 0.0
        %543 = vmatpush1.msra.mxu0 0.0
        %544 = vmatprep.subr.mxu0 0.0
        %545 = vmatpush1.msra.mxu0 0.0
        %546 = vmatprep.subr.mxu0 0.0
        %547 = vmatpush1.msra.mxu0 0.0
        %548 = vmatprep.subr.mxu0 0.0
        %549 = vmatpush1.msra.mxu0 0.0
        %550 = vmatprep.subr.mxu0 0.0
        %551 = vmatpush1.msra.mxu0 0.0
        %552 = vmatprep.subr.mxu0 0.0
        %553 = vmatpush1.msra.mxu0 0.0
        %554 = vmatprep.subr.mxu0 0.0
        %555 = vmatpush1.msra.mxu0 0.0
        %556 = vmatprep.subr.mxu0 0.0
        %557 = vmatpush1.msra.mxu0 0.0
        %558 = vmatprep.subr.mxu0 0.0
        %559 = vmatpush1.msra.mxu0 0.0
        %560 = vmatprep.subr.mxu0 0.0
        %561 = vmatpush1.msra.mxu0 0.0
        %562 = vmatprep.subr.mxu0 0.0
        %563 = vmatpush1.msra.mxu0 0.0
        %564 = vmatprep.subr.mxu0 0.0
        %565 = vmatpush1.msra.mxu0 0.0
        %566 = vmatprep.subr.mxu0 0.0
        %567 = vmatpush1.msra.mxu0 0.0
        %568 = vmatprep.subr.mxu0 0.0
        %569 = vmatpush1.msra.mxu0 0.0
        %570 = vmatprep.subr.mxu0 0.0
        %571 = vmatpush1.msra.mxu0 0.0
        %572 = vmatprep.subr.mxu0 0.0
        %573 = vmatpush1.msra.mxu0 0.0
        %574 = vmatprep.mubr.f32.mxu0 0.0
        %575 = vmatmul.mubr.f32.gmra.mrb[0].mxu0 %v505
        %v576 = vpop.f32.mrb[0].mxu0
        %v577 = vadd.f32 %v417, %v576
        %v578 = vpop.f32.mrb[0].mxu0
        %v579 = vadd.f32 %v419, %v578
        %580 = vmatprep.mubr.f32.mxu0 0.0
        %581 = vmatmul.mubr.f32.gmra.mrb[0].mxu0 %v508
        %v582 = vpop.f32.mrb[0].mxu0
        %v583 = vadd.f32 %v423, %v582
        %v584 = vpop.f32.mrb[0].mxu0
        %v585 = vadd.f32 %v425, %v584
        %586 = vdwg.mxu0
        %587 = vmatprep.subr.mxu0 %v297
        %588 = vmatpush1.msra.mxu0 %v296
        %589 = vmatprep.subr.mxu0 0.0
        %590 = vmatpush1.msra.mxu0 0.0
        %591 = vmatprep.subr.mxu0 0.0
        %592 = vmatpush1.msra.mxu0 0.0
        %593 = vmatprep.subr.mxu0 0.0
        %594 = vmatpush1.msra.mxu0 0.0
        %595 = vmatprep.subr.mxu0 0.0
        %596 = vmatpush1.msra.mxu0 0.0
        %597 = vmatprep.subr.mxu0 0.0
        %598 = vmatpush1.msra.mxu0 0.0
        %599 = vmatprep.subr.mxu0 0.0
        %600 = vmatpush1.msra.mxu0 0.0
        %601 = vmatprep.subr.mxu0 0.0
        %602 = vmatpush1.msra.mxu0 0.0
        %603 = vmatprep.subr.mxu0 0.0
        %604 = vmatpush1.msra.mxu0 0.0
        %605 = vmatprep.subr.mxu0 0.0
        %606 = vmatpush1.msra.mxu0 0.0
        %607 = vmatprep.subr.mxu0 0.0
        %608 = vmatpush1.msra.mxu0 0.0
        %609 = vmatprep.subr.mxu0 0.0
        %610 = vmatpush1.msra.mxu0 0.0
        %611 = vmatprep.subr.mxu0 0.0
        %612 = vmatpush1.msra.mxu0 0.0
        %613 = vmatprep.subr.mxu0 0.0
        %614 = vmatpush1.msra.mxu0 0.0
        %615 = vmatprep.subr.mxu0 0.0
        %616 = vmatpush1.msra.mxu0 0.0
        %617 = vmatprep.subr.mxu0 0.0
        %618 = vmatpush1.msra.mxu0 0.0
        %619 = vmatprep.subr.mxu0 0.0
        %620 = vmatpush1.msra.mxu0 0.0
        %621 = vmatprep.subr.mxu0 0.0
        %622 = vmatpush1.msra.mxu0 0.0
        %623 = vmatprep.subr.mxu0 0.0
        %624 = vmatpush1.msra.mxu0 0.0
        %625 = vmatprep.subr.mxu0 0.0
        %626 = vmatpush1.msra.mxu0 0.0
        %627 = vmatprep.subr.mxu0 0.0
        %628 = vmatpush1.msra.mxu0 0.0
        %629 = vmatprep.subr.mxu0 0.0
        %630 = vmatpush1.msra.mxu0 0.0
        %631 = vmatprep.subr.mxu0 0.0
        %632 = vmatpush1.msra.mxu0 0.0
        %633 = vmatprep.subr.mxu0 0.0
        %634 = vmatpush1.msra.mxu0 0.0
        %635 = vmatprep.subr.mxu0 0.0
        %636 = vmatpush1.msra.mxu0 0.0
        %637 = vmatprep.subr.mxu0 0.0
        %638 = vmatpush1.msra.mxu0 0.0
        %639 = vmatprep.subr.mxu0 0.0
        %640 = vmatpush1.msra.mxu0 0.0
        %641 = vmatprep.subr.mxu0 0.0
        %642 = vmatpush1.msra.mxu0 0.0
        %643 = vmatprep.subr.mxu0 0.0
        %644 = vmatpush1.msra.mxu0 0.0
        %645 = vmatprep.subr.mxu0 0.0
        %646 = vmatpush1.msra.mxu0 0.0
        %647 = vmatprep.subr.mxu0 0.0
        %648 = vmatpush1.msra.mxu0 0.0
        %649 = vmatprep.subr.mxu0 0.0
        %650 = vmatpush1.msra.mxu0 0.0
        %651 = vmatprep.mubr.f32.mxu0 0.0
        %652 = vmatmul.mubr.f32.gmra.mrb[0].mxu0 %v505
        %v653 = vpop.f32.mrb[0].mxu0
        %v654 = vadd.f32 %v494, %v653
        %v655 = vpop.f32.mrb[0].mxu0
        %v656 = vadd.f32 %v496, %v655
        %657 = vmatprep.mubr.f32.mxu0 0.0
        %658 = vmatmul.mubr.f32.gmra.mrb[0].mxu0 %v508
        %v659 = vpop.f32.mrb[0].mxu0
        %v660 = vadd.f32 %v500, %v659
        %v661 = vpop.f32.mrb[0].mxu0
        %v662 = vadd.f32 %v502, %v661
        %663 = vdwg.mxu0
        %s664 = scalar_lea.vmem %s1, 2
        %v665 = vld [vmem:[%s664] ss:$8 sm:$0xf]
        %666 = vrot.lane.b32.xlu0 %v253, 15
        %v667 = vpop.permute.xlu0 %666
        %668 = vrot.lane.b32.xlu0 %v254, 15
        %v669 = vpop.permute.xlu0 %668
        %670 = vrot.lane.b32.xlu0 %v255, 15
        %v671 = vpop.permute.xlu0 %670
        %672 = vrot.lane.b32.xlu0 %v256, 15
        %v673 = vpop.permute.xlu0 %672
        %vm674 = vcmp.lt.s32.totalorder %v267, 15
        %v675 = vsel %vm674, %v671, %v673
        %v676 = vsel %vm674, %v669, %v671
        %v677 = vsel %vm674, %v667, %v669
        %v678 = vsel %vm674, %v673, %v667
        %v680 = vlaneseq
        %v681 = vshrl.u32 %v680, 7
        %v682 = vsub.s32 0, %v681
        %v683 = vrot.slane %v665, %v682
        %v684 = vlaneseq
        %v685 = vshrl.u32 %v684, 7
        %v686 = vsub.s32 1, %v685
        %v687 = vrot.slane %v665, %v686
        %v688 = vlaneseq
        %v689 = vshrl.u32 %v688, 7
        %v690 = vsub.s32 2, %v689
        %v691 = vrot.slane %v665, %v690
        %v692 = vlaneseq
        %v693 = vshrl.u32 %v692, 7
        %v694 = vsub.s32 3, %v693
        %v695 = vrot.slane %v665, %v694
        %v700 = vmul.f32 %v678, %v683
        %v701 = vmul.f32 %v677, %v687
        %v702 = vmul.f32 %v676, %v691
        %v703 = vmul.f32 %v675, %v695
        %s704 = scalar_lea.vmem %s2, 32
        %v705 = vld [vmem:[%s704] sm:$0xff]
        %v706 = vld [vmem:[%s704 + $0x8] sm:$0xff]
        %v708 = vsel %vm343, %v705, 0
        %v711 = vsel %vm343, %v706, 0
        %713 = vmatprep.subr.mxu0 %v701
        %714 = vmatpush1.msra.mxu0 %v700
        %715 = vmatprep.subr.mxu0 0.0
        %716 = vmatpush1.msra.mxu0 0.0
        %717 = vmatprep.subr.mxu0 0.0
        %718 = vmatpush1.msra.mxu0 0.0
        %719 = vmatprep.subr.mxu0 0.0
        %720 = vmatpush1.msra.mxu0 0.0
        %721 = vmatprep.subr.mxu0 0.0
        %722 = vmatpush1.msra.mxu0 0.0
        %723 = vmatprep.subr.mxu0 0.0
        %724 = vmatpush1.msra.mxu0 0.0
        %725 = vmatprep.subr.mxu0 0.0
        %726 = vmatpush1.msra.mxu0 0.0
        %727 = vmatprep.subr.mxu0 0.0
        %728 = vmatpush1.msra.mxu0 0.0
        %729 = vmatprep.subr.mxu0 0.0
        %730 = vmatpush1.msra.mxu0 0.0
        %731 = vmatprep.subr.mxu0 0.0
        %732 = vmatpush1.msra.mxu0 0.0
        %733 = vmatprep.subr.mxu0 0.0
        %734 = vmatpush1.msra.mxu0 0.0
        %735 = vmatprep.subr.mxu0 0.0
        %736 = vmatpush1.msra.mxu0 0.0
        %737 = vmatprep.subr.mxu0 0.0
        %738 = vmatpush1.msra.mxu0 0.0
        %739 = vmatprep.subr.mxu0 0.0
        %740 = vmatpush1.msra.mxu0 0.0
        %741 = vmatprep.subr.mxu0 0.0
        %742 = vmatpush1.msra.mxu0 0.0
        %743 = vmatprep.subr.mxu0 0.0
        %744 = vmatpush1.msra.mxu0 0.0
        %745 = vmatprep.subr.mxu0 0.0
        %746 = vmatpush1.msra.mxu0 0.0
        %747 = vmatprep.subr.mxu0 0.0
        %748 = vmatpush1.msra.mxu0 0.0
        %749 = vmatprep.subr.mxu0 0.0
        %750 = vmatpush1.msra.mxu0 0.0
        %751 = vmatprep.subr.mxu0 0.0
        %752 = vmatpush1.msra.mxu0 0.0
        %753 = vmatprep.subr.mxu0 0.0
        %754 = vmatpush1.msra.mxu0 0.0
        %755 = vmatprep.subr.mxu0 0.0
        %756 = vmatpush1.msra.mxu0 0.0
        %757 = vmatprep.subr.mxu0 0.0
        %758 = vmatpush1.msra.mxu0 0.0
        %759 = vmatprep.subr.mxu0 0.0
        %760 = vmatpush1.msra.mxu0 0.0
        %761 = vmatprep.subr.mxu0 0.0
        %762 = vmatpush1.msra.mxu0 0.0
        %763 = vmatprep.subr.mxu0 0.0
        %764 = vmatpush1.msra.mxu0 0.0
        %765 = vmatprep.subr.mxu0 0.0
        %766 = vmatpush1.msra.mxu0 0.0
        %767 = vmatprep.subr.mxu0 0.0
        %768 = vmatpush1.msra.mxu0 0.0
        %769 = vmatprep.subr.mxu0 0.0
        %770 = vmatpush1.msra.mxu0 0.0
        %771 = vmatprep.subr.mxu0 0.0
        %772 = vmatpush1.msra.mxu0 0.0
        %773 = vmatprep.subr.mxu0 0.0
        %774 = vmatpush1.msra.mxu0 0.0
        %775 = vmatprep.subr.mxu0 0.0
        %776 = vmatpush1.msra.mxu0 0.0
        %777 = vmatprep.mubr.f32.mxu0 0.0
        %778 = vmatmul.mubr.f32.gmra.mrb[0].mxu0 %v708
        %v779 = vpop.f32.mrb[0].mxu0
        %v780 = vadd.f32 0.0, %v779
        %v781 = vpop.f32.mrb[0].mxu0
        %v782 = vadd.f32 0.0, %v781
        %783 = vmatprep.mubr.f32.mxu0 0.0
        %784 = vmatmul.mubr.f32.gmra.mrb[0].mxu0 %v711
        %v785 = vpop.f32.mrb[0].mxu0
        %v786 = vadd.f32 0.0, %v785
        %v787 = vpop.f32.mrb[0].mxu0
        %v788 = vadd.f32 0.0, %v787
        %789 = vdwg.mxu0
        %790 = vmatprep.subr.mxu0 %v703
        %791 = vmatpush1.msra.mxu0 %v702
        %792 = vmatprep.subr.mxu0 0.0
        %793 = vmatpush1.msra.mxu0 0.0
        %794 = vmatprep.subr.mxu0 0.0
        %795 = vmatpush1.msra.mxu0 0.0
        %796 = vmatprep.subr.mxu0 0.0
        %797 = vmatpush1.msra.mxu0 0.0
        %798 = vmatprep.subr.mxu0 0.0
        %799 = vmatpush1.msra.mxu0 0.0
        %800 = vmatprep.subr.mxu0 0.0
        %801 = vmatpush1.msra.mxu0 0.0
        %802 = vmatprep.subr.mxu0 0.0
        %803 = vmatpush1.msra.mxu0 0.0
        %804 = vmatprep.subr.mxu0 0.0
        %805 = vmatpush1.msra.mxu0 0.0
        %806 = vmatprep.subr.mxu0 0.0
        %807 = vmatpush1.msra.mxu0 0.0
        %808 = vmatprep.subr.mxu0 0.0
        %809 = vmatpush1.msra.mxu0 0.0
        %810 = vmatprep.subr.mxu0 0.0
        %811 = vmatpush1.msra.mxu0 0.0
        %812 = vmatprep.subr.mxu0 0.0
        %813 = vmatpush1.msra.mxu0 0.0
        %814 = vmatprep.subr.mxu0 0.0
        %815 = vmatpush1.msra.mxu0 0.0
        %816 = vmatprep.subr.mxu0 0.0
        %817 = vmatpush1.msra.mxu0 0.0
        %818 = vmatprep.subr.mxu0 0.0
        %819 = vmatpush1.msra.mxu0 0.0
        %820 = vmatprep.subr.mxu0 0.0
        %821 = vmatpush1.msra.mxu0 0.0
        %822 = vmatprep.subr.mxu0 0.0
        %823 = vmatpush1.msra.mxu0 0.0
        %824 = vmatprep.subr.mxu0 0.0
        %825 = vmatpush1.msra.mxu0 0.0
        %826 = vmatprep.subr.mxu0 0.0
        %827 = vmatpush1.msra.mxu0 0.0
        %828 = vmatprep.subr.mxu0 0.0
        %829 = vmatpush1.msra.mxu0 0.0
        %830 = vmatprep.subr.mxu0 0.0
        %831 = vmatpush1.msra.mxu0 0.0
        %832 = vmatprep.subr.mxu0 0.0
        %833 = vmatpush1.msra.mxu0 0.0
        %834 = vmatprep.subr.mxu0 0.0
        %835 = vmatpush1.msra.mxu0 0.0
        %836 = vmatprep.subr.mxu0 0.0
        %837 = vmatpush1.msra.mxu0 0.0
        %838 = vmatprep.subr.mxu0 0.0
        %839 = vmatpush1.msra.mxu0 0.0
        %840 = vmatprep.subr.mxu0 0.0
        %841 = vmatpush1.msra.mxu0 0.0
        %842 = vmatprep.subr.mxu0 0.0
        %843 = vmatpush1.msra.mxu0 0.0
        %844 = vmatprep.subr.mxu0 0.0
        %845 = vmatpush1.msra.mxu0 0.0
        %846 = vmatprep.subr.mxu0 0.0
        %847 = vmatpush1.msra.mxu0 0.0
        %848 = vmatprep.subr.mxu0 0.0
        %849 = vmatpush1.msra.mxu0 0.0
        %850 = vmatprep.subr.mxu0 0.0
        %851 = vmatpush1.msra.mxu0 0.0
        %852 = vmatprep.subr.mxu0 0.0
        %853 = vmatpush1.msra.mxu0 0.0
        %854 = vmatprep.mubr.f32.mxu0 0.0
        %855 = vmatmul.mubr.f32.gmra.mrb[0].mxu0 %v708
        %v856 = vpop.f32.mrb[0].mxu0
        %v857 = vadd.f32 0.0, %v856
        %v858 = vpop.f32.mrb[0].mxu0
        %v859 = vadd.f32 0.0, %v858
        %860 = vmatprep.mubr.f32.mxu0 0.0
        %861 = vmatmul.mubr.f32.gmra.mrb[0].mxu0 %v711
        %v862 = vpop.f32.mrb[0].mxu0
        %v863 = vadd.f32 0.0, %v862
        %v864 = vpop.f32.mrb[0].mxu0
        %v865 = vadd.f32 0.0, %v864
        %866 = vdwg.mxu0
        %v867 = vadd.f32 %v577, %v780
        %v868 = vadd.f32 %v579, %v782
        %v869 = vadd.f32 %v654, %v857
        %v870 = vadd.f32 %v656, %v859
        %v871 = vadd.f32 %v583, %v786
        %v872 = vadd.f32 %v585, %v788
        %v873 = vadd.f32 %v660, %v863
        %v874 = vadd.f32 %v662, %v865
        %s875 = scalar_lea.vmem %s1, 3
        %v876 = vld [vmem:[%s875] ss:$8 sm:$0xf]
        %877 = vrot.lane.b32.xlu0 %v253, 1
        %v878 = vpop.permute.xlu0 %877
        %879 = vrot.lane.b32.xlu0 %v254, 1
        %v880 = vpop.permute.xlu0 %879
        %881 = vrot.lane.b32.xlu0 %v255, 1
        %v882 = vpop.permute.xlu0 %881
        %883 = vrot.lane.b32.xlu0 %v256, 1
        %v884 = vpop.permute.xlu0 %883
        %vm885 = vcmp.lt.s32.totalorder %v267, 1
        %v886 = vsel %vm885, %v882, %v884
        %v887 = vsel %vm885, %v880, %v882
        %v888 = vsel %vm885, %v878, %v880
        %v889 = vsel %vm885, %v884, %v878
        %v891 = vlaneseq
        %v892 = vshrl.u32 %v891, 7
        %v893 = vsub.s32 0, %v892
        %v894 = vrot.slane %v876, %v893
        %v895 = vlaneseq
        %v896 = vshrl.u32 %v895, 7
        %v897 = vsub.s32 1, %v896
        %v898 = vrot.slane %v876, %v897
        %v899 = vlaneseq
        %v900 = vshrl.u32 %v899, 7
        %v901 = vsub.s32 2, %v900
        %v902 = vrot.slane %v876, %v901
        %v903 = vlaneseq
        %v904 = vshrl.u32 %v903, 7
        %v905 = vsub.s32 3, %v904
        %v906 = vrot.slane %v876, %v905
        %v911 = vmul.f32 %v889, %v894
        %v912 = vmul.f32 %v888, %v898
        %v913 = vmul.f32 %v887, %v902
        %v914 = vmul.f32 %v886, %v906
        %s915 = scalar_lea.vmem %s2, 48
        %v916 = vld [vmem:[%s915] sm:$0xff]
        %v917 = vld [vmem:[%s915 + $0x8] sm:$0xff]
        %v919 = vsel %vm343, %v916, 0
        %v922 = vsel %vm343, %v917, 0
        %924 = vmatprep.subr.mxu0 %v912
        %925 = vmatpush1.msra.mxu0 %v911
        %926 = vmatprep.subr.mxu0 0.0
        %927 = vmatpush1.msra.mxu0 0.0
        %928 = vmatprep.subr.mxu0 0.0
        %929 = vmatpush1.msra.mxu0 0.0
        %930 = vmatprep.subr.mxu0 0.0
        %931 = vmatpush1.msra.mxu0 0.0
        %932 = vmatprep.subr.mxu0 0.0
        %933 = vmatpush1.msra.mxu0 0.0
        %934 = vmatprep.subr.mxu0 0.0
        %935 = vmatpush1.msra.mxu0 0.0
        %936 = vmatprep.subr.mxu0 0.0
        %937 = vmatpush1.msra.mxu0 0.0
        %938 = vmatprep.subr.mxu0 0.0
        %939 = vmatpush1.msra.mxu0 0.0
        %940 = vmatprep.subr.mxu0 0.0
        %941 = vmatpush1.msra.mxu0 0.0
        %942 = vmatprep.subr.mxu0 0.0
        %943 = vmatpush1.msra.mxu0 0.0
        %944 = vmatprep.subr.mxu0 0.0
        %945 = vmatpush1.msra.mxu0 0.0
        %946 = vmatprep.subr.mxu0 0.0
        %947 = vmatpush1.msra.mxu0 0.0
        %948 = vmatprep.subr.mxu0 0.0
        %949 = vmatpush1.msra.mxu0 0.0
        %950 = vmatprep.subr.mxu0 0.0
        %951 = vmatpush1.msra.mxu0 0.0
        %952 = vmatprep.subr.mxu0 0.0
        %953 = vmatpush1.msra.mxu0 0.0
        %954 = vmatprep.subr.mxu0 0.0
        %955 = vmatpush1.msra.mxu0 0.0
        %956 = vmatprep.subr.mxu0 0.0
        %957 = vmatpush1.msra.mxu0 0.0
        %958 = vmatprep.subr.mxu0 0.0
        %959 = vmatpush1.msra.mxu0 0.0
        %960 = vmatprep.subr.mxu0 0.0
        %961 = vmatpush1.msra.mxu0 0.0
        %962 = vmatprep.subr.mxu0 0.0
        %963 = vmatpush1.msra.mxu0 0.0
        %964 = vmatprep.subr.mxu0 0.0
        %965 = vmatpush1.msra.mxu0 0.0
        %966 = vmatprep.subr.mxu0 0.0
        %967 = vmatpush1.msra.mxu0 0.0
        %968 = vmatprep.subr.mxu0 0.0
        %969 = vmatpush1.msra.mxu0 0.0
        %970 = vmatprep.subr.mxu0 0.0
        %971 = vmatpush1.msra.mxu0 0.0
        %972 = vmatprep.subr.mxu0 0.0
        %973 = vmatpush1.msra.mxu0 0.0
        %974 = vmatprep.subr.mxu0 0.0
        %975 = vmatpush1.msra.mxu0 0.0
        %976 = vmatprep.subr.mxu0 0.0
        %977 = vmatpush1.msra.mxu0 0.0
        %978 = vmatprep.subr.mxu0 0.0
        %979 = vmatpush1.msra.mxu0 0.0
        %980 = vmatprep.subr.mxu0 0.0
        %981 = vmatpush1.msra.mxu0 0.0
        %982 = vmatprep.subr.mxu0 0.0
        %983 = vmatpush1.msra.mxu0 0.0
        %984 = vmatprep.subr.mxu0 0.0
        %985 = vmatpush1.msra.mxu0 0.0
        %986 = vmatprep.subr.mxu0 0.0
        %987 = vmatpush1.msra.mxu0 0.0
        %988 = vmatprep.mubr.f32.mxu0 0.0
        %989 = vmatmul.mubr.f32.gmra.mrb[0].mxu0 %v919
        %v990 = vpop.f32.mrb[0].mxu0
        %v991 = vadd.f32 0.0, %v990
        %v992 = vpop.f32.mrb[0].mxu0
        %v993 = vadd.f32 0.0, %v992
        %994 = vmatprep.mubr.f32.mxu0 0.0
        %995 = vmatmul.mubr.f32.gmra.mrb[0].mxu0 %v922
        %v996 = vpop.f32.mrb[0].mxu0
        %v997 = vadd.f32 0.0, %v996
        %v998 = vpop.f32.mrb[0].mxu0
        %v999 = vadd.f32 0.0, %v998
        %1000 = vdwg.mxu0
        %1001 = vmatprep.subr.mxu0 %v914
        %1002 = vmatpush1.msra.mxu0 %v913
        %1003 = vmatprep.subr.mxu0 0.0
        %1004 = vmatpush1.msra.mxu0 0.0
        %1005 = vmatprep.subr.mxu0 0.0
        %1006 = vmatpush1.msra.mxu0 0.0
        %1007 = vmatprep.subr.mxu0 0.0
        %1008 = vmatpush1.msra.mxu0 0.0
        %1009 = vmatprep.subr.mxu0 0.0
        %1010 = vmatpush1.msra.mxu0 0.0
        %1011 = vmatprep.subr.mxu0 0.0
        %1012 = vmatpush1.msra.mxu0 0.0
        %1013 = vmatprep.subr.mxu0 0.0
        %1014 = vmatpush1.msra.mxu0 0.0
        %1015 = vmatprep.subr.mxu0 0.0
        %1016 = vmatpush1.msra.mxu0 0.0
        %1017 = vmatprep.subr.mxu0 0.0
        %1018 = vmatpush1.msra.mxu0 0.0
        %1019 = vmatprep.subr.mxu0 0.0
        %1020 = vmatpush1.msra.mxu0 0.0
        %1021 = vmatprep.subr.mxu0 0.0
        %1022 = vmatpush1.msra.mxu0 0.0
        %1023 = vmatprep.subr.mxu0 0.0
        %1024 = vmatpush1.msra.mxu0 0.0
        %1025 = vmatprep.subr.mxu0 0.0
        %1026 = vmatpush1.msra.mxu0 0.0
        %1027 = vmatprep.subr.mxu0 0.0
        %1028 = vmatpush1.msra.mxu0 0.0
        %1029 = vmatprep.subr.mxu0 0.0
        %1030 = vmatpush1.msra.mxu0 0.0
        %1031 = vmatprep.subr.mxu0 0.0
        %1032 = vmatpush1.msra.mxu0 0.0
        %1033 = vmatprep.subr.mxu0 0.0
        %1034 = vmatpush1.msra.mxu0 0.0
        %1035 = vmatprep.subr.mxu0 0.0
        %1036 = vmatpush1.msra.mxu0 0.0
        %1037 = vmatprep.subr.mxu0 0.0
        %1038 = vmatpush1.msra.mxu0 0.0
        %1039 = vmatprep.subr.mxu0 0.0
        %1040 = vmatpush1.msra.mxu0 0.0
        %1041 = vmatprep.subr.mxu0 0.0
        %1042 = vmatpush1.msra.mxu0 0.0
        %1043 = vmatprep.subr.mxu0 0.0
        %1044 = vmatpush1.msra.mxu0 0.0
        %1045 = vmatprep.subr.mxu0 0.0
        %1046 = vmatpush1.msra.mxu0 0.0
        %1047 = vmatprep.subr.mxu0 0.0
        %1048 = vmatpush1.msra.mxu0 0.0
        %1049 = vmatprep.subr.mxu0 0.0
        %1050 = vmatpush1.msra.mxu0 0.0
        %1051 = vmatprep.subr.mxu0 0.0
        %1052 = vmatpush1.msra.mxu0 0.0
        %1053 = vmatprep.subr.mxu0 0.0
        %1054 = vmatpush1.msra.mxu0 0.0
        %1055 = vmatprep.subr.mxu0 0.0
        %1056 = vmatpush1.msra.mxu0 0.0
        %1057 = vmatprep.subr.mxu0 0.0
        %1058 = vmatpush1.msra.mxu0 0.0
        %1059 = vmatprep.subr.mxu0 0.0
        %1060 = vmatpush1.msra.mxu0 0.0
        %1061 = vmatprep.subr.mxu0 0.0
        %1062 = vmatpush1.msra.mxu0 0.0
        %1063 = vmatprep.subr.mxu0 0.0
        %1064 = vmatpush1.msra.mxu0 0.0
        %1065 = vmatprep.mubr.f32.mxu0 0.0
        %1066 = vmatmul.mubr.f32.gmra.mrb[0].mxu0 %v919
        %v1067 = vpop.f32.mrb[0].mxu0
        %v1068 = vadd.f32 0.0, %v1067
        %v1069 = vpop.f32.mrb[0].mxu0
        %v1070 = vadd.f32 0.0, %v1069
        %1071 = vmatprep.mubr.f32.mxu0 0.0
        %1072 = vmatmul.mubr.f32.gmra.mrb[0].mxu0 %v922
        %v1073 = vpop.f32.mrb[0].mxu0
        %v1074 = vadd.f32 0.0, %v1073
        %v1075 = vpop.f32.mrb[0].mxu0
        %v1076 = vadd.f32 0.0, %v1075
        %1077 = vdwg.mxu0
        %v1078 = vadd.f32 %v867, %v991
        %v1079 = vadd.f32 %v868, %v993
        %v1080 = vadd.f32 %v869, %v1068
        %v1081 = vadd.f32 %v870, %v1070
        %v1082 = vadd.f32 %v871, %v997
        %v1083 = vadd.f32 %v872, %v999
        %v1084 = vadd.f32 %v873, %v1074
        %v1085 = vadd.f32 %v874, %v1076
        %s1086 = scalar_lea.vmem %s1, 4
        %v1087 = vld [vmem:[%s1086] ss:$8 sm:$0xf]
        %v1089 = vlaneseq
        %v1090 = vshrl.u32 %v1089, 7
        %v1091 = vsub.s32 0, %v1090
        %v1092 = vrot.slane %v1087, %v1091
        %v1093 = vlaneseq
        %v1094 = vshrl.u32 %v1093, 7
        %v1095 = vsub.s32 1, %v1094
        %v1096 = vrot.slane %v1087, %v1095
        %v1097 = vlaneseq
        %v1098 = vshrl.u32 %v1097, 7
        %v1099 = vsub.s32 2, %v1098
        %v1100 = vrot.slane %v1087, %v1099
        %v1101 = vlaneseq
        %v1102 = vshrl.u32 %v1101, 7
        %v1103 = vsub.s32 3, %v1102
        %v1104 = vrot.slane %v1087, %v1103
        %v1109 = vmul.f32 %v253, %v1092
        %v1110 = vmul.f32 %v254, %v1096
        %v1111 = vmul.f32 %v255, %v1100
        %v1112 = vmul.f32 %v256, %v1104
        %s1113 = scalar_lea.vmem %s2, 64
        %v1114 = vld [vmem:[%s1113] sm:$0xff]
        %v1115 = vld [vmem:[%s1113 + $0x8] sm:$0xff]
        %v1117 = vsel %vm343, %v1114, 0
        %v1120 = vsel %vm343, %v1115, 0
        %1122 = vmatprep.subr.mxu0 %v1110
        %1123 = vmatpush1.msra.mxu0 %v1109
        %1124 = vmatprep.subr.mxu0 0.0
        %1125 = vmatpush1.msra.mxu0 0.0
        %1126 = vmatprep.subr.mxu0 0.0
        %1127 = vmatpush1.msra.mxu0 0.0
        %1128 = vmatprep.subr.mxu0 0.0
        %1129 = vmatpush1.msra.mxu0 0.0
        %1130 = vmatprep.subr.mxu0 0.0
        %1131 = vmatpush1.msra.mxu0 0.0
        %1132 = vmatprep.subr.mxu0 0.0
        %1133 = vmatpush1.msra.mxu0 0.0
        %1134 = vmatprep.subr.mxu0 0.0
        %1135 = vmatpush1.msra.mxu0 0.0
        %1136 = vmatprep.subr.mxu0 0.0
        %1137 = vmatpush1.msra.mxu0 0.0
        %1138 = vmatprep.subr.mxu0 0.0
        %1139 = vmatpush1.msra.mxu0 0.0
        %1140 = vmatprep.subr.mxu0 0.0
        %1141 = vmatpush1.msra.mxu0 0.0
        %1142 = vmatprep.subr.mxu0 0.0
        %1143 = vmatpush1.msra.mxu0 0.0
        %1144 = vmatprep.subr.mxu0 0.0
        %1145 = vmatpush1.msra.mxu0 0.0
        %1146 = vmatprep.subr.mxu0 0.0
        %1147 = vmatpush1.msra.mxu0 0.0
        %1148 = vmatprep.subr.mxu0 0.0
        %1149 = vmatpush1.msra.mxu0 0.0
        %1150 = vmatprep.subr.mxu0 0.0
        %1151 = vmatpush1.msra.mxu0 0.0
        %1152 = vmatprep.subr.mxu0 0.0
        %1153 = vmatpush1.msra.mxu0 0.0
        %1154 = vmatprep.subr.mxu0 0.0
        %1155 = vmatpush1.msra.mxu0 0.0
        %1156 = vmatprep.subr.mxu0 0.0
        %1157 = vmatpush1.msra.mxu0 0.0
        %1158 = vmatprep.subr.mxu0 0.0
        %1159 = vmatpush1.msra.mxu0 0.0
        %1160 = vmatprep.subr.mxu0 0.0
        %1161 = vmatpush1.msra.mxu0 0.0
        %1162 = vmatprep.subr.mxu0 0.0
        %1163 = vmatpush1.msra.mxu0 0.0
        %1164 = vmatprep.subr.mxu0 0.0
        %1165 = vmatpush1.msra.mxu0 0.0
        %1166 = vmatprep.subr.mxu0 0.0
        %1167 = vmatpush1.msra.mxu0 0.0
        %1168 = vmatprep.subr.mxu0 0.0
        %1169 = vmatpush1.msra.mxu0 0.0
        %1170 = vmatprep.subr.mxu0 0.0
        %1171 = vmatpush1.msra.mxu0 0.0
        %1172 = vmatprep.subr.mxu0 0.0
        %1173 = vmatpush1.msra.mxu0 0.0
        %1174 = vmatprep.subr.mxu0 0.0
        %1175 = vmatpush1.msra.mxu0 0.0
        %1176 = vmatprep.subr.mxu0 0.0
        %1177 = vmatpush1.msra.mxu0 0.0
        %1178 = vmatprep.subr.mxu0 0.0
        %1179 = vmatpush1.msra.mxu0 0.0
        %1180 = vmatprep.subr.mxu0 0.0
        %1181 = vmatpush1.msra.mxu0 0.0
        %1182 = vmatprep.subr.mxu0 0.0
        %1183 = vmatpush1.msra.mxu0 0.0
        %1184 = vmatprep.subr.mxu0 0.0
        %1185 = vmatpush1.msra.mxu0 0.0
        %1186 = vmatprep.mubr.f32.mxu0 0.0
        %1187 = vmatmul.mubr.f32.gmra.mrb[0].mxu0 %v1117
        %v1188 = vpop.f32.mrb[0].mxu0
        %v1189 = vadd.f32 0.0, %v1188
        %v1190 = vpop.f32.mrb[0].mxu0
        %v1191 = vadd.f32 0.0, %v1190
        %1192 = vmatprep.mubr.f32.mxu0 0.0
        %1193 = vmatmul.mubr.f32.gmra.mrb[0].mxu0 %v1120
        %v1194 = vpop.f32.mrb[0].mxu0
        %v1195 = vadd.f32 0.0, %v1194
        %v1196 = vpop.f32.mrb[0].mxu0
        %v1197 = vadd.f32 0.0, %v1196
        %1198 = vdwg.mxu0
        %1199 = vmatprep.subr.mxu0 %v1112
        %1200 = vmatpush1.msra.mxu0 %v1111
        %1201 = vmatprep.subr.mxu0 0.0
        %1202 = vmatpush1.msra.mxu0 0.0
        %1203 = vmatprep.subr.mxu0 0.0
        %1204 = vmatpush1.msra.mxu0 0.0
        %1205 = vmatprep.subr.mxu0 0.0
        %1206 = vmatpush1.msra.mxu0 0.0
        %1207 = vmatprep.subr.mxu0 0.0
        %1208 = vmatpush1.msra.mxu0 0.0
        %1209 = vmatprep.subr.mxu0 0.0
        %1210 = vmatpush1.msra.mxu0 0.0
        %1211 = vmatprep.subr.mxu0 0.0
        %1212 = vmatpush1.msra.mxu0 0.0
        %1213 = vmatprep.subr.mxu0 0.0
        %1214 = vmatpush1.msra.mxu0 0.0
        %1215 = vmatprep.subr.mxu0 0.0
        %1216 = vmatpush1.msra.mxu0 0.0
        %1217 = vmatprep.subr.mxu0 0.0
        %1218 = vmatpush1.msra.mxu0 0.0
        %1219 = vmatprep.subr.mxu0 0.0
        %1220 = vmatpush1.msra.mxu0 0.0
        %1221 = vmatprep.subr.mxu0 0.0
        %1222 = vmatpush1.msra.mxu0 0.0
        %1223 = vmatprep.subr.mxu0 0.0
        %1224 = vmatpush1.msra.mxu0 0.0
        %1225 = vmatprep.subr.mxu0 0.0
        %1226 = vmatpush1.msra.mxu0 0.0
        %1227 = vmatprep.subr.mxu0 0.0
        %1228 = vmatpush1.msra.mxu0 0.0
        %1229 = vmatprep.subr.mxu0 0.0
        %1230 = vmatpush1.msra.mxu0 0.0
        %1231 = vmatprep.subr.mxu0 0.0
        %1232 = vmatpush1.msra.mxu0 0.0
        %1233 = vmatprep.subr.mxu0 0.0
        %1234 = vmatpush1.msra.mxu0 0.0
        %1235 = vmatprep.subr.mxu0 0.0
        %1236 = vmatpush1.msra.mxu0 0.0
        %1237 = vmatprep.subr.mxu0 0.0
        %1238 = vmatpush1.msra.mxu0 0.0
        %1239 = vmatprep.subr.mxu0 0.0
        %1240 = vmatpush1.msra.mxu0 0.0
        %1241 = vmatprep.subr.mxu0 0.0
        %1242 = vmatpush1.msra.mxu0 0.0
        %1243 = vmatprep.subr.mxu0 0.0
        %1244 = vmatpush1.msra.mxu0 0.0
        %1245 = vmatprep.subr.mxu0 0.0
        %1246 = vmatpush1.msra.mxu0 0.0
        %1247 = vmatprep.subr.mxu0 0.0
        %1248 = vmatpush1.msra.mxu0 0.0
        %1249 = vmatprep.subr.mxu0 0.0
        %1250 = vmatpush1.msra.mxu0 0.0
        %1251 = vmatprep.subr.mxu0 0.0
        %1252 = vmatpush1.msra.mxu0 0.0
        %1253 = vmatprep.subr.mxu0 0.0
        %1254 = vmatpush1.msra.mxu0 0.0
        %1255 = vmatprep.subr.mxu0 0.0
        %1256 = vmatpush1.msra.mxu0 0.0
        %1257 = vmatprep.subr.mxu0 0.0
        %1258 = vmatpush1.msra.mxu0 0.0
        %1259 = vmatprep.subr.mxu0 0.0
        %1260 = vmatpush1.msra.mxu0 0.0
        %1261 = vmatprep.subr.mxu0 0.0
        %1262 = vmatpush1.msra.mxu0 0.0
        %1263 = vmatprep.mubr.f32.mxu0 0.0
        %1264 = vmatmul.mubr.f32.gmra.mrb[0].mxu0 %v1117
        %v1265 = vpop.f32.mrb[0].mxu0
        %v1266 = vadd.f32 0.0, %v1265
        %v1267 = vpop.f32.mrb[0].mxu0
        %v1268 = vadd.f32 0.0, %v1267
        %1269 = vmatprep.mubr.f32.mxu0 0.0
        %1270 = vmatmul.mubr.f32.gmra.mrb[0].mxu0 %v1120
        %v1271 = vpop.f32.mrb[0].mxu0
        %v1272 = vadd.f32 0.0, %v1271
        %v1273 = vpop.f32.mrb[0].mxu0
        %v1274 = vadd.f32 0.0, %v1273
        %1275 = vdwg.mxu0
        %v1276 = vadd.f32 %v1078, %v1189
        %v1277 = vadd.f32 %v1079, %v1191
        %v1278 = vadd.f32 %v1080, %v1266
        %v1279 = vadd.f32 %v1081, %v1268
        %v1280 = vadd.f32 %v1082, %v1195
        %v1281 = vadd.f32 %v1083, %v1197
        %v1282 = vadd.f32 %v1084, %v1272
        %v1283 = vadd.f32 %v1085, %v1274
        %s1284 = scalar_lea.vmem %s1, 5
        %v1285 = vld [vmem:[%s1284] ss:$8 sm:$0xf]
        %1286 = vrot.lane.b32.xlu0 %v253, 127
        %v1287 = vpop.permute.xlu0 %1286
        %1288 = vrot.lane.b32.xlu0 %v254, 127
        %v1289 = vpop.permute.xlu0 %1288
        %1290 = vrot.lane.b32.xlu0 %v255, 127
        %v1291 = vpop.permute.xlu0 %1290
        %1292 = vrot.lane.b32.xlu0 %v256, 127
        %v1293 = vpop.permute.xlu0 %1292
        %vm1294 = vcmp.lt.s32.totalorder %v267, 127
        %v1295 = vsel %vm1294, %v1291, %v1293
        %v1296 = vsel %vm1294, %v1289, %v1291
        %v1297 = vsel %vm1294, %v1287, %v1289
        %v1298 = vsel %vm1294, %v1293, %v1287
        %v1300 = vlaneseq
        %v1301 = vshrl.u32 %v1300, 7
        %v1302 = vsub.s32 0, %v1301
        %v1303 = vrot.slane %v1285, %v1302
        %v1304 = vlaneseq
        %v1305 = vshrl.u32 %v1304, 7
        %v1306 = vsub.s32 1, %v1305
        %v1307 = vrot.slane %v1285, %v1306
        %v1308 = vlaneseq
        %v1309 = vshrl.u32 %v1308, 7
        %v1310 = vsub.s32 2, %v1309
        %v1311 = vrot.slane %v1285, %v1310
        %v1312 = vlaneseq
        %v1313 = vshrl.u32 %v1312, 7
        %v1314 = vsub.s32 3, %v1313
        %v1315 = vrot.slane %v1285, %v1314
        %v1320 = vmul.f32 %v1297, %v1303
        %v1321 = vmul.f32 %v1296, %v1307
        %v1322 = vmul.f32 %v1295, %v1311
        %v1323 = vmul.f32 %v1298, %v1315
        %s1324 = scalar_lea.vmem %s2, 80
        %v1325 = vld [vmem:[%s1324] sm:$0xff]
        %v1326 = vld [vmem:[%s1324 + $0x8] sm:$0xff]
        %v1328 = vsel %vm343, %v1325, 0
        %v1331 = vsel %vm343, %v1326, 0
        %1333 = vmatprep.subr.mxu0 %v1321
        %1334 = vmatpush1.msra.mxu0 %v1320
        %1335 = vmatprep.subr.mxu0 0.0
        %1336 = vmatpush1.msra.mxu0 0.0
        %1337 = vmatprep.subr.mxu0 0.0
        %1338 = vmatpush1.msra.mxu0 0.0
        %1339 = vmatprep.subr.mxu0 0.0
        %1340 = vmatpush1.msra.mxu0 0.0
        %1341 = vmatprep.subr.mxu0 0.0
        %1342 = vmatpush1.msra.mxu0 0.0
        %1343 = vmatprep.subr.mxu0 0.0
        %1344 = vmatpush1.msra.mxu0 0.0
        %1345 = vmatprep.subr.mxu0 0.0
        %1346 = vmatpush1.msra.mxu0 0.0
        %1347 = vmatprep.subr.mxu0 0.0
        %1348 = vmatpush1.msra.mxu0 0.0
        %1349 = vmatprep.subr.mxu0 0.0
        %1350 = vmatpush1.msra.mxu0 0.0
        %1351 = vmatprep.subr.mxu0 0.0
        %1352 = vmatpush1.msra.mxu0 0.0
        %1353 = vmatprep.subr.mxu0 0.0
        %1354 = vmatpush1.msra.mxu0 0.0
        %1355 = vmatprep.subr.mxu0 0.0
        %1356 = vmatpush1.msra.mxu0 0.0
        %1357 = vmatprep.subr.mxu0 0.0
        %1358 = vmatpush1.msra.mxu0 0.0
        %1359 = vmatprep.subr.mxu0 0.0
        %1360 = vmatpush1.msra.mxu0 0.0
        %1361 = vmatprep.subr.mxu0 0.0
        %1362 = vmatpush1.msra.mxu0 0.0
        %1363 = vmatprep.subr.mxu0 0.0
        %1364 = vmatpush1.msra.mxu0 0.0
        %1365 = vmatprep.subr.mxu0 0.0
        %1366 = vmatpush1.msra.mxu0 0.0
        %1367 = vmatprep.subr.mxu0 0.0
        %1368 = vmatpush1.msra.mxu0 0.0
        %1369 = vmatprep.subr.mxu0 0.0
        %1370 = vmatpush1.msra.mxu0 0.0
        %1371 = vmatprep.subr.mxu0 0.0
        %1372 = vmatpush1.msra.mxu0 0.0
        %1373 = vmatprep.subr.mxu0 0.0
        %1374 = vmatpush1.msra.mxu0 0.0
        %1375 = vmatprep.subr.mxu0 0.0
        %1376 = vmatpush1.msra.mxu0 0.0
        %1377 = vmatprep.subr.mxu0 0.0
        %1378 = vmatpush1.msra.mxu0 0.0
        %1379 = vmatprep.subr.mxu0 0.0
        %1380 = vmatpush1.msra.mxu0 0.0
        %1381 = vmatprep.subr.mxu0 0.0
        %1382 = vmatpush1.msra.mxu0 0.0
        %1383 = vmatprep.subr.mxu0 0.0
        %1384 = vmatpush1.msra.mxu0 0.0
        %1385 = vmatprep.subr.mxu0 0.0
        %1386 = vmatpush1.msra.mxu0 0.0
        %1387 = vmatprep.subr.mxu0 0.0
        %1388 = vmatpush1.msra.mxu0 0.0
        %1389 = vmatprep.subr.mxu0 0.0
        %1390 = vmatpush1.msra.mxu0 0.0
        %1391 = vmatprep.subr.mxu0 0.0
        %1392 = vmatpush1.msra.mxu0 0.0
        %1393 = vmatprep.subr.mxu0 0.0
        %1394 = vmatpush1.msra.mxu0 0.0
        %1395 = vmatprep.subr.mxu0 0.0
        %1396 = vmatpush1.msra.mxu0 0.0
        %1397 = vmatprep.mubr.f32.mxu0 0.0
        %1398 = vmatmul.mubr.f32.gmra.mrb[0].mxu0 %v1328
        %v1399 = vpop.f32.mrb[0].mxu0
        %v1400 = vadd.f32 0.0, %v1399
        %v1401 = vpop.f32.mrb[0].mxu0
        %v1402 = vadd.f32 0.0, %v1401
        %1403 = vmatprep.mubr.f32.mxu0 0.0
        %1404 = vmatmul.mubr.f32.gmra.mrb[0].mxu0 %v1331
        %v1405 = vpop.f32.mrb[0].mxu0
        %v1406 = vadd.f32 0.0, %v1405
        %v1407 = vpop.f32.mrb[0].mxu0
        %v1408 = vadd.f32 0.0, %v1407
        %1409 = vdwg.mxu0
        %1410 = vmatprep.subr.mxu0 %v1323
        %1411 = vmatpush1.msra.mxu0 %v1322
        %1412 = vmatprep.subr.mxu0 0.0
        %1413 = vmatpush1.msra.mxu0 0.0
        %1414 = vmatprep.subr.mxu0 0.0
        %1415 = vmatpush1.msra.mxu0 0.0
        %1416 = vmatprep.subr.mxu0 0.0
        %1417 = vmatpush1.msra.mxu0 0.0
        %1418 = vmatprep.subr.mxu0 0.0
        %1419 = vmatpush1.msra.mxu0 0.0
        %1420 = vmatprep.subr.mxu0 0.0
        %1421 = vmatpush1.msra.mxu0 0.0
        %1422 = vmatprep.subr.mxu0 0.0
        %1423 = vmatpush1.msra.mxu0 0.0
        %1424 = vmatprep.subr.mxu0 0.0
        %1425 = vmatpush1.msra.mxu0 0.0
        %1426 = vmatprep.subr.mxu0 0.0
        %1427 = vmatpush1.msra.mxu0 0.0
        %1428 = vmatprep.subr.mxu0 0.0
        %1429 = vmatpush1.msra.mxu0 0.0
        %1430 = vmatprep.subr.mxu0 0.0
        %1431 = vmatpush1.msra.mxu0 0.0
        %1432 = vmatprep.subr.mxu0 0.0
        %1433 = vmatpush1.msra.mxu0 0.0
        %1434 = vmatprep.subr.mxu0 0.0
        %1435 = vmatpush1.msra.mxu0 0.0
        %1436 = vmatprep.subr.mxu0 0.0
        %1437 = vmatpush1.msra.mxu0 0.0
        %1438 = vmatprep.subr.mxu0 0.0
        %1439 = vmatpush1.msra.mxu0 0.0
        %1440 = vmatprep.subr.mxu0 0.0
        %1441 = vmatpush1.msra.mxu0 0.0
        %1442 = vmatprep.subr.mxu0 0.0
        %1443 = vmatpush1.msra.mxu0 0.0
        %1444 = vmatprep.subr.mxu0 0.0
        %1445 = vmatpush1.msra.mxu0 0.0
        %1446 = vmatprep.subr.mxu0 0.0
        %1447 = vmatpush1.msra.mxu0 0.0
        %1448 = vmatprep.subr.mxu0 0.0
        %1449 = vmatpush1.msra.mxu0 0.0
        %1450 = vmatprep.subr.mxu0 0.0
        %1451 = vmatpush1.msra.mxu0 0.0
        %1452 = vmatprep.subr.mxu0 0.0
        %1453 = vmatpush1.msra.mxu0 0.0
        %1454 = vmatprep.subr.mxu0 0.0
        %1455 = vmatpush1.msra.mxu0 0.0
        %1456 = vmatprep.subr.mxu0 0.0
        %1457 = vmatpush1.msra.mxu0 0.0
        %1458 = vmatprep.subr.mxu0 0.0
        %1459 = vmatpush1.msra.mxu0 0.0
        %1460 = vmatprep.subr.mxu0 0.0
        %1461 = vmatpush1.msra.mxu0 0.0
        %1462 = vmatprep.subr.mxu0 0.0
        %1463 = vmatpush1.msra.mxu0 0.0
        %1464 = vmatprep.subr.mxu0 0.0
        %1465 = vmatpush1.msra.mxu0 0.0
        %1466 = vmatprep.subr.mxu0 0.0
        %1467 = vmatpush1.msra.mxu0 0.0
        %1468 = vmatprep.subr.mxu0 0.0
        %1469 = vmatpush1.msra.mxu0 0.0
        %1470 = vmatprep.subr.mxu0 0.0
        %1471 = vmatpush1.msra.mxu0 0.0
        %1472 = vmatprep.subr.mxu0 0.0
        %1473 = vmatpush1.msra.mxu0 0.0
        %1474 = vmatprep.mubr.f32.mxu0 0.0
        %1475 = vmatmul.mubr.f32.gmra.mrb[0].mxu0 %v1328
        %v1476 = vpop.f32.mrb[0].mxu0
        %v1477 = vadd.f32 0.0, %v1476
        %v1478 = vpop.f32.mrb[0].mxu0
        %v1479 = vadd.f32 0.0, %v1478
        %1480 = vmatprep.mubr.f32.mxu0 0.0
        %1481 = vmatmul.mubr.f32.gmra.mrb[0].mxu0 %v1331
        %v1482 = vpop.f32.mrb[0].mxu0
        %v1483 = vadd.f32 0.0, %v1482
        %v1484 = vpop.f32.mrb[0].mxu0
        %v1485 = vadd.f32 0.0, %v1484
        %1486 = vdwg.mxu0
        %v1487 = vadd.f32 %v1276, %v1400
        %v1488 = vadd.f32 %v1277, %v1402
        %v1489 = vadd.f32 %v1278, %v1477
        %v1490 = vadd.f32 %v1279, %v1479
        %v1491 = vadd.f32 %v1280, %v1406
        %v1492 = vadd.f32 %v1281, %v1408
        %v1493 = vadd.f32 %v1282, %v1483
        %v1494 = vadd.f32 %v1283, %v1485
        %s1495 = scalar_lea.vmem %s1, 6
        %v1496 = vld [vmem:[%s1495] ss:$8 sm:$0xf]
        %1497 = vrot.lane.b32.xlu0 %v253, 113
        %v1498 = vpop.permute.xlu0 %1497
        %1499 = vrot.lane.b32.xlu0 %v254, 113
        %v1500 = vpop.permute.xlu0 %1499
        %1501 = vrot.lane.b32.xlu0 %v255, 113
        %v1502 = vpop.permute.xlu0 %1501
        %1503 = vrot.lane.b32.xlu0 %v256, 113
        %v1504 = vpop.permute.xlu0 %1503
        %vm1505 = vcmp.lt.s32.totalorder %v267, 113
        %v1506 = vsel %vm1505, %v1502, %v1504
        %v1507 = vsel %vm1505, %v1500, %v1502
        %v1508 = vsel %vm1505, %v1498, %v1500
        %v1509 = vsel %vm1505, %v1504, %v1498
        %v1511 = vlaneseq
        %v1512 = vshrl.u32 %v1511, 7
        %v1513 = vsub.s32 0, %v1512
        %v1514 = vrot.slane %v1496, %v1513
        %v1515 = vlaneseq
        %v1516 = vshrl.u32 %v1515, 7
        %v1517 = vsub.s32 1, %v1516
        %v1518 = vrot.slane %v1496, %v1517
        %v1519 = vlaneseq
        %v1520 = vshrl.u32 %v1519, 7
        %v1521 = vsub.s32 2, %v1520
        %v1522 = vrot.slane %v1496, %v1521
        %v1523 = vlaneseq
        %v1524 = vshrl.u32 %v1523, 7
        %v1525 = vsub.s32 3, %v1524
        %v1526 = vrot.slane %v1496, %v1525
        %v1531 = vmul.f32 %v1508, %v1514
        %v1532 = vmul.f32 %v1507, %v1518
        %v1533 = vmul.f32 %v1506, %v1522
        %v1534 = vmul.f32 %v1509, %v1526
        %s1535 = scalar_lea.vmem %s2, 96
        %v1536 = vld [vmem:[%s1535] sm:$0xff]
        %v1537 = vld [vmem:[%s1535 + $0x8] sm:$0xff]
        %v1539 = vsel %vm343, %v1536, 0
        %v1542 = vsel %vm343, %v1537, 0
        %1544 = vmatprep.subr.mxu0 %v1532
        %1545 = vmatpush1.msra.mxu0 %v1531
        %1546 = vmatprep.subr.mxu0 0.0
        %1547 = vmatpush1.msra.mxu0 0.0
        %1548 = vmatprep.subr.mxu0 0.0
        %1549 = vmatpush1.msra.mxu0 0.0
        %1550 = vmatprep.subr.mxu0 0.0
        %1551 = vmatpush1.msra.mxu0 0.0
        %1552 = vmatprep.subr.mxu0 0.0
        %1553 = vmatpush1.msra.mxu0 0.0
        %1554 = vmatprep.subr.mxu0 0.0
        %1555 = vmatpush1.msra.mxu0 0.0
        %1556 = vmatprep.subr.mxu0 0.0
        %1557 = vmatpush1.msra.mxu0 0.0
        %1558 = vmatprep.subr.mxu0 0.0
        %1559 = vmatpush1.msra.mxu0 0.0
        %1560 = vmatprep.subr.mxu0 0.0
        %1561 = vmatpush1.msra.mxu0 0.0
        %1562 = vmatprep.subr.mxu0 0.0
        %1563 = vmatpush1.msra.mxu0 0.0
        %1564 = vmatprep.subr.mxu0 0.0
        %1565 = vmatpush1.msra.mxu0 0.0
        %1566 = vmatprep.subr.mxu0 0.0
        %1567 = vmatpush1.msra.mxu0 0.0
        %1568 = vmatprep.subr.mxu0 0.0
        %1569 = vmatpush1.msra.mxu0 0.0
        %1570 = vmatprep.subr.mxu0 0.0
        %1571 = vmatpush1.msra.mxu0 0.0
        %1572 = vmatprep.subr.mxu0 0.0
        %1573 = vmatpush1.msra.mxu0 0.0
        %1574 = vmatprep.subr.mxu0 0.0
        %1575 = vmatpush1.msra.mxu0 0.0
        %1576 = vmatprep.subr.mxu0 0.0
        %1577 = vmatpush1.msra.mxu0 0.0
        %1578 = vmatprep.subr.mxu0 0.0
        %1579 = vmatpush1.msra.mxu0 0.0
        %1580 = vmatprep.subr.mxu0 0.0
        %1581 = vmatpush1.msra.mxu0 0.0
        %1582 = vmatprep.subr.mxu0 0.0
        %1583 = vmatpush1.msra.mxu0 0.0
        %1584 = vmatprep.subr.mxu0 0.0
        %1585 = vmatpush1.msra.mxu0 0.0
        %1586 = vmatprep.subr.mxu0 0.0
        %1587 = vmatpush1.msra.mxu0 0.0
        %1588 = vmatprep.subr.mxu0 0.0
        %1589 = vmatpush1.msra.mxu0 0.0
        %1590 = vmatprep.subr.mxu0 0.0
        %1591 = vmatpush1.msra.mxu0 0.0
        %1592 = vmatprep.subr.mxu0 0.0
        %1593 = vmatpush1.msra.mxu0 0.0
        %1594 = vmatprep.subr.mxu0 0.0
        %1595 = vmatpush1.msra.mxu0 0.0
        %1596 = vmatprep.subr.mxu0 0.0
        %1597 = vmatpush1.msra.mxu0 0.0
        %1598 = vmatprep.subr.mxu0 0.0
        %1599 = vmatpush1.msra.mxu0 0.0
        %1600 = vmatprep.subr.mxu0 0.0
        %1601 = vmatpush1.msra.mxu0 0.0
        %1602 = vmatprep.subr.mxu0 0.0
        %1603 = vmatpush1.msra.mxu0 0.0
        %1604 = vmatprep.subr.mxu0 0.0
        %1605 = vmatpush1.msra.mxu0 0.0
        %1606 = vmatprep.subr.mxu0 0.0
        %1607 = vmatpush1.msra.mxu0 0.0
        %1608 = vmatprep.mubr.f32.mxu0 0.0
        %1609 = vmatmul.mubr.f32.gmra.mrb[0].mxu0 %v1539
        %v1610 = vpop.f32.mrb[0].mxu0
        %v1611 = vadd.f32 0.0, %v1610
        %v1612 = vpop.f32.mrb[0].mxu0
        %v1613 = vadd.f32 0.0, %v1612
        %1614 = vmatprep.mubr.f32.mxu0 0.0
        %1615 = vmatmul.mubr.f32.gmra.mrb[0].mxu0 %v1542
        %v1616 = vpop.f32.mrb[0].mxu0
        %v1617 = vadd.f32 0.0, %v1616
        %v1618 = vpop.f32.mrb[0].mxu0
        %v1619 = vadd.f32 0.0, %v1618
        %1620 = vdwg.mxu0
        %1621 = vmatprep.subr.mxu0 %v1534
        %1622 = vmatpush1.msra.mxu0 %v1533
        %1623 = vmatprep.subr.mxu0 0.0
        %1624 = vmatpush1.msra.mxu0 0.0
        %1625 = vmatprep.subr.mxu0 0.0
        %1626 = vmatpush1.msra.mxu0 0.0
        %1627 = vmatprep.subr.mxu0 0.0
        %1628 = vmatpush1.msra.mxu0 0.0
        %1629 = vmatprep.subr.mxu0 0.0
        %1630 = vmatpush1.msra.mxu0 0.0
        %1631 = vmatprep.subr.mxu0 0.0
        %1632 = vmatpush1.msra.mxu0 0.0
        %1633 = vmatprep.subr.mxu0 0.0
        %1634 = vmatpush1.msra.mxu0 0.0
        %1635 = vmatprep.subr.mxu0 0.0
        %1636 = vmatpush1.msra.mxu0 0.0
        %1637 = vmatprep.subr.mxu0 0.0
        %1638 = vmatpush1.msra.mxu0 0.0
        %1639 = vmatprep.subr.mxu0 0.0
        %1640 = vmatpush1.msra.mxu0 0.0
        %1641 = vmatprep.subr.mxu0 0.0
        %1642 = vmatpush1.msra.mxu0 0.0
        %1643 = vmatprep.subr.mxu0 0.0
        %1644 = vmatpush1.msra.mxu0 0.0
        %1645 = vmatprep.subr.mxu0 0.0
        %1646 = vmatpush1.msra.mxu0 0.0
        %1647 = vmatprep.subr.mxu0 0.0
        %1648 = vmatpush1.msra.mxu0 0.0
        %1649 = vmatprep.subr.mxu0 0.0
        %1650 = vmatpush1.msra.mxu0 0.0
        %1651 = vmatprep.subr.mxu0 0.0
        %1652 = vmatpush1.msra.mxu0 0.0
        %1653 = vmatprep.subr.mxu0 0.0
        %1654 = vmatpush1.msra.mxu0 0.0
        %1655 = vmatprep.subr.mxu0 0.0
        %1656 = vmatpush1.msra.mxu0 0.0
        %1657 = vmatprep.subr.mxu0 0.0
        %1658 = vmatpush1.msra.mxu0 0.0
        %1659 = vmatprep.subr.mxu0 0.0
        %1660 = vmatpush1.msra.mxu0 0.0
        %1661 = vmatprep.subr.mxu0 0.0
        %1662 = vmatpush1.msra.mxu0 0.0
        %1663 = vmatprep.subr.mxu0 0.0
        %1664 = vmatpush1.msra.mxu0 0.0
        %1665 = vmatprep.subr.mxu0 0.0
        %1666 = vmatpush1.msra.mxu0 0.0
        %1667 = vmatprep.subr.mxu0 0.0
        %1668 = vmatpush1.msra.mxu0 0.0
        %1669 = vmatprep.subr.mxu0 0.0
        %1670 = vmatpush1.msra.mxu0 0.0
        %1671 = vmatprep.subr.mxu0 0.0
        %1672 = vmatpush1.msra.mxu0 0.0
        %1673 = vmatprep.subr.mxu0 0.0
        %1674 = vmatpush1.msra.mxu0 0.0
        %1675 = vmatprep.subr.mxu0 0.0
        %1676 = vmatpush1.msra.mxu0 0.0
        %1677 = vmatprep.subr.mxu0 0.0
        %1678 = vmatpush1.msra.mxu0 0.0
        %1679 = vmatprep.subr.mxu0 0.0
        %1680 = vmatpush1.msra.mxu0 0.0
        %1681 = vmatprep.subr.mxu0 0.0
        %1682 = vmatpush1.msra.mxu0 0.0
        %1683 = vmatprep.subr.mxu0 0.0
        %1684 = vmatpush1.msra.mxu0 0.0
        %1685 = vmatprep.mubr.f32.mxu0 0.0
        %1686 = vmatmul.mubr.f32.gmra.mrb[0].mxu0 %v1539
        %v1687 = vpop.f32.mrb[0].mxu0
        %v1688 = vadd.f32 0.0, %v1687
        %v1689 = vpop.f32.mrb[0].mxu0
        %v1690 = vadd.f32 0.0, %v1689
        %1691 = vmatprep.mubr.f32.mxu0 0.0
        %1692 = vmatmul.mubr.f32.gmra.mrb[0].mxu0 %v1542
        %v1693 = vpop.f32.mrb[0].mxu0
        %v1694 = vadd.f32 0.0, %v1693
        %v1695 = vpop.f32.mrb[0].mxu0
        %v1696 = vadd.f32 0.0, %v1695
        %1697 = vdwg.mxu0
        %v1698 = vadd.f32 %v1487, %v1611
        %v1699 = vadd.f32 %v1488, %v1613
        %v1700 = vadd.f32 %v1489, %v1688
        %v1701 = vadd.f32 %v1490, %v1690
        %v1702 = vadd.f32 %v1491, %v1617
        %v1703 = vadd.f32 %v1492, %v1619
        %v1704 = vadd.f32 %v1493, %v1694
        %v1705 = vadd.f32 %v1494, %v1696
        %s1706 = scalar_lea.vmem %s1, 7
        %v1707 = vld [vmem:[%s1706] ss:$8 sm:$0xf]
        %1708 = vrot.lane.b32.xlu0 %v253, 112
        %v1709 = vpop.permute.xlu0 %1708
        %1710 = vrot.lane.b32.xlu0 %v254, 112
        %v1711 = vpop.permute.xlu0 %1710
        %1712 = vrot.lane.b32.xlu0 %v255, 112
        %v1713 = vpop.permute.xlu0 %1712
        %1714 = vrot.lane.b32.xlu0 %v256, 112
        %v1715 = vpop.permute.xlu0 %1714
        %vm1716 = vcmp.lt.s32.totalorder %v267, 112
        %v1717 = vsel %vm1716, %v1713, %v1715
        %v1718 = vsel %vm1716, %v1711, %v1713
        %v1719 = vsel %vm1716, %v1709, %v1711
        %v1720 = vsel %vm1716, %v1715, %v1709
        %v1722 = vlaneseq
        %v1723 = vshrl.u32 %v1722, 7
        %v1724 = vsub.s32 0, %v1723
        %v1725 = vrot.slane %v1707, %v1724
        %v1726 = vlaneseq
        %v1727 = vshrl.u32 %v1726, 7
        %v1728 = vsub.s32 1, %v1727
        %v1729 = vrot.slane %v1707, %v1728
        %v1730 = vlaneseq
        %v1731 = vshrl.u32 %v1730, 7
        %v1732 = vsub.s32 2, %v1731
        %v1733 = vrot.slane %v1707, %v1732
        %v1734 = vlaneseq
        %v1735 = vshrl.u32 %v1734, 7
        %v1736 = vsub.s32 3, %v1735
        %v1737 = vrot.slane %v1707, %v1736
        %v1742 = vmul.f32 %v1719, %v1725
        %v1743 = vmul.f32 %v1718, %v1729
        %v1744 = vmul.f32 %v1717, %v1733
        %v1745 = vmul.f32 %v1720, %v1737
        %s1746 = scalar_lea.vmem %s2, 112
        %v1747 = vld [vmem:[%s1746] sm:$0xff]
        %v1748 = vld [vmem:[%s1746 + $0x8] sm:$0xff]
        %v1750 = vsel %vm343, %v1747, 0
        %v1753 = vsel %vm343, %v1748, 0
        %1755 = vmatprep.subr.mxu0 %v1743
        %1756 = vmatpush1.msra.mxu0 %v1742
        %1757 = vmatprep.subr.mxu0 0.0
        %1758 = vmatpush1.msra.mxu0 0.0
        %1759 = vmatprep.subr.mxu0 0.0
        %1760 = vmatpush1.msra.mxu0 0.0
        %1761 = vmatprep.subr.mxu0 0.0
        %1762 = vmatpush1.msra.mxu0 0.0
        %1763 = vmatprep.subr.mxu0 0.0
        %1764 = vmatpush1.msra.mxu0 0.0
        %1765 = vmatprep.subr.mxu0 0.0
        %1766 = vmatpush1.msra.mxu0 0.0
        %1767 = vmatprep.subr.mxu0 0.0
        %1768 = vmatpush1.msra.mxu0 0.0
        %1769 = vmatprep.subr.mxu0 0.0
        %1770 = vmatpush1.msra.mxu0 0.0
        %1771 = vmatprep.subr.mxu0 0.0
        %1772 = vmatpush1.msra.mxu0 0.0
        %1773 = vmatprep.subr.mxu0 0.0
        %1774 = vmatpush1.msra.mxu0 0.0
        %1775 = vmatprep.subr.mxu0 0.0
        %1776 = vmatpush1.msra.mxu0 0.0
        %1777 = vmatprep.subr.mxu0 0.0
        %1778 = vmatpush1.msra.mxu0 0.0
        %1779 = vmatprep.subr.mxu0 0.0
        %1780 = vmatpush1.msra.mxu0 0.0
        %1781 = vmatprep.subr.mxu0 0.0
        %1782 = vmatpush1.msra.mxu0 0.0
        %1783 = vmatprep.subr.mxu0 0.0
        %1784 = vmatpush1.msra.mxu0 0.0
        %1785 = vmatprep.subr.mxu0 0.0
        %1786 = vmatpush1.msra.mxu0 0.0
        %1787 = vmatprep.subr.mxu0 0.0
        %1788 = vmatpush1.msra.mxu0 0.0
        %1789 = vmatprep.subr.mxu0 0.0
        %1790 = vmatpush1.msra.mxu0 0.0
        %1791 = vmatprep.subr.mxu0 0.0
        %1792 = vmatpush1.msra.mxu0 0.0
        %1793 = vmatprep.subr.mxu0 0.0
        %1794 = vmatpush1.msra.mxu0 0.0
        %1795 = vmatprep.subr.mxu0 0.0
        %1796 = vmatpush1.msra.mxu0 0.0
        %1797 = vmatprep.subr.mxu0 0.0
        %1798 = vmatpush1.msra.mxu0 0.0
        %1799 = vmatprep.subr.mxu0 0.0
        %1800 = vmatpush1.msra.mxu0 0.0
        %1801 = vmatprep.subr.mxu0 0.0
        %1802 = vmatpush1.msra.mxu0 0.0
        %1803 = vmatprep.subr.mxu0 0.0
        %1804 = vmatpush1.msra.mxu0 0.0
        %1805 = vmatprep.subr.mxu0 0.0
        %1806 = vmatpush1.msra.mxu0 0.0
        %1807 = vmatprep.subr.mxu0 0.0
        %1808 = vmatpush1.msra.mxu0 0.0
        %1809 = vmatprep.subr.mxu0 0.0
        %1810 = vmatpush1.msra.mxu0 0.0
        %1811 = vmatprep.subr.mxu0 0.0
        %1812 = vmatpush1.msra.mxu0 0.0
        %1813 = vmatprep.subr.mxu0 0.0
        %1814 = vmatpush1.msra.mxu0 0.0
        %1815 = vmatprep.subr.mxu0 0.0
        %1816 = vmatpush1.msra.mxu0 0.0
        %1817 = vmatprep.subr.mxu0 0.0
        %1818 = vmatpush1.msra.mxu0 0.0
        %1819 = vmatprep.mubr.f32.mxu0 0.0
        %1820 = vmatmul.mubr.f32.gmra.mrb[0].mxu0 %v1750
        %v1821 = vpop.f32.mrb[0].mxu0
        %v1822 = vadd.f32 0.0, %v1821
        %v1823 = vpop.f32.mrb[0].mxu0
        %v1824 = vadd.f32 0.0, %v1823
        %1825 = vmatprep.mubr.f32.mxu0 0.0
        %1826 = vmatmul.mubr.f32.gmra.mrb[0].mxu0 %v1753
        %v1827 = vpop.f32.mrb[0].mxu0
        %v1828 = vadd.f32 0.0, %v1827
        %v1829 = vpop.f32.mrb[0].mxu0
        %v1830 = vadd.f32 0.0, %v1829
        %1831 = vdwg.mxu0
        %1832 = vmatprep.subr.mxu0 %v1745
        %1833 = vmatpush1.msra.mxu0 %v1744
        %1834 = vmatprep.subr.mxu0 0.0
        %1835 = vmatpush1.msra.mxu0 0.0
        %1836 = vmatprep.subr.mxu0 0.0
        %1837 = vmatpush1.msra.mxu0 0.0
        %1838 = vmatprep.subr.mxu0 0.0
        %1839 = vmatpush1.msra.mxu0 0.0
        %1840 = vmatprep.subr.mxu0 0.0
        %1841 = vmatpush1.msra.mxu0 0.0
        %1842 = vmatprep.subr.mxu0 0.0
        %1843 = vmatpush1.msra.mxu0 0.0
        %1844 = vmatprep.subr.mxu0 0.0
        %1845 = vmatpush1.msra.mxu0 0.0
        %1846 = vmatprep.subr.mxu0 0.0
        %1847 = vmatpush1.msra.mxu0 0.0
        %1848 = vmatprep.subr.mxu0 0.0
        %1849 = vmatpush1.msra.mxu0 0.0
        %1850 = vmatprep.subr.mxu0 0.0
        %1851 = vmatpush1.msra.mxu0 0.0
        %1852 = vmatprep.subr.mxu0 0.0
        %1853 = vmatpush1.msra.mxu0 0.0
        %1854 = vmatprep.subr.mxu0 0.0
        %1855 = vmatpush1.msra.mxu0 0.0
        %1856 = vmatprep.subr.mxu0 0.0
        %1857 = vmatpush1.msra.mxu0 0.0
        %1858 = vmatprep.subr.mxu0 0.0
        %1859 = vmatpush1.msra.mxu0 0.0
        %1860 = vmatprep.subr.mxu0 0.0
        %1861 = vmatpush1.msra.mxu0 0.0
        %1862 = vmatprep.subr.mxu0 0.0
        %1863 = vmatpush1.msra.mxu0 0.0
        %1864 = vmatprep.subr.mxu0 0.0
        %1865 = vmatpush1.msra.mxu0 0.0
        %1866 = vmatprep.subr.mxu0 0.0
        %1867 = vmatpush1.msra.mxu0 0.0
        %1868 = vmatprep.subr.mxu0 0.0
        %1869 = vmatpush1.msra.mxu0 0.0
        %1870 = vmatprep.subr.mxu0 0.0
        %1871 = vmatpush1.msra.mxu0 0.0
        %1872 = vmatprep.subr.mxu0 0.0
        %1873 = vmatpush1.msra.mxu0 0.0
        %1874 = vmatprep.subr.mxu0 0.0
        %1875 = vmatpush1.msra.mxu0 0.0
        %1876 = vmatprep.subr.mxu0 0.0
        %1877 = vmatpush1.msra.mxu0 0.0
        %1878 = vmatprep.subr.mxu0 0.0
        %1879 = vmatpush1.msra.mxu0 0.0
        %1880 = vmatprep.subr.mxu0 0.0
        %1881 = vmatpush1.msra.mxu0 0.0
        %1882 = vmatprep.subr.mxu0 0.0
        %1883 = vmatpush1.msra.mxu0 0.0
        %1884 = vmatprep.subr.mxu0 0.0
        %1885 = vmatpush1.msra.mxu0 0.0
        %1886 = vmatprep.subr.mxu0 0.0
        %1887 = vmatpush1.msra.mxu0 0.0
        %1888 = vmatprep.subr.mxu0 0.0
        %1889 = vmatpush1.msra.mxu0 0.0
        %1890 = vmatprep.subr.mxu0 0.0
        %1891 = vmatpush1.msra.mxu0 0.0
        %1892 = vmatprep.subr.mxu0 0.0
        %1893 = vmatpush1.msra.mxu0 0.0
        %1894 = vmatprep.subr.mxu0 0.0
        %1895 = vmatpush1.msra.mxu0 0.0
        %1896 = vmatprep.mubr.f32.mxu0 0.0
        %1897 = vmatmul.mubr.f32.gmra.mrb[0].mxu0 %v1750
        %v1898 = vpop.f32.mrb[0].mxu0
        %v1899 = vadd.f32 0.0, %v1898
        %v1900 = vpop.f32.mrb[0].mxu0
        %v1901 = vadd.f32 0.0, %v1900
        %1902 = vmatprep.mubr.f32.mxu0 0.0
        %1903 = vmatmul.mubr.f32.gmra.mrb[0].mxu0 %v1753
        %v1904 = vpop.f32.mrb[0].mxu0
        %v1905 = vadd.f32 0.0, %v1904
        %v1906 = vpop.f32.mrb[0].mxu0
        %v1907 = vadd.f32 0.0, %v1906
        %1908 = vdwg.mxu0
        %v1909 = vadd.f32 %v1698, %v1822
        %v1910 = vadd.f32 %v1699, %v1824
        %v1911 = vadd.f32 %v1700, %v1899
        %v1912 = vadd.f32 %v1701, %v1901
        %v1913 = vadd.f32 %v1702, %v1828
        %v1914 = vadd.f32 %v1703, %v1830
        %v1915 = vadd.f32 %v1704, %v1905
        %v1916 = vadd.f32 %v1705, %v1907
        %s1917 = scalar_lea.vmem %s1, 32
        %v1918 = vld [vmem:[%s1917] ss:$8 sm:$0xf]
        %1919 = vrot.lane.b32.xlu0 %v253, 111
        %v1920 = vpop.permute.xlu0 %1919
        %1921 = vrot.lane.b32.xlu0 %v254, 111
        %v1922 = vpop.permute.xlu0 %1921
        %1923 = vrot.lane.b32.xlu0 %v255, 111
        %v1924 = vpop.permute.xlu0 %1923
        %1925 = vrot.lane.b32.xlu0 %v256, 111
        %v1926 = vpop.permute.xlu0 %1925
        %vm1927 = vcmp.lt.s32.totalorder %v267, 111
        %v1928 = vsel %vm1927, %v1924, %v1926
        %v1929 = vsel %vm1927, %v1922, %v1924
        %v1930 = vsel %vm1927, %v1920, %v1922
        %v1931 = vsel %vm1927, %v1926, %v1920
        %v1933 = vlaneseq
        %v1934 = vshrl.u32 %v1933, 7
        %v1935 = vsub.s32 0, %v1934
        %v1936 = vrot.slane %v1918, %v1935
        %v1937 = vlaneseq
        %v1938 = vshrl.u32 %v1937, 7
        %v1939 = vsub.s32 1, %v1938
        %v1940 = vrot.slane %v1918, %v1939
        %v1941 = vlaneseq
        %v1942 = vshrl.u32 %v1941, 7
        %v1943 = vsub.s32 2, %v1942
        %v1944 = vrot.slane %v1918, %v1943
        %v1945 = vlaneseq
        %v1946 = vshrl.u32 %v1945, 7
        %v1947 = vsub.s32 3, %v1946
        %v1948 = vrot.slane %v1918, %v1947
        %v1953 = vmul.f32 %v1930, %v1936
        %v1954 = vmul.f32 %v1929, %v1940
        %v1955 = vmul.f32 %v1928, %v1944
        %v1956 = vmul.f32 %v1931, %v1948
        %s1957 = scalar_lea.vmem %s2, 128
        %v1958 = vld [vmem:[%s1957] sm:$0xff]
        %v1959 = vld [vmem:[%s1957 + $0x8] sm:$0xff]
        %v1961 = vsel %vm343, %v1958, 0
        %v1964 = vsel %vm343, %v1959, 0
        %1966 = vmatprep.subr.mxu0 %v1954
        %1967 = vmatpush1.msra.mxu0 %v1953
        %1968 = vmatprep.subr.mxu0 0.0
        %1969 = vmatpush1.msra.mxu0 0.0
        %1970 = vmatprep.subr.mxu0 0.0
        %1971 = vmatpush1.msra.mxu0 0.0
        %1972 = vmatprep.subr.mxu0 0.0
        %1973 = vmatpush1.msra.mxu0 0.0
        %1974 = vmatprep.subr.mxu0 0.0
        %1975 = vmatpush1.msra.mxu0 0.0
        %1976 = vmatprep.subr.mxu0 0.0
        %1977 = vmatpush1.msra.mxu0 0.0
        %1978 = vmatprep.subr.mxu0 0.0
        %1979 = vmatpush1.msra.mxu0 0.0
        %1980 = vmatprep.subr.mxu0 0.0
        %1981 = vmatpush1.msra.mxu0 0.0
        %1982 = vmatprep.subr.mxu0 0.0
        %1983 = vmatpush1.msra.mxu0 0.0
        %1984 = vmatprep.subr.mxu0 0.0
        %1985 = vmatpush1.msra.mxu0 0.0
        %1986 = vmatprep.subr.mxu0 0.0
        %1987 = vmatpush1.msra.mxu0 0.0
        %1988 = vmatprep.subr.mxu0 0.0
        %1989 = vmatpush1.msra.mxu0 0.0
        %1990 = vmatprep.subr.mxu0 0.0
        %1991 = vmatpush1.msra.mxu0 0.0
        %1992 = vmatprep.subr.mxu0 0.0
        %1993 = vmatpush1.msra.mxu0 0.0
        %1994 = vmatprep.subr.mxu0 0.0
        %1995 = vmatpush1.msra.mxu0 0.0
        %1996 = vmatprep.subr.mxu0 0.0
        %1997 = vmatpush1.msra.mxu0 0.0
        %1998 = vmatprep.subr.mxu0 0.0
        %1999 = vmatpush1.msra.mxu0 0.0
        %2000 = vmatprep.subr.mxu0 0.0
        %2001 = vmatpush1.msra.mxu0 0.0
        %2002 = vmatprep.subr.mxu0 0.0
        %2003 = vmatpush1.msra.mxu0 0.0
        %2004 = vmatprep.subr.mxu0 0.0
        %2005 = vmatpush1.msra.mxu0 0.0
        %2006 = vmatprep.subr.mxu0 0.0
        %2007 = vmatpush1.msra.mxu0 0.0
        %2008 = vmatprep.subr.mxu0 0.0
        %2009 = vmatpush1.msra.mxu0 0.0
        %2010 = vmatprep.subr.mxu0 0.0
        %2011 = vmatpush1.msra.mxu0 0.0
        %2012 = vmatprep.subr.mxu0 0.0
        %2013 = vmatpush1.msra.mxu0 0.0
        %2014 = vmatprep.subr.mxu0 0.0
        %2015 = vmatpush1.msra.mxu0 0.0
        %2016 = vmatprep.subr.mxu0 0.0
        %2017 = vmatpush1.msra.mxu0 0.0
        %2018 = vmatprep.subr.mxu0 0.0
        %2019 = vmatpush1.msra.mxu0 0.0
        %2020 = vmatprep.subr.mxu0 0.0
        %2021 = vmatpush1.msra.mxu0 0.0
        %2022 = vmatprep.subr.mxu0 0.0
        %2023 = vmatpush1.msra.mxu0 0.0
        %2024 = vmatprep.subr.mxu0 0.0
        %2025 = vmatpush1.msra.mxu0 0.0
        %2026 = vmatprep.subr.mxu0 0.0
        %2027 = vmatpush1.msra.mxu0 0.0
        %2028 = vmatprep.subr.mxu0 0.0
        %2029 = vmatpush1.msra.mxu0 0.0
        %2030 = vmatprep.mubr.f32.mxu0 0.0
        %2031 = vmatmul.mubr.f32.gmra.mrb[0].mxu0 %v1961
        %v2032 = vpop.f32.mrb[0].mxu0
        %v2033 = vadd.f32 0.0, %v2032
        %v2034 = vpop.f32.mrb[0].mxu0
        %v2035 = vadd.f32 0.0, %v2034
        %2036 = vmatprep.mubr.f32.mxu0 0.0
        %2037 = vmatmul.mubr.f32.gmra.mrb[0].mxu0 %v1964
        %v2038 = vpop.f32.mrb[0].mxu0
        %v2039 = vadd.f32 0.0, %v2038
        %v2040 = vpop.f32.mrb[0].mxu0
        %v2041 = vadd.f32 0.0, %v2040
        %2042 = vdwg.mxu0
        %2043 = vmatprep.subr.mxu0 %v1956
        %2044 = vmatpush1.msra.mxu0 %v1955
        %2045 = vmatprep.subr.mxu0 0.0
        %2046 = vmatpush1.msra.mxu0 0.0
        %2047 = vmatprep.subr.mxu0 0.0
        %2048 = vmatpush1.msra.mxu0 0.0
        %2049 = vmatprep.subr.mxu0 0.0
        %2050 = vmatpush1.msra.mxu0 0.0
        %2051 = vmatprep.subr.mxu0 0.0
        %2052 = vmatpush1.msra.mxu0 0.0
        %2053 = vmatprep.subr.mxu0 0.0
        %2054 = vmatpush1.msra.mxu0 0.0
        %2055 = vmatprep.subr.mxu0 0.0
        %2056 = vmatpush1.msra.mxu0 0.0
        %2057 = vmatprep.subr.mxu0 0.0
        %2058 = vmatpush1.msra.mxu0 0.0
        %2059 = vmatprep.subr.mxu0 0.0
        %2060 = vmatpush1.msra.mxu0 0.0
        %2061 = vmatprep.subr.mxu0 0.0
        %2062 = vmatpush1.msra.mxu0 0.0
        %2063 = vmatprep.subr.mxu0 0.0
        %2064 = vmatpush1.msra.mxu0 0.0
        %2065 = vmatprep.subr.mxu0 0.0
        %2066 = vmatpush1.msra.mxu0 0.0
        %2067 = vmatprep.subr.mxu0 0.0
        %2068 = vmatpush1.msra.mxu0 0.0
        %2069 = vmatprep.subr.mxu0 0.0
        %2070 = vmatpush1.msra.mxu0 0.0
        %2071 = vmatprep.subr.mxu0 0.0
        %2072 = vmatpush1.msra.mxu0 0.0
        %2073 = vmatprep.subr.mxu0 0.0
        %2074 = vmatpush1.msra.mxu0 0.0
        %2075 = vmatprep.subr.mxu0 0.0
        %2076 = vmatpush1.msra.mxu0 0.0
        %2077 = vmatprep.subr.mxu0 0.0
        %2078 = vmatpush1.msra.mxu0 0.0
        %2079 = vmatprep.subr.mxu0 0.0
        %2080 = vmatpush1.msra.mxu0 0.0
        %2081 = vmatprep.subr.mxu0 0.0
        %2082 = vmatpush1.msra.mxu0 0.0
        %2083 = vmatprep.subr.mxu0 0.0
        %2084 = vmatpush1.msra.mxu0 0.0
        %2085 = vmatprep.subr.mxu0 0.0
        %2086 = vmatpush1.msra.mxu0 0.0
        %2087 = vmatprep.subr.mxu0 0.0
        %2088 = vmatpush1.msra.mxu0 0.0
        %2089 = vmatprep.subr.mxu0 0.0
        %2090 = vmatpush1.msra.mxu0 0.0
        %2091 = vmatprep.subr.mxu0 0.0
        %2092 = vmatpush1.msra.mxu0 0.0
        %2093 = vmatprep.subr.mxu0 0.0
        %2094 = vmatpush1.msra.mxu0 0.0
        %2095 = vmatprep.subr.mxu0 0.0
        %2096 = vmatpush1.msra.mxu0 0.0
        %2097 = vmatprep.subr.mxu0 0.0
        %2098 = vmatpush1.msra.mxu0 0.0
        %2099 = vmatprep.subr.mxu0 0.0
        %2100 = vmatpush1.msra.mxu0 0.0
        %2101 = vmatprep.subr.mxu0 0.0
        %2102 = vmatpush1.msra.mxu0 0.0
        %2103 = vmatprep.subr.mxu0 0.0
        %2104 = vmatpush1.msra.mxu0 0.0
        %2105 = vmatprep.subr.mxu0 0.0
        %2106 = vmatpush1.msra.mxu0 0.0
        %2107 = vmatprep.mubr.f32.mxu0 0.0
        %2108 = vmatmul.mubr.f32.gmra.mrb[0].mxu0 %v1961
        %v2109 = vpop.f32.mrb[0].mxu0
        %v2110 = vadd.f32 0.0, %v2109
        %v2111 = vpop.f32.mrb[0].mxu0
        %v2112 = vadd.f32 0.0, %v2111
        %2113 = vmatprep.mubr.f32.mxu0 0.0
        %2114 = vmatmul.mubr.f32.gmra.mrb[0].mxu0 %v1964
        %v2115 = vpop.f32.mrb[0].mxu0
        %v2116 = vadd.f32 0.0, %v2115
        %v2117 = vpop.f32.mrb[0].mxu0
        %v2118 = vadd.f32 0.0, %v2117
        %2119 = vdwg.mxu0
        %v2120 = vadd.f32 %v1909, %v2033
        %v2121 = vadd.f32 %v1910, %v2035
        %v2122 = vadd.f32 %v1911, %v2110
        %v2123 = vadd.f32 %v1912, %v2112
        %v2124 = vadd.f32 %v1913, %v2039
        %v2125 = vadd.f32 %v1914, %v2041
        %v2126 = vadd.f32 %v1915, %v2116
        %v2127 = vadd.f32 %v1916, %v2118
        %v2128 = vld [vmem:[%s3] sm:$0xff]
        %v2129 = vld [vmem:[%s3 + $0x8] sm:$0xff]
        %2131 = vset.pattern.permute.xlu0 0
        %2132 = vperm.xlu0 %2131, %v2128
        %v2133 = vpop.permute.xlu0 %2132
        %2136 = vset.pattern.permute.xlu0 0
        %2137 = vperm.xlu0 %2136, %v2129
        %v2138 = vpop.permute.xlu0 %2137
        %v2140 = vadd.f32 %v2120, %v2133
        %v2141 = vadd.f32 %v2121, %v2133
        %v2142 = vadd.f32 %v2122, %v2133
        %v2143 = vadd.f32 %v2123, %v2133
        %v2144 = vadd.f32 %v2124, %v2138
        %v2145 = vadd.f32 %v2125, %v2138
        %v2146 = vadd.f32 %v2126, %v2138
        %v2147 = vadd.f32 %v2127, %v2138
        %v2148 = vmax.f32 %v2140, 0.0
        %v2149 = vmax.f32 %v2141, 0.0
        %v2150 = vmax.f32 %v2142, 0.0
        %v2151 = vmax.f32 %v2143, 0.0
        %v2152 = vmax.f32 %v2144, 0.0
        %v2153 = vmax.f32 %v2145, 0.0
        %v2154 = vmax.f32 %v2146, 0.0
        %v2155 = vmax.f32 %v2147, 0.0
        %v2156 = vld [vmem:[%s4] sm:$0xff]
        %vm2157 = vcmask 130048
        %v2159 = vsel %vm2157, %v2156, 0
        %2161 = vmatprep.subr.mxu0 %v2149
        %2162 = vmatpush1.msra.mxu0 %v2148
        %2163 = vmatprep.subr.mxu0 %v2153
        %2164 = vmatpush1.msra.mxu0 %v2152
        %2165 = vmatprep.subr.mxu0 0.0
        %2166 = vmatpush1.msra.mxu0 0.0
        %2167 = vmatprep.subr.mxu0 0.0
        %2168 = vmatpush1.msra.mxu0 0.0
        %2169 = vmatprep.subr.mxu0 0.0
        %2170 = vmatpush1.msra.mxu0 0.0
        %2171 = vmatprep.subr.mxu0 0.0
        %2172 = vmatpush1.msra.mxu0 0.0
        %2173 = vmatprep.subr.mxu0 0.0
        %2174 = vmatpush1.msra.mxu0 0.0
        %2175 = vmatprep.subr.mxu0 0.0
        %2176 = vmatpush1.msra.mxu0 0.0
        %2177 = vmatprep.subr.mxu0 0.0
        %2178 = vmatpush1.msra.mxu0 0.0
        %2179 = vmatprep.subr.mxu0 0.0
        %2180 = vmatpush1.msra.mxu0 0.0
        %2181 = vmatprep.subr.mxu0 0.0
        %2182 = vmatpush1.msra.mxu0 0.0
        %2183 = vmatprep.subr.mxu0 0.0
        %2184 = vmatpush1.msra.mxu0 0.0
        %2185 = vmatprep.subr.mxu0 0.0
        %2186 = vmatpush1.msra.mxu0 0.0
        %2187 = vmatprep.subr.mxu0 0.0
        %2188 = vmatpush1.msra.mxu0 0.0
        %2189 = vmatprep.subr.mxu0 0.0
        %2190 = vmatpush1.msra.mxu0 0.0
        %2191 = vmatprep.subr.mxu0 0.0
        %2192 = vmatpush1.msra.mxu0 0.0
        %2193 = vmatprep.subr.mxu0 0.0
        %2194 = vmatpush1.msra.mxu0 0.0
        %2195 = vmatprep.subr.mxu0 0.0
        %2196 = vmatpush1.msra.mxu0 0.0
        %2197 = vmatprep.subr.mxu0 0.0
        %2198 = vmatpush1.msra.mxu0 0.0
        %2199 = vmatprep.subr.mxu0 0.0
        %2200 = vmatpush1.msra.mxu0 0.0
        %2201 = vmatprep.subr.mxu0 0.0
        %2202 = vmatpush1.msra.mxu0 0.0
        %2203 = vmatprep.subr.mxu0 0.0
        %2204 = vmatpush1.msra.mxu0 0.0
        %2205 = vmatprep.subr.mxu0 0.0
        %2206 = vmatpush1.msra.mxu0 0.0
        %2207 = vmatprep.subr.mxu0 0.0
        %2208 = vmatpush1.msra.mxu0 0.0
        %2209 = vmatprep.subr.mxu0 0.0
        %2210 = vmatpush1.msra.mxu0 0.0
        %2211 = vmatprep.subr.mxu0 0.0
        %2212 = vmatpush1.msra.mxu0 0.0
        %2213 = vmatprep.subr.mxu0 0.0
        %2214 = vmatpush1.msra.mxu0 0.0
        %2215 = vmatprep.subr.mxu0 0.0
        %2216 = vmatpush1.msra.mxu0 0.0
        %2217 = vmatprep.subr.mxu0 0.0
        %2218 = vmatpush1.msra.mxu0 0.0
        %2219 = vmatprep.subr.mxu0 0.0
        %2220 = vmatpush1.msra.mxu0 0.0
        %2221 = vmatprep.subr.mxu0 0.0
        %2222 = vmatpush1.msra.mxu0 0.0
        %2223 = vmatprep.subr.mxu0 0.0
        %2224 = vmatpush1.msra.mxu0 0.0
        %2225 = vmatprep.mubr.f32.mxu0 0.0
        %2226 = vmatmul.mubr.f32.gmra.mrb[0].mxu0 %v2159
        %v2227 = vpop.f32.mrb[0].mxu0
        %v2228 = vadd.f32 0.0, %v2227
        %v2229 = vpop.f32.mrb[0].mxu0
        %v2230 = vadd.f32 0.0, %v2229
        %2231 = vdwg.mxu0
        %2232 = vmatprep.subr.mxu0 %v2151
        %2233 = vmatpush1.msra.mxu0 %v2150
        %2234 = vmatprep.subr.mxu0 %v2155
        %2235 = vmatpush1.msra.mxu0 %v2154
        %2236 = vmatprep.subr.mxu0 0.0
        %2237 = vmatpush1.msra.mxu0 0.0
        %2238 = vmatprep.subr.mxu0 0.0
        %2239 = vmatpush1.msra.mxu0 0.0
        %2240 = vmatprep.subr.mxu0 0.0
        %2241 = vmatpush1.msra.mxu0 0.0
        %2242 = vmatprep.subr.mxu0 0.0
        %2243 = vmatpush1.msra.mxu0 0.0
        %2244 = vmatprep.subr.mxu0 0.0
        %2245 = vmatpush1.msra.mxu0 0.0
        %2246 = vmatprep.subr.mxu0 0.0
        %2247 = vmatpush1.msra.mxu0 0.0
        %2248 = vmatprep.subr.mxu0 0.0
        %2249 = vmatpush1.msra.mxu0 0.0
        %2250 = vmatprep.subr.mxu0 0.0
        %2251 = vmatpush1.msra.mxu0 0.0
        %2252 = vmatprep.subr.mxu0 0.0
        %2253 = vmatpush1.msra.mxu0 0.0
        %2254 = vmatprep.subr.mxu0 0.0
        %2255 = vmatpush1.msra.mxu0 0.0
        %2256 = vmatprep.subr.mxu0 0.0
        %2257 = vmatpush1.msra.mxu0 0.0
        %2258 = vmatprep.subr.mxu0 0.0
        %2259 = vmatpush1.msra.mxu0 0.0
        %2260 = vmatprep.subr.mxu0 0.0
        %2261 = vmatpush1.msra.mxu0 0.0
        %2262 = vmatprep.subr.mxu0 0.0
        %2263 = vmatpush1.msra.mxu0 0.0
        %2264 = vmatprep.subr.mxu0 0.0
        %2265 = vmatpush1.msra.mxu0 0.0
        %2266 = vmatprep.subr.mxu0 0.0
        %2267 = vmatpush1.msra.mxu0 0.0
        %2268 = vmatprep.subr.mxu0 0.0
        %2269 = vmatpush1.msra.mxu0 0.0
        %2270 = vmatprep.subr.mxu0 0.0
        %2271 = vmatpush1.msra.mxu0 0.0
        %2272 = vmatprep.subr.mxu0 0.0
        %2273 = vmatpush1.msra.mxu0 0.0
        %2274 = vmatprep.subr.mxu0 0.0
        %2275 = vmatpush1.msra.mxu0 0.0
        %2276 = vmatprep.subr.mxu0 0.0
        %2277 = vmatpush1.msra.mxu0 0.0
        %2278 = vmatprep.subr.mxu0 0.0
        %2279 = vmatpush1.msra.mxu0 0.0
        %2280 = vmatprep.subr.mxu0 0.0
        %2281 = vmatpush1.msra.mxu0 0.0
        %2282 = vmatprep.subr.mxu0 0.0
        %2283 = vmatpush1.msra.mxu0 0.0
        %2284 = vmatprep.subr.mxu0 0.0
        %2285 = vmatpush1.msra.mxu0 0.0
        %2286 = vmatprep.subr.mxu0 0.0
        %2287 = vmatpush1.msra.mxu0 0.0
        %2288 = vmatprep.subr.mxu0 0.0
        %2289 = vmatpush1.msra.mxu0 0.0
        %2290 = vmatprep.subr.mxu0 0.0
        %2291 = vmatpush1.msra.mxu0 0.0
        %2292 = vmatprep.subr.mxu0 0.0
        %2293 = vmatpush1.msra.mxu0 0.0
        %2294 = vmatprep.subr.mxu0 0.0
        %2295 = vmatpush1.msra.mxu0 0.0
        %2296 = vmatprep.mubr.f32.mxu0 0.0
        %2297 = vmatmul.mubr.f32.gmra.mrb[0].mxu0 %v2159
        %v2298 = vpop.f32.mrb[0].mxu0
        %v2299 = vadd.f32 0.0, %v2298
        %v2300 = vpop.f32.mrb[0].mxu0
        %v2301 = vadd.f32 0.0, %v2300
        %2302 = vdwg.mxu0
        %2303 = vrot.lane.b32.xlu0 %v2228, 17
        %v2304 = vpop.permute.xlu0 %2303
        %2305 = vrot.lane.b32.xlu0 %v2230, 17
        %v2306 = vpop.permute.xlu0 %2305
        %2307 = vrot.lane.b32.xlu0 %v2299, 17
        %v2308 = vpop.permute.xlu0 %2307
        %2309 = vrot.lane.b32.xlu0 %v2301, 17
        %v2310 = vpop.permute.xlu0 %2309
        %v2311 = vsel %vm268, %v2308, %v2310
        %v2312 = vsel %vm268, %v2306, %v2308
        %v2313 = vsel %vm268, %v2304, %v2306
        %v2314 = vsel %vm268, %v2310, %v2304
        %v2315 = vmul.f32 %v2314, %v277
        %v2316 = vmul.f32 %v2313, %v281
        %v2317 = vmul.f32 %v2312, %v285
        %v2318 = vmul.f32 %v2311, %v289
        %v2319 = vadd.f32 %v2315, 0.0
        %v2320 = vadd.f32 %v2316, 0.0
        %v2321 = vadd.f32 %v2317, 0.0
        %v2322 = vadd.f32 %v2318, 0.0
        %s2323 = scalar_lea.vmem %s4, 8
        %v2324 = vld [vmem:[%s2323] sm:$0xff]
        %v2326 = vsel %vm2157, %v2324, 0
        %2328 = vmatprep.subr.mxu0 %v2149
        %2329 = vmatpush1.msra.mxu0 %v2148
        %2330 = vmatprep.subr.mxu0 %v2153
        %2331 = vmatpush1.msra.mxu0 %v2152
        %2332 = vmatprep.subr.mxu0 0.0
        %2333 = vmatpush1.msra.mxu0 0.0
        %2334 = vmatprep.subr.mxu0 0.0
        %2335 = vmatpush1.msra.mxu0 0.0
        %2336 = vmatprep.subr.mxu0 0.0
        %2337 = vmatpush1.msra.mxu0 0.0
        %2338 = vmatprep.subr.mxu0 0.0
        %2339 = vmatpush1.msra.mxu0 0.0
        %2340 = vmatprep.subr.mxu0 0.0
        %2341 = vmatpush1.msra.mxu0 0.0
        %2342 = vmatprep.subr.mxu0 0.0
        %2343 = vmatpush1.msra.mxu0 0.0
        %2344 = vmatprep.subr.mxu0 0.0
        %2345 = vmatpush1.msra.mxu0 0.0
        %2346 = vmatprep.subr.mxu0 0.0
        %2347 = vmatpush1.msra.mxu0 0.0
        %2348 = vmatprep.subr.mxu0 0.0
        %2349 = vmatpush1.msra.mxu0 0.0
        %2350 = vmatprep.subr.mxu0 0.0
        %2351 = vmatpush1.msra.mxu0 0.0
        %2352 = vmatprep.subr.mxu0 0.0
        %2353 = vmatpush1.msra.mxu0 0.0
        %2354 = vmatprep.subr.mxu0 0.0
        %2355 = vmatpush1.msra.mxu0 0.0
        %2356 = vmatprep.subr.mxu0 0.0
        %2357 = vmatpush1.msra.mxu0 0.0
        %2358 = vmatprep.subr.mxu0 0.0
        %2359 = vmatpush1.msra.mxu0 0.0
        %2360 = vmatprep.subr.mxu0 0.0
        %2361 = vmatpush1.msra.mxu0 0.0
        %2362 = vmatprep.subr.mxu0 0.0
        %2363 = vmatpush1.msra.mxu0 0.0
        %2364 = vmatprep.subr.mxu0 0.0
        %2365 = vmatpush1.msra.mxu0 0.0
        %2366 = vmatprep.subr.mxu0 0.0
        %2367 = vmatpush1.msra.mxu0 0.0
        %2368 = vmatprep.subr.mxu0 0.0
        %2369 = vmatpush1.msra.mxu0 0.0
        %2370 = vmatprep.subr.mxu0 0.0
        %2371 = vmatpush1.msra.mxu0 0.0
        %2372 = vmatprep.subr.mxu0 0.0
        %2373 = vmatpush1.msra.mxu0 0.0
        %2374 = vmatprep.subr.mxu0 0.0
        %2375 = vmatpush1.msra.mxu0 0.0
        %2376 = vmatprep.subr.mxu0 0.0
        %2377 = vmatpush1.msra.mxu0 0.0
        %2378 = vmatprep.subr.mxu0 0.0
        %2379 = vmatpush1.msra.mxu0 0.0
        %2380 = vmatprep.subr.mxu0 0.0
        %2381 = vmatpush1.msra.mxu0 0.0
        %2382 = vmatprep.subr.mxu0 0.0
        %2383 = vmatpush1.msra.mxu0 0.0
        %2384 = vmatprep.subr.mxu0 0.0
        %2385 = vmatpush1.msra.mxu0 0.0
        %2386 = vmatprep.subr.mxu0 0.0
        %2387 = vmatpush1.msra.mxu0 0.0
        %2388 = vmatprep.subr.mxu0 0.0
        %2389 = vmatpush1.msra.mxu0 0.0
        %2390 = vmatprep.subr.mxu0 0.0
        %2391 = vmatpush1.msra.mxu0 0.0
        %2392 = vmatprep.mubr.f32.mxu0 0.0
        %2393 = vmatmul.mubr.f32.gmra.mrb[0].mxu0 %v2326
        %v2394 = vpop.f32.mrb[0].mxu0
        %v2395 = vadd.f32 0.0, %v2394
        %v2396 = vpop.f32.mrb[0].mxu0
        %v2397 = vadd.f32 0.0, %v2396
        %2398 = vdwg.mxu0
        %2399 = vmatprep.subr.mxu0 %v2151
        %2400 = vmatpush1.msra.mxu0 %v2150
        %2401 = vmatprep.subr.mxu0 %v2155
        %2402 = vmatpush1.msra.mxu0 %v2154
        %2403 = vmatprep.subr.mxu0 0.0
        %2404 = vmatpush1.msra.mxu0 0.0
        %2405 = vmatprep.subr.mxu0 0.0
        %2406 = vmatpush1.msra.mxu0 0.0
        %2407 = vmatprep.subr.mxu0 0.0
        %2408 = vmatpush1.msra.mxu0 0.0
        %2409 = vmatprep.subr.mxu0 0.0
        %2410 = vmatpush1.msra.mxu0 0.0
        %2411 = vmatprep.subr.mxu0 0.0
        %2412 = vmatpush1.msra.mxu0 0.0
        %2413 = vmatprep.subr.mxu0 0.0
        %2414 = vmatpush1.msra.mxu0 0.0
        %2415 = vmatprep.subr.mxu0 0.0
        %2416 = vmatpush1.msra.mxu0 0.0
        %2417 = vmatprep.subr.mxu0 0.0
        %2418 = vmatpush1.msra.mxu0 0.0
        %2419 = vmatprep.subr.mxu0 0.0
        %2420 = vmatpush1.msra.mxu0 0.0
        %2421 = vmatprep.subr.mxu0 0.0
        %2422 = vmatpush1.msra.mxu0 0.0
        %2423 = vmatprep.subr.mxu0 0.0
        %2424 = vmatpush1.msra.mxu0 0.0
        %2425 = vmatprep.subr.mxu0 0.0
        %2426 = vmatpush1.msra.mxu0 0.0
        %2427 = vmatprep.subr.mxu0 0.0
        %2428 = vmatpush1.msra.mxu0 0.0
        %2429 = vmatprep.subr.mxu0 0.0
        %2430 = vmatpush1.msra.mxu0 0.0
        %2431 = vmatprep.subr.mxu0 0.0
        %2432 = vmatpush1.msra.mxu0 0.0
        %2433 = vmatprep.subr.mxu0 0.0
        %2434 = vmatpush1.msra.mxu0 0.0
        %2435 = vmatprep.subr.mxu0 0.0
        %2436 = vmatpush1.msra.mxu0 0.0
        %2437 = vmatprep.subr.mxu0 0.0
        %2438 = vmatpush1.msra.mxu0 0.0
        %2439 = vmatprep.subr.mxu0 0.0
        %2440 = vmatpush1.msra.mxu0 0.0
        %2441 = vmatprep.subr.mxu0 0.0
        %2442 = vmatpush1.msra.mxu0 0.0
        %2443 = vmatprep.subr.mxu0 0.0
        %2444 = vmatpush1.msra.mxu0 0.0
        %2445 = vmatprep.subr.mxu0 0.0
        %2446 = vmatpush1.msra.mxu0 0.0
        %2447 = vmatprep.subr.mxu0 0.0
        %2448 = vmatpush1.msra.mxu0 0.0
        %2449 = vmatprep.subr.mxu0 0.0
        %2450 = vmatpush1.msra.mxu0 0.0
        %2451 = vmatprep.subr.mxu0 0.0
        %2452 = vmatpush1.msra.mxu0 0.0
        %2453 = vmatprep.subr.mxu0 0.0
        %2454 = vmatpush1.msra.mxu0 0.0
        %2455 = vmatprep.subr.mxu0 0.0
        %2456 = vmatpush1.msra.mxu0 0.0
        %2457 = vmatprep.subr.mxu0 0.0
        %2458 = vmatpush1.msra.mxu0 0.0
        %2459 = vmatprep.subr.mxu0 0.0
        %2460 = vmatpush1.msra.mxu0 0.0
        %2461 = vmatprep.subr.mxu0 0.0
        %2462 = vmatpush1.msra.mxu0 0.0
        %2463 = vmatprep.mubr.f32.mxu0 0.0
        %2464 = vmatmul.mubr.f32.gmra.mrb[0].mxu0 %v2326
        %v2465 = vpop.f32.mrb[0].mxu0
        %v2466 = vadd.f32 0.0, %v2465
        %v2467 = vpop.f32.mrb[0].mxu0
        %v2468 = vadd.f32 0.0, %v2467
        %2469 = vdwg.mxu0
        %2470 = vrot.lane.b32.xlu0 %v2395, 16
        %v2471 = vpop.permute.xlu0 %2470
        %2472 = vrot.lane.b32.xlu0 %v2397, 16
        %v2473 = vpop.permute.xlu0 %2472
        %2474 = vrot.lane.b32.xlu0 %v2466, 16
        %v2475 = vpop.permute.xlu0 %2474
        %2476 = vrot.lane.b32.xlu0 %v2468, 16
        %v2477 = vpop.permute.xlu0 %2476
        %v2478 = vsel %vm310, %v2475, %v2477
        %v2479 = vsel %vm310, %v2473, %v2475
        %v2480 = vsel %vm310, %v2471, %v2473
        %v2481 = vsel %vm310, %v2477, %v2471
        %v2482 = vmul.f32 %v2481, %v319
        %v2483 = vmul.f32 %v2480, %v323
        %v2484 = vmul.f32 %v2479, %v327
        %v2485 = vmul.f32 %v2478, %v331
        %v2486 = vadd.f32 %v2319, %v2482
        %v2487 = vadd.f32 %v2320, %v2483
        %v2488 = vadd.f32 %v2321, %v2484
        %v2489 = vadd.f32 %v2322, %v2485
        %s2490 = scalar_lea.vmem %s4, 16
        %v2491 = vld [vmem:[%s2490] sm:$0xff]
        %v2493 = vsel %vm2157, %v2491, 0
        %2495 = vmatprep.subr.mxu0 %v2149
        %2496 = vmatpush1.msra.mxu0 %v2148
        %2497 = vmatprep.subr.mxu0 %v2153
        %2498 = vmatpush1.msra.mxu0 %v2152
        %2499 = vmatprep.subr.mxu0 0.0
        %2500 = vmatpush1.msra.mxu0 0.0
        %2501 = vmatprep.subr.mxu0 0.0
        %2502 = vmatpush1.msra.mxu0 0.0
        %2503 = vmatprep.subr.mxu0 0.0
        %2504 = vmatpush1.msra.mxu0 0.0
        %2505 = vmatprep.subr.mxu0 0.0
        %2506 = vmatpush1.msra.mxu0 0.0
        %2507 = vmatprep.subr.mxu0 0.0
        %2508 = vmatpush1.msra.mxu0 0.0
        %2509 = vmatprep.subr.mxu0 0.0
        %2510 = vmatpush1.msra.mxu0 0.0
        %2511 = vmatprep.subr.mxu0 0.0
        %2512 = vmatpush1.msra.mxu0 0.0
        %2513 = vmatprep.subr.mxu0 0.0
        %2514 = vmatpush1.msra.mxu0 0.0
        %2515 = vmatprep.subr.mxu0 0.0
        %2516 = vmatpush1.msra.mxu0 0.0
        %2517 = vmatprep.subr.mxu0 0.0
        %2518 = vmatpush1.msra.mxu0 0.0
        %2519 = vmatprep.subr.mxu0 0.0
        %2520 = vmatpush1.msra.mxu0 0.0
        %2521 = vmatprep.subr.mxu0 0.0
        %2522 = vmatpush1.msra.mxu0 0.0
        %2523 = vmatprep.subr.mxu0 0.0
        %2524 = vmatpush1.msra.mxu0 0.0
        %2525 = vmatprep.subr.mxu0 0.0
        %2526 = vmatpush1.msra.mxu0 0.0
        %2527 = vmatprep.subr.mxu0 0.0
        %2528 = vmatpush1.msra.mxu0 0.0
        %2529 = vmatprep.subr.mxu0 0.0
        %2530 = vmatpush1.msra.mxu0 0.0
        %2531 = vmatprep.subr.mxu0 0.0
        %2532 = vmatpush1.msra.mxu0 0.0
        %2533 = vmatprep.subr.mxu0 0.0
        %2534 = vmatpush1.msra.mxu0 0.0
        %2535 = vmatprep.subr.mxu0 0.0
        %2536 = vmatpush1.msra.mxu0 0.0
        %2537 = vmatprep.subr.mxu0 0.0
        %2538 = vmatpush1.msra.mxu0 0.0
        %2539 = vmatprep.subr.mxu0 0.0
        %2540 = vmatpush1.msra.mxu0 0.0
        %2541 = vmatprep.subr.mxu0 0.0
        %2542 = vmatpush1.msra.mxu0 0.0
        %2543 = vmatprep.subr.mxu0 0.0
        %2544 = vmatpush1.msra.mxu0 0.0
        %2545 = vmatprep.subr.mxu0 0.0
        %2546 = vmatpush1.msra.mxu0 0.0
        %2547 = vmatprep.subr.mxu0 0.0
        %2548 = vmatpush1.msra.mxu0 0.0
        %2549 = vmatprep.subr.mxu0 0.0
        %2550 = vmatpush1.msra.mxu0 0.0
        %2551 = vmatprep.subr.mxu0 0.0
        %2552 = vmatpush1.msra.mxu0 0.0
        %2553 = vmatprep.subr.mxu0 0.0
        %2554 = vmatpush1.msra.mxu0 0.0
        %2555 = vmatprep.subr.mxu0 0.0
        %2556 = vmatpush1.msra.mxu0 0.0
        %2557 = vmatprep.subr.mxu0 0.0
        %2558 = vmatpush1.msra.mxu0 0.0
        %2559 = vmatprep.mubr.f32.mxu0 0.0
        %2560 = vmatmul.mubr.f32.gmra.mrb[0].mxu0 %v2493
        %v2561 = vpop.f32.mrb[0].mxu0
        %v2562 = vadd.f32 0.0, %v2561
        %v2563 = vpop.f32.mrb[0].mxu0
        %v2564 = vadd.f32 0.0, %v2563
        %2565 = vdwg.mxu0
        %2566 = vmatprep.subr.mxu0 %v2151
        %2567 = vmatpush1.msra.mxu0 %v2150
        %2568 = vmatprep.subr.mxu0 %v2155
        %2569 = vmatpush1.msra.mxu0 %v2154
        %2570 = vmatprep.subr.mxu0 0.0
        %2571 = vmatpush1.msra.mxu0 0.0
        %2572 = vmatprep.subr.mxu0 0.0
        %2573 = vmatpush1.msra.mxu0 0.0
        %2574 = vmatprep.subr.mxu0 0.0
        %2575 = vmatpush1.msra.mxu0 0.0
        %2576 = vmatprep.subr.mxu0 0.0
        %2577 = vmatpush1.msra.mxu0 0.0
        %2578 = vmatprep.subr.mxu0 0.0
        %2579 = vmatpush1.msra.mxu0 0.0
        %2580 = vmatprep.subr.mxu0 0.0
        %2581 = vmatpush1.msra.mxu0 0.0
        %2582 = vmatprep.subr.mxu0 0.0
        %2583 = vmatpush1.msra.mxu0 0.0
        %2584 = vmatprep.subr.mxu0 0.0
        %2585 = vmatpush1.msra.mxu0 0.0
        %2586 = vmatprep.subr.mxu0 0.0
        %2587 = vmatpush1.msra.mxu0 0.0
        %2588 = vmatprep.subr.mxu0 0.0
        %2589 = vmatpush1.msra.mxu0 0.0
        %2590 = vmatprep.subr.mxu0 0.0
        %2591 = vmatpush1.msra.mxu0 0.0
        %2592 = vmatprep.subr.mxu0 0.0
        %2593 = vmatpush1.msra.mxu0 0.0
        %2594 = vmatprep.subr.mxu0 0.0
        %2595 = vmatpush1.msra.mxu0 0.0
        %2596 = vmatprep.subr.mxu0 0.0
        %2597 = vmatpush1.msra.mxu0 0.0
        %2598 = vmatprep.subr.mxu0 0.0
        %2599 = vmatpush1.msra.mxu0 0.0
        %2600 = vmatprep.subr.mxu0 0.0
        %2601 = vmatpush1.msra.mxu0 0.0
        %2602 = vmatprep.subr.mxu0 0.0
        %2603 = vmatpush1.msra.mxu0 0.0
        %2604 = vmatprep.subr.mxu0 0.0
        %2605 = vmatpush1.msra.mxu0 0.0
        %2606 = vmatprep.subr.mxu0 0.0
        %2607 = vmatpush1.msra.mxu0 0.0
        %2608 = vmatprep.subr.mxu0 0.0
        %2609 = vmatpush1.msra.mxu0 0.0
        %2610 = vmatprep.subr.mxu0 0.0
        %2611 = vmatpush1.msra.mxu0 0.0
        %2612 = vmatprep.subr.mxu0 0.0
        %2613 = vmatpush1.msra.mxu0 0.0
        %2614 = vmatprep.subr.mxu0 0.0
        %2615 = vmatpush1.msra.mxu0 0.0
        %2616 = vmatprep.subr.mxu0 0.0
        %2617 = vmatpush1.msra.mxu0 0.0
        %2618 = vmatprep.subr.mxu0 0.0
        %2619 = vmatpush1.msra.mxu0 0.0
        %2620 = vmatprep.subr.mxu0 0.0
        %2621 = vmatpush1.msra.mxu0 0.0
        %2622 = vmatprep.subr.mxu0 0.0
        %2623 = vmatpush1.msra.mxu0 0.0
        %2624 = vmatprep.subr.mxu0 0.0
        %2625 = vmatpush1.msra.mxu0 0.0
        %2626 = vmatprep.subr.mxu0 0.0
        %2627 = vmatpush1.msra.mxu0 0.0
        %2628 = vmatprep.subr.mxu0 0.0
        %2629 = vmatpush1.msra.mxu0 0.0
        %2630 = vmatprep.mubr.f32.mxu0 0.0
        %2631 = vmatmul.mubr.f32.gmra.mrb[0].mxu0 %v2493
        %v2632 = vpop.f32.mrb[0].mxu0
        %v2633 = vadd.f32 0.0, %v2632
        %v2634 = vpop.f32.mrb[0].mxu0
        %v2635 = vadd.f32 0.0, %v2634
        %2636 = vdwg.mxu0
        %2637 = vrot.lane.b32.xlu0 %v2562, 15
        %v2638 = vpop.permute.xlu0 %2637
        %2639 = vrot.lane.b32.xlu0 %v2564, 15
        %v2640 = vpop.permute.xlu0 %2639
        %2641 = vrot.lane.b32.xlu0 %v2633, 15
        %v2642 = vpop.permute.xlu0 %2641
        %2643 = vrot.lane.b32.xlu0 %v2635, 15
        %v2644 = vpop.permute.xlu0 %2643
        %v2645 = vsel %vm674, %v2642, %v2644
        %v2646 = vsel %vm674, %v2640, %v2642
        %v2647 = vsel %vm674, %v2638, %v2640
        %v2648 = vsel %vm674, %v2644, %v2638
        %v2649 = vmul.f32 %v2648, %v683
        %v2650 = vmul.f32 %v2647, %v687
        %v2651 = vmul.f32 %v2646, %v691
        %v2652 = vmul.f32 %v2645, %v695
        %v2653 = vadd.f32 %v2486, %v2649
        %v2654 = vadd.f32 %v2487, %v2650
        %v2655 = vadd.f32 %v2488, %v2651
        %v2656 = vadd.f32 %v2489, %v2652
        %s2657 = scalar_lea.vmem %s4, 24
        %v2658 = vld [vmem:[%s2657] sm:$0xff]
        %v2660 = vsel %vm2157, %v2658, 0
        %2662 = vmatprep.subr.mxu0 %v2149
        %2663 = vmatpush1.msra.mxu0 %v2148
        %2664 = vmatprep.subr.mxu0 %v2153
        %2665 = vmatpush1.msra.mxu0 %v2152
        %2666 = vmatprep.subr.mxu0 0.0
        %2667 = vmatpush1.msra.mxu0 0.0
        %2668 = vmatprep.subr.mxu0 0.0
        %2669 = vmatpush1.msra.mxu0 0.0
        %2670 = vmatprep.subr.mxu0 0.0
        %2671 = vmatpush1.msra.mxu0 0.0
        %2672 = vmatprep.subr.mxu0 0.0
        %2673 = vmatpush1.msra.mxu0 0.0
        %2674 = vmatprep.subr.mxu0 0.0
        %2675 = vmatpush1.msra.mxu0 0.0
        %2676 = vmatprep.subr.mxu0 0.0
        %2677 = vmatpush1.msra.mxu0 0.0
        %2678 = vmatprep.subr.mxu0 0.0
        %2679 = vmatpush1.msra.mxu0 0.0
        %2680 = vmatprep.subr.mxu0 0.0
        %2681 = vmatpush1.msra.mxu0 0.0
        %2682 = vmatprep.subr.mxu0 0.0
        %2683 = vmatpush1.msra.mxu0 0.0
        %2684 = vmatprep.subr.mxu0 0.0
        %2685 = vmatpush1.msra.mxu0 0.0
        %2686 = vmatprep.subr.mxu0 0.0
        %2687 = vmatpush1.msra.mxu0 0.0
        %2688 = vmatprep.subr.mxu0 0.0
        %2689 = vmatpush1.msra.mxu0 0.0
        %2690 = vmatprep.subr.mxu0 0.0
        %2691 = vmatpush1.msra.mxu0 0.0
        %2692 = vmatprep.subr.mxu0 0.0
        %2693 = vmatpush1.msra.mxu0 0.0
        %2694 = vmatprep.subr.mxu0 0.0
        %2695 = vmatpush1.msra.mxu0 0.0
        %2696 = vmatprep.subr.mxu0 0.0
        %2697 = vmatpush1.msra.mxu0 0.0
        %2698 = vmatprep.subr.mxu0 0.0
        %2699 = vmatpush1.msra.mxu0 0.0
        %2700 = vmatprep.subr.mxu0 0.0
        %2701 = vmatpush1.msra.mxu0 0.0
        %2702 = vmatprep.subr.mxu0 0.0
        %2703 = vmatpush1.msra.mxu0 0.0
        %2704 = vmatprep.subr.mxu0 0.0
        %2705 = vmatpush1.msra.mxu0 0.0
        %2706 = vmatprep.subr.mxu0 0.0
        %2707 = vmatpush1.msra.mxu0 0.0
        %2708 = vmatprep.subr.mxu0 0.0
        %2709 = vmatpush1.msra.mxu0 0.0
        %2710 = vmatprep.subr.mxu0 0.0
        %2711 = vmatpush1.msra.mxu0 0.0
        %2712 = vmatprep.subr.mxu0 0.0
        %2713 = vmatpush1.msra.mxu0 0.0
        %2714 = vmatprep.subr.mxu0 0.0
        %2715 = vmatpush1.msra.mxu0 0.0
        %2716 = vmatprep.subr.mxu0 0.0
        %2717 = vmatpush1.msra.mxu0 0.0
        %2718 = vmatprep.subr.mxu0 0.0
        %2719 = vmatpush1.msra.mxu0 0.0
        %2720 = vmatprep.subr.mxu0 0.0
        %2721 = vmatpush1.msra.mxu0 0.0
        %2722 = vmatprep.subr.mxu0 0.0
        %2723 = vmatpush1.msra.mxu0 0.0
        %2724 = vmatprep.subr.mxu0 0.0
        %2725 = vmatpush1.msra.mxu0 0.0
        %2726 = vmatprep.mubr.f32.mxu0 0.0
        %2727 = vmatmul.mubr.f32.gmra.mrb[0].mxu0 %v2660
        %v2728 = vpop.f32.mrb[0].mxu0
        %v2729 = vadd.f32 0.0, %v2728
        %v2730 = vpop.f32.mrb[0].mxu0
        %v2731 = vadd.f32 0.0, %v2730
        %2732 = vdwg.mxu0
        %2733 = vmatprep.subr.mxu0 %v2151
        %2734 = vmatpush1.msra.mxu0 %v2150
        %2735 = vmatprep.subr.mxu0 %v2155
        %2736 = vmatpush1.msra.mxu0 %v2154
        %2737 = vmatprep.subr.mxu0 0.0
        %2738 = vmatpush1.msra.mxu0 0.0
        %2739 = vmatprep.subr.mxu0 0.0
        %2740 = vmatpush1.msra.mxu0 0.0
        %2741 = vmatprep.subr.mxu0 0.0
        %2742 = vmatpush1.msra.mxu0 0.0
        %2743 = vmatprep.subr.mxu0 0.0
        %2744 = vmatpush1.msra.mxu0 0.0
        %2745 = vmatprep.subr.mxu0 0.0
        %2746 = vmatpush1.msra.mxu0 0.0
        %2747 = vmatprep.subr.mxu0 0.0
        %2748 = vmatpush1.msra.mxu0 0.0
        %2749 = vmatprep.subr.mxu0 0.0
        %2750 = vmatpush1.msra.mxu0 0.0
        %2751 = vmatprep.subr.mxu0 0.0
        %2752 = vmatpush1.msra.mxu0 0.0
        %2753 = vmatprep.subr.mxu0 0.0
        %2754 = vmatpush1.msra.mxu0 0.0
        %2755 = vmatprep.subr.mxu0 0.0
        %2756 = vmatpush1.msra.mxu0 0.0
        %2757 = vmatprep.subr.mxu0 0.0
        %2758 = vmatpush1.msra.mxu0 0.0
        %2759 = vmatprep.subr.mxu0 0.0
        %2760 = vmatpush1.msra.mxu0 0.0
        %2761 = vmatprep.subr.mxu0 0.0
        %2762 = vmatpush1.msra.mxu0 0.0
        %2763 = vmatprep.subr.mxu0 0.0
        %2764 = vmatpush1.msra.mxu0 0.0
        %2765 = vmatprep.subr.mxu0 0.0
        %2766 = vmatpush1.msra.mxu0 0.0
        %2767 = vmatprep.subr.mxu0 0.0
        %2768 = vmatpush1.msra.mxu0 0.0
        %2769 = vmatprep.subr.mxu0 0.0
        %2770 = vmatpush1.msra.mxu0 0.0
        %2771 = vmatprep.subr.mxu0 0.0
        %2772 = vmatpush1.msra.mxu0 0.0
        %2773 = vmatprep.subr.mxu0 0.0
        %2774 = vmatpush1.msra.mxu0 0.0
        %2775 = vmatprep.subr.mxu0 0.0
        %2776 = vmatpush1.msra.mxu0 0.0
        %2777 = vmatprep.subr.mxu0 0.0
        %2778 = vmatpush1.msra.mxu0 0.0
        %2779 = vmatprep.subr.mxu0 0.0
        %2780 = vmatpush1.msra.mxu0 0.0
        %2781 = vmatprep.subr.mxu0 0.0
        %2782 = vmatpush1.msra.mxu0 0.0
        %2783 = vmatprep.subr.mxu0 0.0
        %2784 = vmatpush1.msra.mxu0 0.0
        %2785 = vmatprep.subr.mxu0 0.0
        %2786 = vmatpush1.msra.mxu0 0.0
        %2787 = vmatprep.subr.mxu0 0.0
        %2788 = vmatpush1.msra.mxu0 0.0
        %2789 = vmatprep.subr.mxu0 0.0
        %2790 = vmatpush1.msra.mxu0 0.0
        %2791 = vmatprep.subr.mxu0 0.0
        %2792 = vmatpush1.msra.mxu0 0.0
        %2793 = vmatprep.subr.mxu0 0.0
        %2794 = vmatpush1.msra.mxu0 0.0
        %2795 = vmatprep.subr.mxu0 0.0
        %2796 = vmatpush1.msra.mxu0 0.0
        %2797 = vmatprep.mubr.f32.mxu0 0.0
        %2798 = vmatmul.mubr.f32.gmra.mrb[0].mxu0 %v2660
        %v2799 = vpop.f32.mrb[0].mxu0
        %v2800 = vadd.f32 0.0, %v2799
        %v2801 = vpop.f32.mrb[0].mxu0
        %v2802 = vadd.f32 0.0, %v2801
        %2803 = vdwg.mxu0
        %2804 = vrot.lane.b32.xlu0 %v2729, 1
        %v2805 = vpop.permute.xlu0 %2804
        %2806 = vrot.lane.b32.xlu0 %v2731, 1
        %v2807 = vpop.permute.xlu0 %2806
        %2808 = vrot.lane.b32.xlu0 %v2800, 1
        %v2809 = vpop.permute.xlu0 %2808
        %2810 = vrot.lane.b32.xlu0 %v2802, 1
        %v2811 = vpop.permute.xlu0 %2810
        %v2812 = vsel %vm885, %v2809, %v2811
        %v2813 = vsel %vm885, %v2807, %v2809
        %v2814 = vsel %vm885, %v2805, %v2807
        %v2815 = vsel %vm885, %v2811, %v2805
        %v2816 = vmul.f32 %v2815, %v894
        %v2817 = vmul.f32 %v2814, %v898
        %v2818 = vmul.f32 %v2813, %v902
        %v2819 = vmul.f32 %v2812, %v906
        %v2820 = vadd.f32 %v2653, %v2816
        %v2821 = vadd.f32 %v2654, %v2817
        %v2822 = vadd.f32 %v2655, %v2818
        %v2823 = vadd.f32 %v2656, %v2819
        %s2824 = scalar_lea.vmem %s4, 32
        %v2825 = vld [vmem:[%s2824] sm:$0xff]
        %v2827 = vsel %vm2157, %v2825, 0
        %2829 = vmatprep.subr.mxu0 %v2149
        %2830 = vmatpush1.msra.mxu0 %v2148
        %2831 = vmatprep.subr.mxu0 %v2153
        %2832 = vmatpush1.msra.mxu0 %v2152
        %2833 = vmatprep.subr.mxu0 0.0
        %2834 = vmatpush1.msra.mxu0 0.0
        %2835 = vmatprep.subr.mxu0 0.0
        %2836 = vmatpush1.msra.mxu0 0.0
        %2837 = vmatprep.subr.mxu0 0.0
        %2838 = vmatpush1.msra.mxu0 0.0
        %2839 = vmatprep.subr.mxu0 0.0
        %2840 = vmatpush1.msra.mxu0 0.0
        %2841 = vmatprep.subr.mxu0 0.0
        %2842 = vmatpush1.msra.mxu0 0.0
        %2843 = vmatprep.subr.mxu0 0.0
        %2844 = vmatpush1.msra.mxu0 0.0
        %2845 = vmatprep.subr.mxu0 0.0
        %2846 = vmatpush1.msra.mxu0 0.0
        %2847 = vmatprep.subr.mxu0 0.0
        %2848 = vmatpush1.msra.mxu0 0.0
        %2849 = vmatprep.subr.mxu0 0.0
        %2850 = vmatpush1.msra.mxu0 0.0
        %2851 = vmatprep.subr.mxu0 0.0
        %2852 = vmatpush1.msra.mxu0 0.0
        %2853 = vmatprep.subr.mxu0 0.0
        %2854 = vmatpush1.msra.mxu0 0.0
        %2855 = vmatprep.subr.mxu0 0.0
        %2856 = vmatpush1.msra.mxu0 0.0
        %2857 = vmatprep.subr.mxu0 0.0
        %2858 = vmatpush1.msra.mxu0 0.0
        %2859 = vmatprep.subr.mxu0 0.0
        %2860 = vmatpush1.msra.mxu0 0.0
        %2861 = vmatprep.subr.mxu0 0.0
        %2862 = vmatpush1.msra.mxu0 0.0
        %2863 = vmatprep.subr.mxu0 0.0
        %2864 = vmatpush1.msra.mxu0 0.0
        %2865 = vmatprep.subr.mxu0 0.0
        %2866 = vmatpush1.msra.mxu0 0.0
        %2867 = vmatprep.subr.mxu0 0.0
        %2868 = vmatpush1.msra.mxu0 0.0
        %2869 = vmatprep.subr.mxu0 0.0
        %2870 = vmatpush1.msra.mxu0 0.0
        %2871 = vmatprep.subr.mxu0 0.0
        %2872 = vmatpush1.msra.mxu0 0.0
        %2873 = vmatprep.subr.mxu0 0.0
        %2874 = vmatpush1.msra.mxu0 0.0
        %2875 = vmatprep.subr.mxu0 0.0
        %2876 = vmatpush1.msra.mxu0 0.0
        %2877 = vmatprep.subr.mxu0 0.0
        %2878 = vmatpush1.msra.mxu0 0.0
        %2879 = vmatprep.subr.mxu0 0.0
        %2880 = vmatpush1.msra.mxu0 0.0
        %2881 = vmatprep.subr.mxu0 0.0
        %2882 = vmatpush1.msra.mxu0 0.0
        %2883 = vmatprep.subr.mxu0 0.0
        %2884 = vmatpush1.msra.mxu0 0.0
        %2885 = vmatprep.subr.mxu0 0.0
        %2886 = vmatpush1.msra.mxu0 0.0
        %2887 = vmatprep.subr.mxu0 0.0
        %2888 = vmatpush1.msra.mxu0 0.0
        %2889 = vmatprep.subr.mxu0 0.0
        %2890 = vmatpush1.msra.mxu0 0.0
        %2891 = vmatprep.subr.mxu0 0.0
        %2892 = vmatpush1.msra.mxu0 0.0
        %2893 = vmatprep.mubr.f32.mxu0 0.0
        %2894 = vmatmul.mubr.f32.gmra.mrb[0].mxu0 %v2827
        %v2895 = vpop.f32.mrb[0].mxu0
        %v2896 = vadd.f32 0.0, %v2895
        %v2897 = vpop.f32.mrb[0].mxu0
        %v2898 = vadd.f32 0.0, %v2897
        %2899 = vdwg.mxu0
        %2900 = vmatprep.subr.mxu0 %v2151
        %2901 = vmatpush1.msra.mxu0 %v2150
        %2902 = vmatprep.subr.mxu0 %v2155
        %2903 = vmatpush1.msra.mxu0 %v2154
        %2904 = vmatprep.subr.mxu0 0.0
        %2905 = vmatpush1.msra.mxu0 0.0
        %2906 = vmatprep.subr.mxu0 0.0
        %2907 = vmatpush1.msra.mxu0 0.0
        %2908 = vmatprep.subr.mxu0 0.0
        %2909 = vmatpush1.msra.mxu0 0.0
        %2910 = vmatprep.subr.mxu0 0.0
        %2911 = vmatpush1.msra.mxu0 0.0
        %2912 = vmatprep.subr.mxu0 0.0
        %2913 = vmatpush1.msra.mxu0 0.0
        %2914 = vmatprep.subr.mxu0 0.0
        %2915 = vmatpush1.msra.mxu0 0.0
        %2916 = vmatprep.subr.mxu0 0.0
        %2917 = vmatpush1.msra.mxu0 0.0
        %2918 = vmatprep.subr.mxu0 0.0
        %2919 = vmatpush1.msra.mxu0 0.0
        %2920 = vmatprep.subr.mxu0 0.0
        %2921 = vmatpush1.msra.mxu0 0.0
        %2922 = vmatprep.subr.mxu0 0.0
        %2923 = vmatpush1.msra.mxu0 0.0
        %2924 = vmatprep.subr.mxu0 0.0
        %2925 = vmatpush1.msra.mxu0 0.0
        %2926 = vmatprep.subr.mxu0 0.0
        %2927 = vmatpush1.msra.mxu0 0.0
        %2928 = vmatprep.subr.mxu0 0.0
        %2929 = vmatpush1.msra.mxu0 0.0
        %2930 = vmatprep.subr.mxu0 0.0
        %2931 = vmatpush1.msra.mxu0 0.0
        %2932 = vmatprep.subr.mxu0 0.0
        %2933 = vmatpush1.msra.mxu0 0.0
        %2934 = vmatprep.subr.mxu0 0.0
        %2935 = vmatpush1.msra.mxu0 0.0
        %2936 = vmatprep.subr.mxu0 0.0
        %2937 = vmatpush1.msra.mxu0 0.0
        %2938 = vmatprep.subr.mxu0 0.0
        %2939 = vmatpush1.msra.mxu0 0.0
        %2940 = vmatprep.subr.mxu0 0.0
        %2941 = vmatpush1.msra.mxu0 0.0
        %2942 = vmatprep.subr.mxu0 0.0
        %2943 = vmatpush1.msra.mxu0 0.0
        %2944 = vmatprep.subr.mxu0 0.0
        %2945 = vmatpush1.msra.mxu0 0.0
        %2946 = vmatprep.subr.mxu0 0.0
        %2947 = vmatpush1.msra.mxu0 0.0
        %2948 = vmatprep.subr.mxu0 0.0
        %2949 = vmatpush1.msra.mxu0 0.0
        %2950 = vmatprep.subr.mxu0 0.0
        %2951 = vmatpush1.msra.mxu0 0.0
        %2952 = vmatprep.subr.mxu0 0.0
        %2953 = vmatpush1.msra.mxu0 0.0
        %2954 = vmatprep.subr.mxu0 0.0
        %2955 = vmatpush1.msra.mxu0 0.0
        %2956 = vmatprep.subr.mxu0 0.0
        %2957 = vmatpush1.msra.mxu0 0.0
        %2958 = vmatprep.subr.mxu0 0.0
        %2959 = vmatpush1.msra.mxu0 0.0
        %2960 = vmatprep.subr.mxu0 0.0
        %2961 = vmatpush1.msra.mxu0 0.0
        %2962 = vmatprep.subr.mxu0 0.0
        %2963 = vmatpush1.msra.mxu0 0.0
        %2964 = vmatprep.mubr.f32.mxu0 0.0
        %2965 = vmatmul.mubr.f32.gmra.mrb[0].mxu0 %v2827
        %v2966 = vpop.f32.mrb[0].mxu0
        %v2967 = vadd.f32 0.0, %v2966
        %v2968 = vpop.f32.mrb[0].mxu0
        %v2969 = vadd.f32 0.0, %v2968
        %2970 = vdwg.mxu0
        %v2971 = vmul.f32 %v2896, %v1092
        %v2972 = vmul.f32 %v2898, %v1096
        %v2973 = vmul.f32 %v2967, %v1100
        %v2974 = vmul.f32 %v2969, %v1104
        %v2975 = vadd.f32 %v2820, %v2971
        %v2976 = vadd.f32 %v2821, %v2972
        %v2977 = vadd.f32 %v2822, %v2973
        %v2978 = vadd.f32 %v2823, %v2974
        %s2979 = scalar_lea.vmem %s4, 40
        %v2980 = vld [vmem:[%s2979] sm:$0xff]
        %v2982 = vsel %vm2157, %v2980, 0
        %2984 = vmatprep.subr.mxu0 %v2149
        %2985 = vmatpush1.msra.mxu0 %v2148
        %2986 = vmatprep.subr.mxu0 %v2153
        %2987 = vmatpush1.msra.mxu0 %v2152
        %2988 = vmatprep.subr.mxu0 0.0
        %2989 = vmatpush1.msra.mxu0 0.0
        %2990 = vmatprep.subr.mxu0 0.0
        %2991 = vmatpush1.msra.mxu0 0.0
        %2992 = vmatprep.subr.mxu0 0.0
        %2993 = vmatpush1.msra.mxu0 0.0
        %2994 = vmatprep.subr.mxu0 0.0
        %2995 = vmatpush1.msra.mxu0 0.0
        %2996 = vmatprep.subr.mxu0 0.0
        %2997 = vmatpush1.msra.mxu0 0.0
        %2998 = vmatprep.subr.mxu0 0.0
        %2999 = vmatpush1.msra.mxu0 0.0
        %3000 = vmatprep.subr.mxu0 0.0
        %3001 = vmatpush1.msra.mxu0 0.0
        %3002 = vmatprep.subr.mxu0 0.0
        %3003 = vmatpush1.msra.mxu0 0.0
        %3004 = vmatprep.subr.mxu0 0.0
        %3005 = vmatpush1.msra.mxu0 0.0
        %3006 = vmatprep.subr.mxu0 0.0
        %3007 = vmatpush1.msra.mxu0 0.0
        %3008 = vmatprep.subr.mxu0 0.0
        %3009 = vmatpush1.msra.mxu0 0.0
        %3010 = vmatprep.subr.mxu0 0.0
        %3011 = vmatpush1.msra.mxu0 0.0
        %3012 = vmatprep.subr.mxu0 0.0
        %3013 = vmatpush1.msra.mxu0 0.0
        %3014 = vmatprep.subr.mxu0 0.0
        %3015 = vmatpush1.msra.mxu0 0.0
        %3016 = vmatprep.subr.mxu0 0.0
        %3017 = vmatpush1.msra.mxu0 0.0
        %3018 = vmatprep.subr.mxu0 0.0
        %3019 = vmatpush1.msra.mxu0 0.0
        %3020 = vmatprep.subr.mxu0 0.0
        %3021 = vmatpush1.msra.mxu0 0.0
        %3022 = vmatprep.subr.mxu0 0.0
        %3023 = vmatpush1.msra.mxu0 0.0
        %3024 = vmatprep.subr.mxu0 0.0
        %3025 = vmatpush1.msra.mxu0 0.0
        %3026 = vmatprep.subr.mxu0 0.0
        %3027 = vmatpush1.msra.mxu0 0.0
        %3028 = vmatprep.subr.mxu0 0.0
        %3029 = vmatpush1.msra.mxu0 0.0
        %3030 = vmatprep.subr.mxu0 0.0
        %3031 = vmatpush1.msra.mxu0 0.0
        %3032 = vmatprep.subr.mxu0 0.0
        %3033 = vmatpush1.msra.mxu0 0.0
        %3034 = vmatprep.subr.mxu0 0.0
        %3035 = vmatpush1.msra.mxu0 0.0
        %3036 = vmatprep.subr.mxu0 0.0
        %3037 = vmatpush1.msra.mxu0 0.0
        %3038 = vmatprep.subr.mxu0 0.0
        %3039 = vmatpush1.msra.mxu0 0.0
        %3040 = vmatprep.subr.mxu0 0.0
        %3041 = vmatpush1.msra.mxu0 0.0
        %3042 = vmatprep.subr.mxu0 0.0
        %3043 = vmatpush1.msra.mxu0 0.0
        %3044 = vmatprep.subr.mxu0 0.0
        %3045 = vmatpush1.msra.mxu0 0.0
        %3046 = vmatprep.subr.mxu0 0.0
        %3047 = vmatpush1.msra.mxu0 0.0
        %3048 = vmatprep.mubr.f32.mxu0 0.0
        %3049 = vmatmul.mubr.f32.gmra.mrb[0].mxu0 %v2982
        %v3050 = vpop.f32.mrb[0].mxu0
        %v3051 = vadd.f32 0.0, %v3050
        %v3052 = vpop.f32.mrb[0].mxu0
        %v3053 = vadd.f32 0.0, %v3052
        %3054 = vdwg.mxu0
        %3055 = vmatprep.subr.mxu0 %v2151
        %3056 = vmatpush1.msra.mxu0 %v2150
        %3057 = vmatprep.subr.mxu0 %v2155
        %3058 = vmatpush1.msra.mxu0 %v2154
        %3059 = vmatprep.subr.mxu0 0.0
        %3060 = vmatpush1.msra.mxu0 0.0
        %3061 = vmatprep.subr.mxu0 0.0
        %3062 = vmatpush1.msra.mxu0 0.0
        %3063 = vmatprep.subr.mxu0 0.0
        %3064 = vmatpush1.msra.mxu0 0.0
        %3065 = vmatprep.subr.mxu0 0.0
        %3066 = vmatpush1.msra.mxu0 0.0
        %3067 = vmatprep.subr.mxu0 0.0
        %3068 = vmatpush1.msra.mxu0 0.0
        %3069 = vmatprep.subr.mxu0 0.0
        %3070 = vmatpush1.msra.mxu0 0.0
        %3071 = vmatprep.subr.mxu0 0.0
        %3072 = vmatpush1.msra.mxu0 0.0
        %3073 = vmatprep.subr.mxu0 0.0
        %3074 = vmatpush1.msra.mxu0 0.0
        %3075 = vmatprep.subr.mxu0 0.0
        %3076 = vmatpush1.msra.mxu0 0.0
        %3077 = vmatprep.subr.mxu0 0.0
        %3078 = vmatpush1.msra.mxu0 0.0
        %3079 = vmatprep.subr.mxu0 0.0
        %3080 = vmatpush1.msra.mxu0 0.0
        %3081 = vmatprep.subr.mxu0 0.0
        %3082 = vmatpush1.msra.mxu0 0.0
        %3083 = vmatprep.subr.mxu0 0.0
        %3084 = vmatpush1.msra.mxu0 0.0
        %3085 = vmatprep.subr.mxu0 0.0
        %3086 = vmatpush1.msra.mxu0 0.0
        %3087 = vmatprep.subr.mxu0 0.0
        %3088 = vmatpush1.msra.mxu0 0.0
        %3089 = vmatprep.subr.mxu0 0.0
        %3090 = vmatpush1.msra.mxu0 0.0
        %3091 = vmatprep.subr.mxu0 0.0
        %3092 = vmatpush1.msra.mxu0 0.0
        %3093 = vmatprep.subr.mxu0 0.0
        %3094 = vmatpush1.msra.mxu0 0.0
        %3095 = vmatprep.subr.mxu0 0.0
        %3096 = vmatpush1.msra.mxu0 0.0
        %3097 = vmatprep.subr.mxu0 0.0
        %3098 = vmatpush1.msra.mxu0 0.0
        %3099 = vmatprep.subr.mxu0 0.0
        %3100 = vmatpush1.msra.mxu0 0.0
        %3101 = vmatprep.subr.mxu0 0.0
        %3102 = vmatpush1.msra.mxu0 0.0
        %3103 = vmatprep.subr.mxu0 0.0
        %3104 = vmatpush1.msra.mxu0 0.0
        %3105 = vmatprep.subr.mxu0 0.0
        %3106 = vmatpush1.msra.mxu0 0.0
        %3107 = vmatprep.subr.mxu0 0.0
        %3108 = vmatpush1.msra.mxu0 0.0
        %3109 = vmatprep.subr.mxu0 0.0
        %3110 = vmatpush1.msra.mxu0 0.0
        %3111 = vmatprep.subr.mxu0 0.0
        %3112 = vmatpush1.msra.mxu0 0.0
        %3113 = vmatprep.subr.mxu0 0.0
        %3114 = vmatpush1.msra.mxu0 0.0
        %3115 = vmatprep.subr.mxu0 0.0
        %3116 = vmatpush1.msra.mxu0 0.0
        %3117 = vmatprep.subr.mxu0 0.0
        %3118 = vmatpush1.msra.mxu0 0.0
        %3119 = vmatprep.mubr.f32.mxu0 0.0
        %3120 = vmatmul.mubr.f32.gmra.mrb[0].mxu0 %v2982
        %v3121 = vpop.f32.mrb[0].mxu0
        %v3122 = vadd.f32 0.0, %v3121
        %v3123 = vpop.f32.mrb[0].mxu0
        %v3124 = vadd.f32 0.0, %v3123
        %3125 = vdwg.mxu0
        %3126 = vrot.lane.b32.xlu0 %v3051, 127
        %v3127 = vpop.permute.xlu0 %3126
        %3128 = vrot.lane.b32.xlu0 %v3053, 127
        %v3129 = vpop.permute.xlu0 %3128
        %3130 = vrot.lane.b32.xlu0 %v3122, 127
        %v3131 = vpop.permute.xlu0 %3130
        %3132 = vrot.lane.b32.xlu0 %v3124, 127
        %v3133 = vpop.permute.xlu0 %3132
        %v3134 = vsel %vm1294, %v3131, %v3133
        %v3135 = vsel %vm1294, %v3129, %v3131
        %v3136 = vsel %vm1294, %v3127, %v3129
        %v3137 = vsel %vm1294, %v3133, %v3127
        %v3138 = vmul.f32 %v3136, %v1303
        %v3139 = vmul.f32 %v3135, %v1307
        %v3140 = vmul.f32 %v3134, %v1311
        %v3141 = vmul.f32 %v3137, %v1315
        %v3142 = vadd.f32 %v2975, %v3138
        %v3143 = vadd.f32 %v2976, %v3139
        %v3144 = vadd.f32 %v2977, %v3140
        %v3145 = vadd.f32 %v2978, %v3141
        %s3146 = scalar_lea.vmem %s4, 48
        %v3147 = vld [vmem:[%s3146] sm:$0xff]
        %v3149 = vsel %vm2157, %v3147, 0
        %3151 = vmatprep.subr.mxu0 %v2149
        %3152 = vmatpush1.msra.mxu0 %v2148
        %3153 = vmatprep.subr.mxu0 %v2153
        %3154 = vmatpush1.msra.mxu0 %v2152
        %3155 = vmatprep.subr.mxu0 0.0
        %3156 = vmatpush1.msra.mxu0 0.0
        %3157 = vmatprep.subr.mxu0 0.0
        %3158 = vmatpush1.msra.mxu0 0.0
        %3159 = vmatprep.subr.mxu0 0.0
        %3160 = vmatpush1.msra.mxu0 0.0
        %3161 = vmatprep.subr.mxu0 0.0
        %3162 = vmatpush1.msra.mxu0 0.0
        %3163 = vmatprep.subr.mxu0 0.0
        %3164 = vmatpush1.msra.mxu0 0.0
        %3165 = vmatprep.subr.mxu0 0.0
        %3166 = vmatpush1.msra.mxu0 0.0
        %3167 = vmatprep.subr.mxu0 0.0
        %3168 = vmatpush1.msra.mxu0 0.0
        %3169 = vmatprep.subr.mxu0 0.0
        %3170 = vmatpush1.msra.mxu0 0.0
        %3171 = vmatprep.subr.mxu0 0.0
        %3172 = vmatpush1.msra.mxu0 0.0
        %3173 = vmatprep.subr.mxu0 0.0
        %3174 = vmatpush1.msra.mxu0 0.0
        %3175 = vmatprep.subr.mxu0 0.0
        %3176 = vmatpush1.msra.mxu0 0.0
        %3177 = vmatprep.subr.mxu0 0.0
        %3178 = vmatpush1.msra.mxu0 0.0
        %3179 = vmatprep.subr.mxu0 0.0
        %3180 = vmatpush1.msra.mxu0 0.0
        %3181 = vmatprep.subr.mxu0 0.0
        %3182 = vmatpush1.msra.mxu0 0.0
        %3183 = vmatprep.subr.mxu0 0.0
        %3184 = vmatpush1.msra.mxu0 0.0
        %3185 = vmatprep.subr.mxu0 0.0
        %3186 = vmatpush1.msra.mxu0 0.0
        %3187 = vmatprep.subr.mxu0 0.0
        %3188 = vmatpush1.msra.mxu0 0.0
        %3189 = vmatprep.subr.mxu0 0.0
        %3190 = vmatpush1.msra.mxu0 0.0
        %3191 = vmatprep.subr.mxu0 0.0
        %3192 = vmatpush1.msra.mxu0 0.0
        %3193 = vmatprep.subr.mxu0 0.0
        %3194 = vmatpush1.msra.mxu0 0.0
        %3195 = vmatprep.subr.mxu0 0.0
        %3196 = vmatpush1.msra.mxu0 0.0
        %3197 = vmatprep.subr.mxu0 0.0
        %3198 = vmatpush1.msra.mxu0 0.0
        %3199 = vmatprep.subr.mxu0 0.0
        %3200 = vmatpush1.msra.mxu0 0.0
        %3201 = vmatprep.subr.mxu0 0.0
        %3202 = vmatpush1.msra.mxu0 0.0
        %3203 = vmatprep.subr.mxu0 0.0
        %3204 = vmatpush1.msra.mxu0 0.0
        %3205 = vmatprep.subr.mxu0 0.0
        %3206 = vmatpush1.msra.mxu0 0.0
        %3207 = vmatprep.subr.mxu0 0.0
        %3208 = vmatpush1.msra.mxu0 0.0
        %3209 = vmatprep.subr.mxu0 0.0
        %3210 = vmatpush1.msra.mxu0 0.0
        %3211 = vmatprep.subr.mxu0 0.0
        %3212 = vmatpush1.msra.mxu0 0.0
        %3213 = vmatprep.subr.mxu0 0.0
        %3214 = vmatpush1.msra.mxu0 0.0
        %3215 = vmatprep.mubr.f32.mxu0 0.0
        %3216 = vmatmul.mubr.f32.gmra.mrb[0].mxu0 %v3149
        %v3217 = vpop.f32.mrb[0].mxu0
        %v3218 = vadd.f32 0.0, %v3217
        %v3219 = vpop.f32.mrb[0].mxu0
        %v3220 = vadd.f32 0.0, %v3219
        %3221 = vdwg.mxu0
        %3222 = vmatprep.subr.mxu0 %v2151
        %3223 = vmatpush1.msra.mxu0 %v2150
        %3224 = vmatprep.subr.mxu0 %v2155
        %3225 = vmatpush1.msra.mxu0 %v2154
        %3226 = vmatprep.subr.mxu0 0.0
        %3227 = vmatpush1.msra.mxu0 0.0
        %3228 = vmatprep.subr.mxu0 0.0
        %3229 = vmatpush1.msra.mxu0 0.0
        %3230 = vmatprep.subr.mxu0 0.0
        %3231 = vmatpush1.msra.mxu0 0.0
        %3232 = vmatprep.subr.mxu0 0.0
        %3233 = vmatpush1.msra.mxu0 0.0
        %3234 = vmatprep.subr.mxu0 0.0
        %3235 = vmatpush1.msra.mxu0 0.0
        %3236 = vmatprep.subr.mxu0 0.0
        %3237 = vmatpush1.msra.mxu0 0.0
        %3238 = vmatprep.subr.mxu0 0.0
        %3239 = vmatpush1.msra.mxu0 0.0
        %3240 = vmatprep.subr.mxu0 0.0
        %3241 = vmatpush1.msra.mxu0 0.0
        %3242 = vmatprep.subr.mxu0 0.0
        %3243 = vmatpush1.msra.mxu0 0.0
        %3244 = vmatprep.subr.mxu0 0.0
        %3245 = vmatpush1.msra.mxu0 0.0
        %3246 = vmatprep.subr.mxu0 0.0
        %3247 = vmatpush1.msra.mxu0 0.0
        %3248 = vmatprep.subr.mxu0 0.0
        %3249 = vmatpush1.msra.mxu0 0.0
        %3250 = vmatprep.subr.mxu0 0.0
        %3251 = vmatpush1.msra.mxu0 0.0
        %3252 = vmatprep.subr.mxu0 0.0
        %3253 = vmatpush1.msra.mxu0 0.0
        %3254 = vmatprep.subr.mxu0 0.0
        %3255 = vmatpush1.msra.mxu0 0.0
        %3256 = vmatprep.subr.mxu0 0.0
        %3257 = vmatpush1.msra.mxu0 0.0
        %3258 = vmatprep.subr.mxu0 0.0
        %3259 = vmatpush1.msra.mxu0 0.0
        %3260 = vmatprep.subr.mxu0 0.0
        %3261 = vmatpush1.msra.mxu0 0.0
        %3262 = vmatprep.subr.mxu0 0.0
        %3263 = vmatpush1.msra.mxu0 0.0
        %3264 = vmatprep.subr.mxu0 0.0
        %3265 = vmatpush1.msra.mxu0 0.0
        %3266 = vmatprep.subr.mxu0 0.0
        %3267 = vmatpush1.msra.mxu0 0.0
        %3268 = vmatprep.subr.mxu0 0.0
        %3269 = vmatpush1.msra.mxu0 0.0
        %3270 = vmatprep.subr.mxu0 0.0
        %3271 = vmatpush1.msra.mxu0 0.0
        %3272 = vmatprep.subr.mxu0 0.0
        %3273 = vmatpush1.msra.mxu0 0.0
        %3274 = vmatprep.subr.mxu0 0.0
        %3275 = vmatpush1.msra.mxu0 0.0
        %3276 = vmatprep.subr.mxu0 0.0
        %3277 = vmatpush1.msra.mxu0 0.0
        %3278 = vmatprep.subr.mxu0 0.0
        %3279 = vmatpush1.msra.mxu0 0.0
        %3280 = vmatprep.subr.mxu0 0.0
        %3281 = vmatpush1.msra.mxu0 0.0
        %3282 = vmatprep.subr.mxu0 0.0
        %3283 = vmatpush1.msra.mxu0 0.0
        %3284 = vmatprep.subr.mxu0 0.0
        %3285 = vmatpush1.msra.mxu0 0.0
        %3286 = vmatprep.mubr.f32.mxu0 0.0
        %3287 = vmatmul.mubr.f32.gmra.mrb[0].mxu0 %v3149
        %v3288 = vpop.f32.mrb[0].mxu0
        %v3289 = vadd.f32 0.0, %v3288
        %v3290 = vpop.f32.mrb[0].mxu0
        %v3291 = vadd.f32 0.0, %v3290
        %3292 = vdwg.mxu0
        %3293 = vrot.lane.b32.xlu0 %v3218, 113
        %v3294 = vpop.permute.xlu0 %3293
        %3295 = vrot.lane.b32.xlu0 %v3220, 113
        %v3296 = vpop.permute.xlu0 %3295
        %3297 = vrot.lane.b32.xlu0 %v3289, 113
        %v3298 = vpop.permute.xlu0 %3297
        %3299 = vrot.lane.b32.xlu0 %v3291, 113
        %v3300 = vpop.permute.xlu0 %3299
        %v3301 = vsel %vm1505, %v3298, %v3300
        %v3302 = vsel %vm1505, %v3296, %v3298
        %v3303 = vsel %vm1505, %v3294, %v3296
        %v3304 = vsel %vm1505, %v3300, %v3294
        %v3305 = vmul.f32 %v3303, %v1514
        %v3306 = vmul.f32 %v3302, %v1518
        %v3307 = vmul.f32 %v3301, %v1522
        %v3308 = vmul.f32 %v3304, %v1526
        %v3309 = vadd.f32 %v3142, %v3305
        %v3310 = vadd.f32 %v3143, %v3306
        %v3311 = vadd.f32 %v3144, %v3307
        %v3312 = vadd.f32 %v3145, %v3308
        %s3313 = scalar_lea.vmem %s4, 56
        %v3314 = vld [vmem:[%s3313] sm:$0xff]
        %v3316 = vsel %vm2157, %v3314, 0
        %3318 = vmatprep.subr.mxu0 %v2149
        %3319 = vmatpush1.msra.mxu0 %v2148
        %3320 = vmatprep.subr.mxu0 %v2153
        %3321 = vmatpush1.msra.mxu0 %v2152
        %3322 = vmatprep.subr.mxu0 0.0
        %3323 = vmatpush1.msra.mxu0 0.0
        %3324 = vmatprep.subr.mxu0 0.0
        %3325 = vmatpush1.msra.mxu0 0.0
        %3326 = vmatprep.subr.mxu0 0.0
        %3327 = vmatpush1.msra.mxu0 0.0
        %3328 = vmatprep.subr.mxu0 0.0
        %3329 = vmatpush1.msra.mxu0 0.0
        %3330 = vmatprep.subr.mxu0 0.0
        %3331 = vmatpush1.msra.mxu0 0.0
        %3332 = vmatprep.subr.mxu0 0.0
        %3333 = vmatpush1.msra.mxu0 0.0
        %3334 = vmatprep.subr.mxu0 0.0
        %3335 = vmatpush1.msra.mxu0 0.0
        %3336 = vmatprep.subr.mxu0 0.0
        %3337 = vmatpush1.msra.mxu0 0.0
        %3338 = vmatprep.subr.mxu0 0.0
        %3339 = vmatpush1.msra.mxu0 0.0
        %3340 = vmatprep.subr.mxu0 0.0
        %3341 = vmatpush1.msra.mxu0 0.0
        %3342 = vmatprep.subr.mxu0 0.0
        %3343 = vmatpush1.msra.mxu0 0.0
        %3344 = vmatprep.subr.mxu0 0.0
        %3345 = vmatpush1.msra.mxu0 0.0
        %3346 = vmatprep.subr.mxu0 0.0
        %3347 = vmatpush1.msra.mxu0 0.0
        %3348 = vmatprep.subr.mxu0 0.0
        %3349 = vmatpush1.msra.mxu0 0.0
        %3350 = vmatprep.subr.mxu0 0.0
        %3351 = vmatpush1.msra.mxu0 0.0
        %3352 = vmatprep.subr.mxu0 0.0
        %3353 = vmatpush1.msra.mxu0 0.0
        %3354 = vmatprep.subr.mxu0 0.0
        %3355 = vmatpush1.msra.mxu0 0.0
        %3356 = vmatprep.subr.mxu0 0.0
        %3357 = vmatpush1.msra.mxu0 0.0
        %3358 = vmatprep.subr.mxu0 0.0
        %3359 = vmatpush1.msra.mxu0 0.0
        %3360 = vmatprep.subr.mxu0 0.0
        %3361 = vmatpush1.msra.mxu0 0.0
        %3362 = vmatprep.subr.mxu0 0.0
        %3363 = vmatpush1.msra.mxu0 0.0
        %3364 = vmatprep.subr.mxu0 0.0
        %3365 = vmatpush1.msra.mxu0 0.0
        %3366 = vmatprep.subr.mxu0 0.0
        %3367 = vmatpush1.msra.mxu0 0.0
        %3368 = vmatprep.subr.mxu0 0.0
        %3369 = vmatpush1.msra.mxu0 0.0
        %3370 = vmatprep.subr.mxu0 0.0
        %3371 = vmatpush1.msra.mxu0 0.0
        %3372 = vmatprep.subr.mxu0 0.0
        %3373 = vmatpush1.msra.mxu0 0.0
        %3374 = vmatprep.subr.mxu0 0.0
        %3375 = vmatpush1.msra.mxu0 0.0
        %3376 = vmatprep.subr.mxu0 0.0
        %3377 = vmatpush1.msra.mxu0 0.0
        %3378 = vmatprep.subr.mxu0 0.0
        %3379 = vmatpush1.msra.mxu0 0.0
        %3380 = vmatprep.subr.mxu0 0.0
        %3381 = vmatpush1.msra.mxu0 0.0
        %3382 = vmatprep.mubr.f32.mxu0 0.0
        %3383 = vmatmul.mubr.f32.gmra.mrb[0].mxu0 %v3316
        %v3384 = vpop.f32.mrb[0].mxu0
        %v3385 = vadd.f32 0.0, %v3384
        %v3386 = vpop.f32.mrb[0].mxu0
        %v3387 = vadd.f32 0.0, %v3386
        %3388 = vdwg.mxu0
        %3389 = vmatprep.subr.mxu0 %v2151
        %3390 = vmatpush1.msra.mxu0 %v2150
        %3391 = vmatprep.subr.mxu0 %v2155
        %3392 = vmatpush1.msra.mxu0 %v2154
        %3393 = vmatprep.subr.mxu0 0.0
        %3394 = vmatpush1.msra.mxu0 0.0
        %3395 = vmatprep.subr.mxu0 0.0
        %3396 = vmatpush1.msra.mxu0 0.0
        %3397 = vmatprep.subr.mxu0 0.0
        %3398 = vmatpush1.msra.mxu0 0.0
        %3399 = vmatprep.subr.mxu0 0.0
        %3400 = vmatpush1.msra.mxu0 0.0
        %3401 = vmatprep.subr.mxu0 0.0
        %3402 = vmatpush1.msra.mxu0 0.0
        %3403 = vmatprep.subr.mxu0 0.0
        %3404 = vmatpush1.msra.mxu0 0.0
        %3405 = vmatprep.subr.mxu0 0.0
        %3406 = vmatpush1.msra.mxu0 0.0
        %3407 = vmatprep.subr.mxu0 0.0
        %3408 = vmatpush1.msra.mxu0 0.0
        %3409 = vmatprep.subr.mxu0 0.0
        %3410 = vmatpush1.msra.mxu0 0.0
        %3411 = vmatprep.subr.mxu0 0.0
        %3412 = vmatpush1.msra.mxu0 0.0
        %3413 = vmatprep.subr.mxu0 0.0
        %3414 = vmatpush1.msra.mxu0 0.0
        %3415 = vmatprep.subr.mxu0 0.0
        %3416 = vmatpush1.msra.mxu0 0.0
        %3417 = vmatprep.subr.mxu0 0.0
        %3418 = vmatpush1.msra.mxu0 0.0
        %3419 = vmatprep.subr.mxu0 0.0
        %3420 = vmatpush1.msra.mxu0 0.0
        %3421 = vmatprep.subr.mxu0 0.0
        %3422 = vmatpush1.msra.mxu0 0.0
        %3423 = vmatprep.subr.mxu0 0.0
        %3424 = vmatpush1.msra.mxu0 0.0
        %3425 = vmatprep.subr.mxu0 0.0
        %3426 = vmatpush1.msra.mxu0 0.0
        %3427 = vmatprep.subr.mxu0 0.0
        %3428 = vmatpush1.msra.mxu0 0.0
        %3429 = vmatprep.subr.mxu0 0.0
        %3430 = vmatpush1.msra.mxu0 0.0
        %3431 = vmatprep.subr.mxu0 0.0
        %3432 = vmatpush1.msra.mxu0 0.0
        %3433 = vmatprep.subr.mxu0 0.0
        %3434 = vmatpush1.msra.mxu0 0.0
        %3435 = vmatprep.subr.mxu0 0.0
        %3436 = vmatpush1.msra.mxu0 0.0
        %3437 = vmatprep.subr.mxu0 0.0
        %3438 = vmatpush1.msra.mxu0 0.0
        %3439 = vmatprep.subr.mxu0 0.0
        %3440 = vmatpush1.msra.mxu0 0.0
        %3441 = vmatprep.subr.mxu0 0.0
        %3442 = vmatpush1.msra.mxu0 0.0
        %3443 = vmatprep.subr.mxu0 0.0
        %3444 = vmatpush1.msra.mxu0 0.0
        %3445 = vmatprep.subr.mxu0 0.0
        %3446 = vmatpush1.msra.mxu0 0.0
        %3447 = vmatprep.subr.mxu0 0.0
        %3448 = vmatpush1.msra.mxu0 0.0
        %3449 = vmatprep.subr.mxu0 0.0
        %3450 = vmatpush1.msra.mxu0 0.0
        %3451 = vmatprep.subr.mxu0 0.0
        %3452 = vmatpush1.msra.mxu0 0.0
        %3453 = vmatprep.mubr.f32.mxu0 0.0
        %3454 = vmatmul.mubr.f32.gmra.mrb[0].mxu0 %v3316
        %v3455 = vpop.f32.mrb[0].mxu0
        %v3456 = vadd.f32 0.0, %v3455
        %v3457 = vpop.f32.mrb[0].mxu0
        %v3458 = vadd.f32 0.0, %v3457
        %3459 = vdwg.mxu0
        %3460 = vrot.lane.b32.xlu0 %v3385, 112
        %v3461 = vpop.permute.xlu0 %3460
        %3462 = vrot.lane.b32.xlu0 %v3387, 112
        %v3463 = vpop.permute.xlu0 %3462
        %3464 = vrot.lane.b32.xlu0 %v3456, 112
        %v3465 = vpop.permute.xlu0 %3464
        %3466 = vrot.lane.b32.xlu0 %v3458, 112
        %v3467 = vpop.permute.xlu0 %3466
        %v3468 = vsel %vm1716, %v3465, %v3467
        %v3469 = vsel %vm1716, %v3463, %v3465
        %v3470 = vsel %vm1716, %v3461, %v3463
        %v3471 = vsel %vm1716, %v3467, %v3461
        %v3472 = vmul.f32 %v3470, %v1725
        %v3473 = vmul.f32 %v3469, %v1729
        %v3474 = vmul.f32 %v3468, %v1733
        %v3475 = vmul.f32 %v3471, %v1737
        %v3476 = vadd.f32 %v3309, %v3472
        %v3477 = vadd.f32 %v3310, %v3473
        %v3478 = vadd.f32 %v3311, %v3474
        %v3479 = vadd.f32 %v3312, %v3475
        %s3480 = scalar_lea.vmem %s4, 64
        %v3481 = vld [vmem:[%s3480] sm:$0xff]
        %v3483 = vsel %vm2157, %v3481, 0
        %3485 = vmatprep.subr.mxu0 %v2149
        %3486 = vmatpush1.msra.mxu0 %v2148
        %3487 = vmatprep.subr.mxu0 %v2153
        %3488 = vmatpush1.msra.mxu0 %v2152
        %3489 = vmatprep.subr.mxu0 0.0
        %3490 = vmatpush1.msra.mxu0 0.0
        %3491 = vmatprep.subr.mxu0 0.0
        %3492 = vmatpush1.msra.mxu0 0.0
        %3493 = vmatprep.subr.mxu0 0.0
        %3494 = vmatpush1.msra.mxu0 0.0
        %3495 = vmatprep.subr.mxu0 0.0
        %3496 = vmatpush1.msra.mxu0 0.0
        %3497 = vmatprep.subr.mxu0 0.0
        %3498 = vmatpush1.msra.mxu0 0.0
        %3499 = vmatprep.subr.mxu0 0.0
        %3500 = vmatpush1.msra.mxu0 0.0
        %3501 = vmatprep.subr.mxu0 0.0
        %3502 = vmatpush1.msra.mxu0 0.0
        %3503 = vmatprep.subr.mxu0 0.0
        %3504 = vmatpush1.msra.mxu0 0.0
        %3505 = vmatprep.subr.mxu0 0.0
        %3506 = vmatpush1.msra.mxu0 0.0
        %3507 = vmatprep.subr.mxu0 0.0
        %3508 = vmatpush1.msra.mxu0 0.0
        %3509 = vmatprep.subr.mxu0 0.0
        %3510 = vmatpush1.msra.mxu0 0.0
        %3511 = vmatprep.subr.mxu0 0.0
        %3512 = vmatpush1.msra.mxu0 0.0
        %3513 = vmatprep.subr.mxu0 0.0
        %3514 = vmatpush1.msra.mxu0 0.0
        %3515 = vmatprep.subr.mxu0 0.0
        %3516 = vmatpush1.msra.mxu0 0.0
        %3517 = vmatprep.subr.mxu0 0.0
        %3518 = vmatpush1.msra.mxu0 0.0
        %3519 = vmatprep.subr.mxu0 0.0
        %3520 = vmatpush1.msra.mxu0 0.0
        %3521 = vmatprep.subr.mxu0 0.0
        %3522 = vmatpush1.msra.mxu0 0.0
        %3523 = vmatprep.subr.mxu0 0.0
        %3524 = vmatpush1.msra.mxu0 0.0
        %3525 = vmatprep.subr.mxu0 0.0
        %3526 = vmatpush1.msra.mxu0 0.0
        %3527 = vmatprep.subr.mxu0 0.0
        %3528 = vmatpush1.msra.mxu0 0.0
        %3529 = vmatprep.subr.mxu0 0.0
        %3530 = vmatpush1.msra.mxu0 0.0
        %3531 = vmatprep.subr.mxu0 0.0
        %3532 = vmatpush1.msra.mxu0 0.0
        %3533 = vmatprep.subr.mxu0 0.0
        %3534 = vmatpush1.msra.mxu0 0.0
        %3535 = vmatprep.subr.mxu0 0.0
        %3536 = vmatpush1.msra.mxu0 0.0
        %3537 = vmatprep.subr.mxu0 0.0
        %3538 = vmatpush1.msra.mxu0 0.0
        %3539 = vmatprep.subr.mxu0 0.0
        %3540 = vmatpush1.msra.mxu0 0.0
        %3541 = vmatprep.subr.mxu0 0.0
        %3542 = vmatpush1.msra.mxu0 0.0
        %3543 = vmatprep.subr.mxu0 0.0
        %3544 = vmatpush1.msra.mxu0 0.0
        %3545 = vmatprep.subr.mxu0 0.0
        %3546 = vmatpush1.msra.mxu0 0.0
        %3547 = vmatprep.subr.mxu0 0.0
        %3548 = vmatpush1.msra.mxu0 0.0
        %3549 = vmatprep.mubr.f32.mxu0 0.0
        %3550 = vmatmul.mubr.f32.gmra.mrb[0].mxu0 %v3483
        %v3551 = vpop.f32.mrb[0].mxu0
        %v3552 = vadd.f32 0.0, %v3551
        %v3553 = vpop.f32.mrb[0].mxu0
        %v3554 = vadd.f32 0.0, %v3553
        %3555 = vdwg.mxu0
        %3556 = vmatprep.subr.mxu0 %v2151
        %3557 = vmatpush1.msra.mxu0 %v2150
        %3558 = vmatprep.subr.mxu0 %v2155
        %3559 = vmatpush1.msra.mxu0 %v2154
        %3560 = vmatprep.subr.mxu0 0.0
        %3561 = vmatpush1.msra.mxu0 0.0
        %3562 = vmatprep.subr.mxu0 0.0
        %3563 = vmatpush1.msra.mxu0 0.0
        %3564 = vmatprep.subr.mxu0 0.0
        %3565 = vmatpush1.msra.mxu0 0.0
        %3566 = vmatprep.subr.mxu0 0.0
        %3567 = vmatpush1.msra.mxu0 0.0
        %3568 = vmatprep.subr.mxu0 0.0
        %3569 = vmatpush1.msra.mxu0 0.0
        %3570 = vmatprep.subr.mxu0 0.0
        %3571 = vmatpush1.msra.mxu0 0.0
        %3572 = vmatprep.subr.mxu0 0.0
        %3573 = vmatpush1.msra.mxu0 0.0
        %3574 = vmatprep.subr.mxu0 0.0
        %3575 = vmatpush1.msra.mxu0 0.0
        %3576 = vmatprep.subr.mxu0 0.0
        %3577 = vmatpush1.msra.mxu0 0.0
        %3578 = vmatprep.subr.mxu0 0.0
        %3579 = vmatpush1.msra.mxu0 0.0
        %3580 = vmatprep.subr.mxu0 0.0
        %3581 = vmatpush1.msra.mxu0 0.0
        %3582 = vmatprep.subr.mxu0 0.0
        %3583 = vmatpush1.msra.mxu0 0.0
        %3584 = vmatprep.subr.mxu0 0.0
        %3585 = vmatpush1.msra.mxu0 0.0
        %3586 = vmatprep.subr.mxu0 0.0
        %3587 = vmatpush1.msra.mxu0 0.0
        %3588 = vmatprep.subr.mxu0 0.0
        %3589 = vmatpush1.msra.mxu0 0.0
        %3590 = vmatprep.subr.mxu0 0.0
        %3591 = vmatpush1.msra.mxu0 0.0
        %3592 = vmatprep.subr.mxu0 0.0
        %3593 = vmatpush1.msra.mxu0 0.0
        %3594 = vmatprep.subr.mxu0 0.0
        %3595 = vmatpush1.msra.mxu0 0.0
        %3596 = vmatprep.subr.mxu0 0.0
        %3597 = vmatpush1.msra.mxu0 0.0
        %3598 = vmatprep.subr.mxu0 0.0
        %3599 = vmatpush1.msra.mxu0 0.0
        %3600 = vmatprep.subr.mxu0 0.0
        %3601 = vmatpush1.msra.mxu0 0.0
        %3602 = vmatprep.subr.mxu0 0.0
        %3603 = vmatpush1.msra.mxu0 0.0
        %3604 = vmatprep.subr.mxu0 0.0
        %3605 = vmatpush1.msra.mxu0 0.0
        %3606 = vmatprep.subr.mxu0 0.0
        %3607 = vmatpush1.msra.mxu0 0.0
        %3608 = vmatprep.subr.mxu0 0.0
        %3609 = vmatpush1.msra.mxu0 0.0
        %3610 = vmatprep.subr.mxu0 0.0
        %3611 = vmatpush1.msra.mxu0 0.0
        %3612 = vmatprep.subr.mxu0 0.0
        %3613 = vmatpush1.msra.mxu0 0.0
        %3614 = vmatprep.subr.mxu0 0.0
        %3615 = vmatpush1.msra.mxu0 0.0
        %3616 = vmatprep.subr.mxu0 0.0
        %3617 = vmatpush1.msra.mxu0 0.0
        %3618 = vmatprep.subr.mxu0 0.0
        %3619 = vmatpush1.msra.mxu0 0.0
        %3620 = vmatprep.mubr.f32.mxu0 0.0
        %3621 = vmatmul.mubr.f32.gmra.mrb[0].mxu0 %v3483
        %v3622 = vpop.f32.mrb[0].mxu0
        %v3623 = vadd.f32 0.0, %v3622
        %v3624 = vpop.f32.mrb[0].mxu0
        %v3625 = vadd.f32 0.0, %v3624
        %3626 = vdwg.mxu0
        %3627 = vrot.lane.b32.xlu0 %v3552, 111
        %v3628 = vpop.permute.xlu0 %3627
        %3629 = vrot.lane.b32.xlu0 %v3554, 111
        %v3630 = vpop.permute.xlu0 %3629
        %3631 = vrot.lane.b32.xlu0 %v3623, 111
        %v3632 = vpop.permute.xlu0 %3631
        %3633 = vrot.lane.b32.xlu0 %v3625, 111
        %v3634 = vpop.permute.xlu0 %3633
        %v3635 = vsel %vm1927, %v3632, %v3634
        %v3636 = vsel %vm1927, %v3630, %v3632
        %v3637 = vsel %vm1927, %v3628, %v3630
        %v3638 = vsel %vm1927, %v3634, %v3628
        %v3639 = vmul.f32 %v3637, %v1936
        %v3640 = vmul.f32 %v3636, %v1940
        %v3641 = vmul.f32 %v3635, %v1944
        %v3642 = vmul.f32 %v3638, %v1948
        %v3643 = vadd.f32 %v3476, %v3639
        %v3644 = vadd.f32 %v3477, %v3640
        %v3645 = vadd.f32 %v3478, %v3641
        %v3646 = vadd.f32 %v3479, %v3642
        %v3647 = vld [vmem:[%s5] sm:$0xff]
        %3649 = vset.pattern.permute.xlu0 0
        %3650 = vperm.xlu0 %3649, %v3647
        %v3651 = vpop.permute.xlu0 %3650
        %v3653 = vadd.f32 %v3643, %v3651
        %v3654 = vadd.f32 %v3644, %v3651
        %v3655 = vadd.f32 %v3645, %v3651
        %v3656 = vadd.f32 %v3646, %v3651
        %v3657 = vadd.f32 %v253, %v3653
        %v3658 = vadd.f32 %v254, %v3654
        %v3659 = vadd.f32 %v255, %v3655
        %v3660 = vadd.f32 %v256, %v3656
        %v3661 = vmul.f32 %v3657, %v3657
        %v3662 = vmul.f32 %v3658, %v3658
        %v3663 = vmul.f32 %v3659, %v3659
        %v3664 = vmul.f32 %v3660, %v3660
        %v3665 = vrot.slane %v3661, 4
        %v3666 = vadd.f32 %v3661, %v3665
        %v3667 = vrot.slane %v3666, 2
        %v3668 = vadd.f32 %v3666, %v3667
        %v3669 = vrot.slane %v3668, 1
        %v3670 = vadd.f32 %v3668, %v3669
        %v3671 = vrot.slane %v3662, 4
        %v3672 = vadd.f32 %v3662, %v3671
        %v3673 = vrot.slane %v3672, 2
        %v3674 = vadd.f32 %v3672, %v3673
        %v3675 = vrot.slane %v3674, 1
        %v3676 = vadd.f32 %v3674, %v3675
        %v3677 = vrot.slane %v3663, 4
        %v3678 = vadd.f32 %v3663, %v3677
        %v3679 = vrot.slane %v3678, 2
        %v3680 = vadd.f32 %v3678, %v3679
        %v3681 = vrot.slane %v3680, 1
        %v3682 = vadd.f32 %v3680, %v3681
        %v3683 = vrot.slane %v3664, 4
        %v3684 = vadd.f32 %v3664, %v3683
        %v3685 = vrot.slane %v3684, 2
        %v3686 = vadd.f32 %v3684, %v3685
        %v3687 = vrot.slane %v3686, 1
        %v3688 = vadd.f32 %v3686, %v3687
        %vm3689 = vcmp.gt.f32.partialorder %v3670, 0.0
        %vm3690 = vcmp.gt.f32.partialorder %v3676, 0.0
        %vm3691 = vcmp.gt.f32.partialorder %v3682, 0.0
        %vm3692 = vcmp.gt.f32.partialorder %v3688, 0.0
        %v3693 = vrsqrt.pop %v3670
        %v3694 = vrsqrt.pop %v3676
        %v3695 = vrsqrt.pop %v3682
        %v3696 = vrsqrt.pop %v3688
        %v3697 = vsel %vm3689, %v3693, 0.0
        %v3698 = vsel %vm3690, %v3694, 0.0
        %v3699 = vsel %vm3691, %v3695, 0.0
        %v3700 = vsel %vm3692, %v3696, 0.0
        %v3701 = vmul.f32 %v3657, %v3697
        %v3702 = vmul.f32 %v3658, %v3698
        %v3703 = vmul.f32 %v3659, %v3699
        %v3704 = vmul.f32 %v3660, %v3700
        %3705 = vst [vmem:[%s245] sm:$0xff] %v3701
        %3706 = vst [vmem:[%s245 + $0x8] sm:$0xff] %v3702
        %3707 = vst [vmem:[%s245 + $0x10] sm:$0xff] %v3703
        %3708 = vst [vmem:[%s245 + $0x18] sm:$0xff] %v3704
        %s3709 = sand.u32 %s159, 1
        %s3710 = scalar_lea.sflag [#allocation3], %s3709
        %s3711 = sand.u32 %s159, 1
        %s3712 = smul.addr %s3711, 32
        %s3713 = scalar_lea.vmem [#allocation2], %s3712
        // Predicated region
        $region45: #{tpu_custom_call.1} parent=43 // pred_check
          %p3714 = pneg %p169
        $region46: #{tpu_custom_call.1} parent=43 // pred_check_branch
          %3716 = sbr.rel (%p3714) target = $region48
        $region47: #{tpu_custom_call.1} parent=43 // pred_region
          %s3717 = smul.u32 4, %s20
          %s3719 = ssub.s32 512, 512
          %3720 = vsyncadd %s3710, %s3719
          %s3721 = smul.addr %s3717, 128
          %s3722 = scalar_lea.hbm %s6, %s3721
          %s3724 = sshll.u32 %s3713, 4
          %s3725 = int_to_ptr.vmem [resolvable:$true] %s3724
          %3727 = dma.vmem_to_hbm [thread:$0]  %s3725, 512, %s3722, %s3710
        $region48: #{tpu_custom_call.1} parent=43 // pred_fallthru
          _
      $region44: #{tpu_custom_call.1} parent=5 // pred_fallthru
        _
      %p3728 = scmp.le.s32.totalorder 2, %s15
      // Predicated region
      $region49: #{tpu_custom_call.1} parent=5 // pred_check
        %p3729 = pneg %p3728
      $region50: #{tpu_custom_call.1} parent=5 // pred_check_branch
        %3731 = sbr.rel (%p3729) target = $region52
      $region51: #{tpu_custom_call.1} parent=5 // pred_region
        %s3732 = ssub.s32 %s15, 2
        // Predicated region
        $region53: #{tpu_custom_call.1} parent=51 // pred_check
          %p3733 = pneg %p175
        $region54: #{tpu_custom_call.1} parent=51 // pred_check_branch
          %3735 = sbr.rel (%p3733) target = $region56
        $region55: #{tpu_custom_call.1} parent=51 // pred_region
          %s3736 = sand.u32 %s160, 1
          %s3737 = scalar_lea.sflag [#allocation3], %s3736
          %s3738 = sand.u32 %s160, 1
          %s3739 = smul.addr %s3738, 32
          %s3740 = scalar_lea.vmem [#allocation2], %s3739
          %3741 = dma.done %s3737, 512
        $region56: #{tpu_custom_call.1} parent=51 // pred_fallthru
          _
      $region52: #{tpu_custom_call.1} parent=5 // pred_fallthru
        _
    $region6: #{tpu_custom_call.1} parent=1 // loop_footer
      %s19 = sadd.s32 1, %s15
    $region7: #{tpu_custom_call.1} parent=1 // loop_footer_branch
      %14 = sbr.rel target = $region3
    $region8: #{tpu_custom_call.1} parent=1 // loop_exit
      _
    %3742 = vsyncpa [#allocation3], 1
    %s3743 = scalar_lea.sflag [#allocation3], 1
    %3744 = vsyncpa %s3743, 1

</llo_original>
